<compile_context>
chip_gen: v5e
topology: v5e:2x2
jax: 0.10.0
libtpu: 0.0.40
codegen_flags: <defaults>
</compile_context>

<pallas_src>
import functools

import jax
import jax.numpy as jnp
from jax.experimental import pallas as pl
from jax.experimental.pallas import tpu as pltpu


def _encoder_kernel(h_ref, e_ref, w1h_ref, w1e_ref, g_ref, b_ref,
                    w2_ref, b2_ref, o_ref):
    # h_ref:   (TN, Dh)  bf16     state half of the concat
    # e_ref:   (TN, De)  bf16     embedding half of the concat
    # w1h_ref: (Dh, H)   bf16     first Linear weight rows for h (pre-T)
    # w1e_ref: (De, H)   bf16     first Linear weight rows for e (pre-T)
    # g_ref:   (1,  H)   f32      LayerNorm gamma
    # b_ref:   (1,  H)   f32      LayerNorm beta
    # w2_ref:  (H,  O)   bf16     second Linear weight (pre-T)
    # b2_ref:  (1,  O)   f32      second Linear bias
    # o_ref:   (TN, O)   f32      output (flattened 32*32)

    # Linear 1 (bias=False): split-K matmul == matmul over concat([h, e]).
    # bf16 operands feed the MXU directly; f32 accumulation.
    y = jnp.dot(h_ref[...], w1h_ref[...], preferred_element_type=jnp.float32)
    y = y + jnp.dot(e_ref[...], w1e_ref[...],
                    preferred_element_type=jnp.float32)

    # LayerNorm over last dim (biased variance, eps=1e-5, affine), f32 math.
    # One-pass moments: the two reductions are independent.
    hidden = y.shape[-1]
    inv_h = 1.0 / hidden
    s = jnp.sum(y, axis=-1, keepdims=True)
    s2 = jnp.sum(y * y, axis=-1, keepdims=True)
    mean = s * inv_h
    var = s2 * inv_h - mean * mean
    yn = (y - mean) * jax.lax.rsqrt(var + 1e-5)
    yn = yn * g_ref[...] + b_ref[...]

    # SiLU (f32 on VPU/EUP).
    act = yn * jax.nn.sigmoid(yn)

    # Linear 2 (bias=True): bf16 operands on the MXU, f32 accumulate.
    out = jnp.dot(act.astype(w2_ref.dtype), w2_ref[...],
                  preferred_element_type=jnp.float32)
    out = out + b2_ref[...]

    o_ref[...] = out.astype(o_ref.dtype)


def _pick_tile_n(n, max_tile=128):
    """Largest multiple-of-8 divisor of n up to max_tile, preferring grid>=2."""
    fallback = None
    for d in range(min(n, max_tile), 0, -1):
        if n % d != 0:
            continue
        if d % 8 != 0 and d != n:
            continue
        if n // d >= 2:
            return d
        if fallback is None:
            fallback = d
    return fallback if fallback is not None else n


@functools.partial(jax.jit, static_argnames=("tile_n",))
def encoder_forward(h, e, w1h, w1e, ln_gamma, ln_beta, w2, b2, *, tile_n=None):
    """h: [N, h_size], e: [N, embed]  ->  [N, 32, 32] (float32)."""
    N, Dh = h.shape
    De = e.shape[1]
    H = w1h.shape[1]
    O = w2.shape[1]

    if tile_n is None:
        tile_n = _pick_tile_n(N)
    assert N % tile_n == 0, "batch must be divisible by tile_n"

    # bf16 operands for the MXU (weights are already stored bf16).
    h16 = h.astype(jnp.bfloat16)
    e16 = e.astype(jnp.bfloat16)

    grid = (N // tile_n,)

    flops = 2 * N * (Dh + De) * H + 2 * N * H * O
    bytes_accessed = (h16.size * 2 + e16.size * 2 + w1h.size * 2 +
                      w1e.size * 2 + w2.size * 2 +
                      (ln_gamma.size + ln_beta.size + b2.size) * 4 +
                      N * O * 4)
    cost = pl.CostEstimate(flops=flops,
                           transcendentals=N * H + N,
                           bytes_accessed=bytes_accessed)

    out_flat = pl.pallas_call(
        _encoder_kernel,
        out_shape=jax.ShapeDtypeStruct((N, O), jnp.float32),
        grid_spec=pltpu.PrefetchScalarGridSpec(
            num_scalar_prefetch=0,
            grid=grid,
            in_specs=[
                pl.BlockSpec((tile_n, Dh), lambda i: (i, 0)),   # h tile
                pl.BlockSpec((tile_n, De), lambda i: (i, 0)),   # e tile
                pl.BlockSpec((Dh, H), lambda i: (0, 0)),        # W1 (h rows)
                pl.BlockSpec((De, H), lambda i: (0, 0)),        # W1 (e rows)
                pl.BlockSpec((1, H), lambda i: (0, 0)),         # gamma
                pl.BlockSpec((1, H), lambda i: (0, 0)),         # beta
                pl.BlockSpec((H, O), lambda i: (0, 0)),         # W2
                pl.BlockSpec((1, O), lambda i: (0, 0)),         # b2
            ],
            out_specs=pl.BlockSpec((tile_n, O), lambda i: (i, 0)),
        ),
        compiler_params=pltpu.CompilerParams(
            dimension_semantics=("parallel",)),
        cost_estimate=cost,
    )(h16, e16, w1h, w1e, ln_gamma, ln_beta, w2, b2)

    # Unflatten(1, (32, 32)) -> [N, 32, 32]
    return out_flat.reshape(N, 32, 32)


def make_params(key, h_size, embed, mlp_hidden, out_dim=32 * 32):
    """Deterministic synthetic parameters (shapes match nn.Module __init__).

    W1 is returned pre-split into its h / e row blocks and pre-transposed to
    [in, out]; matmul weights are stored in bf16, LN/bias params in f32.
    """
    k1, k2, k3, k4 = jax.random.split(key, 4)
    # Small-std normal init stands in for init_weights (synthetic, no ckpt).
    w1h = (jax.random.normal(k1, (h_size, mlp_hidden), jnp.float32)
           * 0.02).astype(jnp.bfloat16)
    w1e = (jax.random.normal(k2, (embed, mlp_hidden), jnp.float32)
           * 0.02).astype(jnp.bfloat16)
    ln_gamma = jnp.ones((1, mlp_hidden), jnp.float32)     # LayerNorm default
    ln_beta = jnp.zeros((1, mlp_hidden), jnp.float32)
    w2 = (jax.random.normal(k3, (mlp_hidden, out_dim), jnp.float32)
          * 0.02).astype(jnp.bfloat16)
    b2 = jax.random.normal(k4, (1, out_dim), jnp.float32) * 0.01
    return w1h, w1e, ln_gamma, ln_beta, w2, b2


def reference_forward(h, e, w1h, w1e, ln_gamma, ln_beta, w2, b2):
    """Pure-JAX reference with matching bf16-operand / f32-accumulate math."""
    h16 = h.astype(jnp.bfloat16)
    e16 = e.astype(jnp.bfloat16)
    y = (jnp.dot(h16, w1h, preferred_element_type=jnp.float32)
         + jnp.dot(e16, w1e, preferred_element_type=jnp.float32))
    mean = jnp.mean(y, axis=-1, keepdims=True)
    var = jnp.mean((y - mean) ** 2, axis=-1, keepdims=True)
    yn = (y - mean) * jax.lax.rsqrt(var + 1e-5) * ln_gamma + ln_beta
    act = yn * jax.nn.sigmoid(yn)
    z = jnp.dot(act.astype(jnp.bfloat16), w2,
                preferred_element_type=jnp.float32) + b2
    return z.reshape(h.shape[0], 32, 32)


if __name__ == "__main__":
    # Module-consistent small shapes:
    #   cnn_multi=2 -> embed = 4*4*cnn_multi*2**3 = 256
    #   h_size=128, mlp_hidden=256, output fixed at 32*32=1024 (Unflatten)
    # N=256 so the default tile_n=128 gives a 2-step parallel grid.
    N = 256
    cnn_multi = 2
    h_size = 128
    mlp_hidden = 256
    embed = 4 * 4 * cnn_multi * 2 ** 3            # 256

    key = jax.random.PRNGKey(0)
    kh, ke, kp = jax.random.split(key, 3)
    h = jax.random.normal(kh, (N, h_size), jnp.float32)
    e = jax.random.normal(ke, (N, embed), jnp.float32)
    w1h, w1e, ln_gamma, ln_beta, w2, b2 = make_params(kp, h_size, embed,
                                                      mlp_hidden)

    out = encoder_forward(h, e, w1h, w1e, ln_gamma, ln_beta, w2, b2)
    out = jax.block_until_ready(out)

    ref = reference_forward(h, e, w1h, w1e, ln_gamma, ln_beta, w2, b2)
    assert out.shape == (N, 32, 32), out.shape
    # bf16 matmul operands in both paths; tolerance relaxed accordingly.
    assert jnp.allclose(out, ref, atol=2e-2, rtol=2e-2), "mismatch vs reference"

    print("KERNEL_OK")
</pallas_src>

<mosaic_0001>
module attributes {stable_mosaic.version = 11 : i64} {
  func.func @_encoder_kernel(%arg0: i32, %arg1: memref<128x128xbf16, #tpu.memory_space<vmem>>, %arg2: memref<128x256xbf16, #tpu.memory_space<vmem>>, %arg3: memref<128x256xbf16, #tpu.memory_space<vmem>>, %arg4: memref<256x256xbf16, #tpu.memory_space<vmem>>, %arg5: memref<1x256xf32, #tpu.memory_space<vmem>>, %arg6: memref<1x256xf32, #tpu.memory_space<vmem>>, %arg7: memref<256x1024xbf16, #tpu.memory_space<vmem>>, %arg8: memref<1x1024xf32, #tpu.memory_space<vmem>>, %arg9: memref<128x1024xf32, #tpu.memory_space<vmem>>) attributes {dimension_semantics = [#tpu.dimension_semantics<parallel>], iteration_bounds = array<i64: 2>, scalar_prefetch = 0 : i64, scratch_operands = 0 : i64, tpu.core_type = #tpu.core_type<tc>, window_params = [{transform_indices = @transform_0, window_bounds = array<i64: 128, 128>}, {transform_indices = @transform_1, window_bounds = array<i64: 128, 256>}, {pipeline_mode = #tpu.pipeline_mode<synchronous>, transform_indices = @transform_2, window_bounds = array<i64: 128, 256>}, {pipeline_mode = #tpu.pipeline_mode<synchronous>, transform_indices = @transform_3, window_bounds = array<i64: 256, 256>}, {pipeline_mode = #tpu.pipeline_mode<synchronous>, transform_indices = @transform_4, window_bounds = array<i64: 1, 256>}, {pipeline_mode = #tpu.pipeline_mode<synchronous>, transform_indices = @transform_5, window_bounds = array<i64: 1, 256>}, {pipeline_mode = #tpu.pipeline_mode<synchronous>, transform_indices = @transform_6, window_bounds = array<i64: 256, 1024>}, {pipeline_mode = #tpu.pipeline_mode<synchronous>, transform_indices = @transform_7, window_bounds = array<i64: 1, 1024>}, {transform_indices = @transform_8, window_bounds = array<i64: 128, 1024>}]} {
    %c0 = arith.constant 0 : index
    %c0_0 = arith.constant 0 : index
    %0 = vector.load %arg1[%c0, %c0_0] : memref<128x128xbf16, #tpu.memory_space<vmem>>, vector<128x128xbf16>
    %c0_1 = arith.constant 0 : index
    %c0_2 = arith.constant 0 : index
    %1 = vector.load %arg3[%c0_1, %c0_2] : memref<128x256xbf16, #tpu.memory_space<vmem>>, vector<128x256xbf16>
    %cst = arith.constant dense<0.000000e+00> : vector<128x256xf32>
    %2 = tpu.matmul %0, %1, %cst {dimension_numbers = #tpu.dot_dimension_numbers<[1], [0], [0], [1], [0, 0, 1, 1], [], []>} : vector<128x128xbf16>, vector<128x256xbf16>, vector<128x256xf32> -> vector<128x256xf32>
    %c0_3 = arith.constant 0 : index
    %c0_4 = arith.constant 0 : index
    %3 = vector.load %arg2[%c0_3, %c0_4] : memref<128x256xbf16, #tpu.memory_space<vmem>>, vector<128x256xbf16>
    %c0_5 = arith.constant 0 : index
    %c0_6 = arith.constant 0 : index
    %4 = vector.load %arg4[%c0_5, %c0_6] : memref<256x256xbf16, #tpu.memory_space<vmem>>, vector<256x256xbf16>
    %cst_7 = arith.constant dense<0.000000e+00> : vector<128x256xf32>
    %5 = tpu.matmul %3, %4, %cst_7 {dimension_numbers = #tpu.dot_dimension_numbers<[1], [0], [0], [1], [0, 0, 1, 1], [], []>} : vector<128x256xbf16>, vector<256x256xbf16>, vector<128x256xf32> -> vector<128x256xf32>
    %6 = arith.addf %2, %5 : vector<128x256xf32>
    %cst_8 = arith.constant dense<0.000000e+00> : vector<128xf32>
    %7 = vector.multi_reduction <add>, %6, %cst_8 [1] : vector<128x256xf32> to vector<128xf32>
    %8 = vector.shape_cast %7 : vector<128xf32> to vector<128x1xf32>
    %9 = arith.mulf %6, %6 : vector<128x256xf32>
    %cst_9 = arith.constant dense<0.000000e+00> : vector<128xf32>
    %10 = vector.multi_reduction <add>, %9, %cst_9 [1] : vector<128x256xf32> to vector<128xf32>
    %11 = vector.shape_cast %10 : vector<128xf32> to vector<128x1xf32>
    %cst_10 = arith.constant 3.906250e-03 : f32
    %12 = vector.broadcast %cst_10 : f32 to vector<128x1xf32>
    %13 = arith.mulf %8, %12 : vector<128x1xf32>
    %cst_11 = arith.constant 3.906250e-03 : f32
    %14 = vector.broadcast %cst_11 : f32 to vector<128x1xf32>
    %15 = arith.mulf %11, %14 : vector<128x1xf32>
    %16 = arith.mulf %13, %13 : vector<128x1xf32>
    %17 = arith.subf %15, %16 : vector<128x1xf32>
    %18 = vector.broadcast %13 : vector<128x1xf32> to vector<128x256xf32>
    %19 = arith.subf %6, %18 : vector<128x256xf32>
    %cst_12 = arith.constant 9.99999974E-6 : f32
    %20 = vector.broadcast %cst_12 : f32 to vector<128x1xf32>
    %21 = arith.addf %17, %20 : vector<128x1xf32>
    %22 = math.rsqrt %21 : vector<128x1xf32>
    %23 = vector.broadcast %22 : vector<128x1xf32> to vector<128x256xf32>
    %24 = arith.mulf %19, %23 : vector<128x256xf32>
    %c0_13 = arith.constant 0 : index
    %c0_14 = arith.constant 0 : index
    %25 = vector.load %arg5[%c0_13, %c0_14] : memref<1x256xf32, #tpu.memory_space<vmem>>, vector<1x256xf32>
    %26 = vector.broadcast %25 : vector<1x256xf32> to vector<128x256xf32>
    %27 = arith.mulf %24, %26 : vector<128x256xf32>
    %c0_15 = arith.constant 0 : index
    %c0_16 = arith.constant 0 : index
    %28 = vector.load %arg6[%c0_15, %c0_16] : memref<1x256xf32, #tpu.memory_space<vmem>>, vector<1x256xf32>
    %29 = vector.broadcast %28 : vector<1x256xf32> to vector<128x256xf32>
    %30 = arith.addf %27, %29 : vector<128x256xf32>
    %31 = arith.negf %30 : vector<128x256xf32>
    %32 = math.exp %31 : vector<128x256xf32>
    %cst_17 = arith.constant 1.000000e+00 : f32
    %33 = vector.broadcast %cst_17 : f32 to vector<128x256xf32>
    %34 = arith.addf %33, %32 : vector<128x256xf32>
    %35 = arith.divf %33, %34 : vector<128x256xf32>
    %36 = arith.mulf %30, %35 : vector<128x256xf32>
    %37 = arith.truncf %36 : vector<128x256xf32> to vector<128x256xbf16>
    %c0_18 = arith.constant 0 : index
    %c0_19 = arith.constant 0 : index
    %38 = vector.load %arg7[%c0_18, %c0_19] : memref<256x1024xbf16, #tpu.memory_space<vmem>>, vector<256x1024xbf16>
    %cst_20 = arith.constant dense<0.000000e+00> : vector<128x1024xf32>
    %39 = tpu.matmul %37, %38, %cst_20 {dimension_numbers = #tpu.dot_dimension_numbers<[1], [0], [0], [1], [0, 0, 1, 1], [], []>} : vector<128x256xbf16>, vector<256x1024xbf16>, vector<128x1024xf32> -> vector<128x1024xf32>
    %c0_21 = arith.constant 0 : index
    %c0_22 = arith.constant 0 : index
    %40 = vector.load %arg8[%c0_21, %c0_22] : memref<1x1024xf32, #tpu.memory_space<vmem>>, vector<1x1024xf32>
    %41 = vector.broadcast %40 : vector<1x1024xf32> to vector<128x1024xf32>
    %42 = arith.addf %39, %41 : vector<128x1024xf32>
    %c0_23 = arith.constant 0 : index
    %c0_24 = arith.constant 0 : index
    %43 = vector.load %arg9[%c0_23, %c0_24] : memref<128x1024xf32, #tpu.memory_space<vmem>>, vector<128x1024xf32>
    tpu.vector_store %arg9[%c0_23, %c0_24], %42 {strides = array<i32>} : memref<128x1024xf32, #tpu.memory_space<vmem>>, vector<128x1024xf32>,
    return
  }
  func.func @transform_0(%arg0: i32) -> (i32, i32) {
    %c0_i32 = arith.constant 0 : i32
    %c0_i32_0 = arith.constant 0 : i32
    return %arg0, %c0_i32 : i32, i32
  }
  func.func @transform_1(%arg0: i32) -> (i32, i32) {
    %c0_i32 = arith.constant 0 : i32
    %c0_i32_0 = arith.constant 0 : i32
    return %arg0, %c0_i32 : i32, i32
  }
  func.func @transform_2(%arg0: i32) -> (i32, i32) {
    %c0_i32 = arith.constant 0 : i32
    %c0_i32_0 = arith.constant 0 : i32
    %c0_i32_1 = arith.constant 0 : i32
    return %c0_i32, %c0_i32_0 : i32, i32
  }
  func.func @transform_3(%arg0: i32) -> (i32, i32) {
    %c0_i32 = arith.constant 0 : i32
    %c0_i32_0 = arith.constant 0 : i32
    %c0_i32_1 = arith.constant 0 : i32
    return %c0_i32, %c0_i32_0 : i32, i32
  }
  func.func @transform_4(%arg0: i32) -> (i32, i32) {
    %c0_i32 = arith.constant 0 : i32
    %c0_i32_0 = arith.constant 0 : i32
    %c0_i32_1 = arith.constant 0 : i32
    return %c0_i32, %c0_i32_0 : i32, i32
  }
  func.func @transform_5(%arg0: i32) -> (i32, i32) {
    %c0_i32 = arith.constant 0 : i32
    %c0_i32_0 = arith.constant 0 : i32
    %c0_i32_1 = arith.constant 0 : i32
    return %c0_i32, %c0_i32_0 : i32, i32
  }
  func.func @transform_6(%arg0: i32) -> (i32, i32) {
    %c0_i32 = arith.constant 0 : i32
    %c0_i32_0 = arith.constant 0 : i32
    %c0_i32_1 = arith.constant 0 : i32
    return %c0_i32, %c0_i32_0 : i32, i32
  }
  func.func @transform_7(%arg0: i32) -> (i32, i32) {
    %c0_i32 = arith.constant 0 : i32
    %c0_i32_0 = arith.constant 0 : i32
    %c0_i32_1 = arith.constant 0 : i32
    return %c0_i32, %c0_i32_0 : i32, i32
  }
  func.func @transform_8(%arg0: i32) -> (i32, i32) {
    %c0_i32 = arith.constant 0 : i32
    %c0_i32_0 = arith.constant 0 : i32
    return %arg0, %c0_i32 : i32, i32
  }
}

</mosaic_0001>

<llo_original>
// kernel: encoder_forward.1
$region0: #{encoder_forward.1}
  #allocation0 [shape = 'u32[]', space=smem, size = 0x4, offset = 0x4, fixed_abs, tag = 'smem constant byte address 0x4 - core index']
  #allocation1 [shape = 'u32[72,128]{1,0:T(1,128)}', space=vmem, size = 0x9000, scoped, tag = 'internal scratch']
  %s0 = inlined_call_operand.vmem [shape: bf16[256,128], index: 0, kind: input, shape index: {}]
  %s1 = inlined_call_operand.vmem [shape: bf16[256,256], index: 1, kind: input, shape index: {}]
  %s2 = inlined_call_operand.vmem [shape: bf16[128,256], index: 2, kind: input, shape index: {}]
  %s3 = inlined_call_operand.hbm [shape: bf16[256,256], index: 3, kind: input, shape index: {}]
  %s4 = inlined_call_operand.vmem [shape: f32[1,256], index: 4, kind: input, shape index: {}]
  %s5 = inlined_call_operand.vmem [shape: f32[1,256], index: 5, kind: input, shape index: {}]
  %s6 = inlined_call_operand.vmem [shape: bf16[256,1024], index: 6, kind: input, shape index: {}]
  %s7 = inlined_call_operand.hbm [shape: f32[1,1024], index: 7, kind: input, shape index: {}]
  %s8 = inlined_call_operand.vmem [shape: f32[256,1024], index: 8, kind: output, shape index: {}]
  %s9 = sld [smem:[#allocation0]]
  $region73: #{encoder_forward.1} parent=0
    _
  %s11 = ssub.s32 1, %s9
  %s12 = scalar_select 0, %s11, %s9
  $region1: #{encoder_forward.1} parent=0
    #allocation2 [shape = 'u8[131072]{0}', space=vmem, size = 0x20000, scoped, tag = 'input window, operand 3, single buffered']
    #allocation3 [shape = 's32[2]{0}', space=sflag, size = 0x8, scoped, tag = 'scoped memory for encoder_forward.1']
    #allocation4 [shape = 'u8[4096]{0}', space=vmem, size = 0x1000, scoped, tag = 'input window, operand 7, single buffered']
    #allocation5 [shape = 's32[1]{0}', space=sflag, size = 0x4, scoped, tag = 'scoped memory for encoder_forward.1']
    %13 = vsyncpa [#allocation3], 0
    %14 = vsyncpa [#allocation5], 0
    loop: start=0, step=1, limit=4
    $region2: #{encoder_forward.1} parent=1 // loop_pre_header
      _
    $region3: #{encoder_forward.1} parent=1 // loop_header
      %s16 = sphi 0, %s20
      %p17 = scmp.ge.s32.totalorder %s16, 4
      %s26 = sphi 0, %s28
      %s29 = sphi 0, %s26
      %s30 = sphi 0, %s29
      %s46 = sphi 0, %s30
      %s52 = sphi 0, %s54
      %s55 = sphi 0, %s52
      %s56 = sphi 0, %s55
      %s72 = sphi 0, %s56
      %s76 = sphi 0, %s76
      %s78 = sphi 0, %s76
      %s79 = sphi 0, %s78
      %s93 = sphi 0, %s79
      %s97 = sphi 0, %s97
      %s99 = sphi 0, %s97
      %s100 = sphi 0, %s99
      %s114 = sphi 0, %s100
      %s118 = sphi 0, %s118
      %s120 = sphi 0, %s118
      %s121 = sphi 0, %s120
      %s135 = sphi 0, %s121
      %s139 = sphi 0, %s139
      %s141 = sphi 0, %s139
      %s142 = sphi 0, %s141
      %s156 = sphi 0, %s142
      %s160 = sphi 0, %s160
      %s162 = sphi 0, %s160
      %s163 = sphi 0, %s162
      %s177 = sphi 0, %s163
      %s181 = sphi 0, %s181
      %s183 = sphi 0, %s181
      %s184 = sphi 0, %s183
      %s198 = sphi 0, %s184
      %s204 = sphi 0, %s206
      %s207 = sphi 0, %s204
      %s208 = sphi 0, %s207
      %s224 = sphi 0, %s208
    $region4: #{encoder_forward.1} parent=1 // loop_header_branch
      %19 = sbr.rel (%p17) target = $region8
    $region5: #{encoder_forward.1} parent=1 // loop_body
      %s21 = ssub.s32 %s16, 1
      %s22 = ssub.s32 %s16, 2
      %s23 = sadd.s32 %s16, 1
      %s24 = ssub.s32 %s16, %s23
      %p25 = scmp.eq.s32.totalorder %s24, 0
      %s27 = sadd.s32 %s26, 1
      %s28 = scalar_select %p25, %s26, %s27
      %p31 = pneg %p25
      %p32 = scmp.eq.s32.totalorder %s16, 1
      %p33 = por %p31, %p32
      %p34 = scmp.ne.s32.totalorder %s26, %s29
      %p35 = scmp.eq.s32.totalorder %s16, 0
      %p36 = por %p34, %p35
      %p37 = scmp.ne.s32.totalorder %s26, %s29
      %p38 = scmp.eq.s32.totalorder %s21, 1
      %p39 = por %p37, %p38
      %p40 = scmp.ne.s32.totalorder %s29, %s30
      %p41 = scmp.eq.s32.totalorder %s21, 0
      %p42 = por %p40, %p41
      %p43 = scmp.ne.s32.totalorder %s29, %s30
      %p44 = scmp.eq.s32.totalorder %s22, 1
      %p45 = por %p43, %p44
      %p47 = scmp.ne.s32.totalorder %s30, %s46
      %p48 = scmp.eq.s32.totalorder %s22, 0
      %p49 = por %p47, %p48
      %s50 = ssub.s32 %s16, %s23
      %p51 = scmp.eq.s32.totalorder %s50, 0
      %s53 = sadd.s32 %s52, 1
      %s54 = scalar_select %p51, %s52, %s53
      %p57 = pneg %p51
      %p58 = scmp.eq.s32.totalorder %s16, 1
      %p59 = por %p57, %p58
      %p60 = scmp.ne.s32.totalorder %s52, %s55
      %p61 = scmp.eq.s32.totalorder %s16, 0
      %p62 = por %p60, %p61
      %p63 = scmp.ne.s32.totalorder %s52, %s55
      %p64 = scmp.eq.s32.totalorder %s21, 1
      %p65 = por %p63, %p64
      %p66 = scmp.ne.s32.totalorder %s55, %s56
      %p67 = scmp.eq.s32.totalorder %s21, 0
      %p68 = por %p66, %p67
      %p69 = scmp.ne.s32.totalorder %s55, %s56
      %p70 = scmp.eq.s32.totalorder %s22, 1
      %p71 = por %p69, %p70
      %p73 = scmp.ne.s32.totalorder %s56, %s72
      %p74 = scmp.eq.s32.totalorder %s22, 0
      %p75 = por %p73, %p74
      %s77 = sadd.s32 %s76, 1
      %p80 = scmp.eq.s32.totalorder %s16, 1
      %p81 = scmp.ne.s32.totalorder %s76, %s78
      %p82 = scmp.eq.s32.totalorder %s16, 0
      %p83 = por %p81, %p82
      %p84 = scmp.ne.s32.totalorder %s76, %s78
      %p85 = scmp.eq.s32.totalorder %s21, 1
      %p86 = por %p84, %p85
      %p87 = scmp.ne.s32.totalorder %s78, %s79
      %p88 = scmp.eq.s32.totalorder %s21, 0
      %p89 = por %p87, %p88
      %p90 = scmp.ne.s32.totalorder %s78, %s79
      %p91 = scmp.eq.s32.totalorder %s22, 1
      %p92 = por %p90, %p91
      %p94 = scmp.ne.s32.totalorder %s79, %s93
      %p95 = scmp.eq.s32.totalorder %s22, 0
      %p96 = por %p94, %p95
      %s98 = sadd.s32 %s97, 1
      %p101 = scmp.eq.s32.totalorder %s16, 1
      %p102 = scmp.ne.s32.totalorder %s97, %s99
      %p103 = scmp.eq.s32.totalorder %s16, 0
      %p104 = por %p102, %p103
      %p105 = scmp.ne.s32.totalorder %s97, %s99
      %p106 = scmp.eq.s32.totalorder %s21, 1
      %p107 = por %p105, %p106
      %p108 = scmp.ne.s32.totalorder %s99, %s100
      %p109 = scmp.eq.s32.totalorder %s21, 0
      %p110 = por %p108, %p109
      %p111 = scmp.ne.s32.totalorder %s99, %s100
      %p112 = scmp.eq.s32.totalorder %s22, 1
      %p113 = por %p111, %p112
      %p115 = scmp.ne.s32.totalorder %s100, %s114
      %p116 = scmp.eq.s32.totalorder %s22, 0
      %p117 = por %p115, %p116
      %s119 = sadd.s32 %s118, 1
      %p122 = scmp.eq.s32.totalorder %s16, 1
      %p123 = scmp.ne.s32.totalorder %s118, %s120
      %p124 = scmp.eq.s32.totalorder %s16, 0
      %p125 = por %p123, %p124
      %p126 = scmp.ne.s32.totalorder %s118, %s120
      %p127 = scmp.eq.s32.totalorder %s21, 1
      %p128 = por %p126, %p127
      %p129 = scmp.ne.s32.totalorder %s120, %s121
      %p130 = scmp.eq.s32.totalorder %s21, 0
      %p131 = por %p129, %p130
      %p132 = scmp.ne.s32.totalorder %s120, %s121
      %p133 = scmp.eq.s32.totalorder %s22, 1
      %p134 = por %p132, %p133
      %p136 = scmp.ne.s32.totalorder %s121, %s135
      %p137 = scmp.eq.s32.totalorder %s22, 0
      %p138 = por %p136, %p137
      %s140 = sadd.s32 %s139, 1
      %p143 = scmp.eq.s32.totalorder %s16, 1
      %p144 = scmp.ne.s32.totalorder %s139, %s141
      %p145 = scmp.eq.s32.totalorder %s16, 0
      %p146 = por %p144, %p145
      %p147 = scmp.ne.s32.totalorder %s139, %s141
      %p148 = scmp.eq.s32.totalorder %s21, 1
      %p149 = por %p147, %p148
      %p150 = scmp.ne.s32.totalorder %s141, %s142
      %p151 = scmp.eq.s32.totalorder %s21, 0
      %p152 = por %p150, %p151
      %p153 = scmp.ne.s32.totalorder %s141, %s142
      %p154 = scmp.eq.s32.totalorder %s22, 1
      %p155 = por %p153, %p154
      %p157 = scmp.ne.s32.totalorder %s142, %s156
      %p158 = scmp.eq.s32.totalorder %s22, 0
      %p159 = por %p157, %p158
      %s161 = sadd.s32 %s160, 1
      %p164 = scmp.eq.s32.totalorder %s16, 1
      %p165 = scmp.ne.s32.totalorder %s160, %s162
      %p166 = scmp.eq.s32.totalorder %s16, 0
      %p167 = por %p165, %p166
      %p168 = scmp.ne.s32.totalorder %s160, %s162
      %p169 = scmp.eq.s32.totalorder %s21, 1
      %p170 = por %p168, %p169
      %p171 = scmp.ne.s32.totalorder %s162, %s163
      %p172 = scmp.eq.s32.totalorder %s21, 0
      %p173 = por %p171, %p172
      %p174 = scmp.ne.s32.totalorder %s162, %s163
      %p175 = scmp.eq.s32.totalorder %s22, 1
      %p176 = por %p174, %p175
      %p178 = scmp.ne.s32.totalorder %s163, %s177
      %p179 = scmp.eq.s32.totalorder %s22, 0
      %p180 = por %p178, %p179
      %s182 = sadd.s32 %s181, 1
      %p185 = scmp.eq.s32.totalorder %s16, 1
      %p186 = scmp.ne.s32.totalorder %s181, %s183
      %p187 = scmp.eq.s32.totalorder %s16, 0
      %p188 = por %p186, %p187
      %p189 = scmp.ne.s32.totalorder %s181, %s183
      %p190 = scmp.eq.s32.totalorder %s21, 1
      %p191 = por %p189, %p190
      %p192 = scmp.ne.s32.totalorder %s183, %s184
      %p193 = scmp.eq.s32.totalorder %s21, 0
      %p194 = por %p192, %p193
      %p195 = scmp.ne.s32.totalorder %s183, %s184
      %p196 = scmp.eq.s32.totalorder %s22, 1
      %p197 = por %p195, %p196
      %p199 = scmp.ne.s32.totalorder %s184, %s198
      %p200 = scmp.eq.s32.totalorder %s22, 0
      %p201 = por %p199, %p200
      %s202 = ssub.s32 %s16, %s23
      %p203 = scmp.eq.s32.totalorder %s202, 0
      %s205 = sadd.s32 %s204, 1
      %s206 = scalar_select %p203, %s204, %s205
      %p209 = pneg %p203
      %p210 = scmp.eq.s32.totalorder %s16, 1
      %p211 = por %p209, %p210
      %p212 = scmp.ne.s32.totalorder %s204, %s207
      %p213 = scmp.eq.s32.totalorder %s16, 0
      %p214 = por %p212, %p213
      %p215 = scmp.ne.s32.totalorder %s204, %s207
      %p216 = scmp.eq.s32.totalorder %s21, 1
      %p217 = por %p215, %p216
      %p218 = scmp.ne.s32.totalorder %s207, %s208
      %p219 = scmp.eq.s32.totalorder %s21, 0
      %p220 = por %p218, %p219
      %p221 = scmp.ne.s32.totalorder %s207, %s208
      %p222 = scmp.eq.s32.totalorder %s22, 1
      %p223 = por %p221, %p222
      %p225 = scmp.ne.s32.totalorder %s208, %s224
      %p226 = scmp.eq.s32.totalorder %s22, 0
      %p227 = por %p225, %p226
      %p228 = scmp.le.s32.totalorder 1, %s16
      %p229 = scmp.lt.s32.totalorder %s16, 3
      %p230 = pnand %p228, %p229
      %p231 = pneg %p230
      // Predicated region
      $region9: #{encoder_forward.1} parent=5 // pred_check
        _
      $region10: #{encoder_forward.1} parent=5 // pred_check_branch
        %233 = sbr.rel (%p230) target = $region12
      $region11: #{encoder_forward.1} parent=5 // pred_region
        %s234 = ssub.s32 %s16, 1
        // Predicated region
        $region13: #{encoder_forward.1} parent=11 // pred_check
          %p235 = pneg %p89
        $region14: #{encoder_forward.1} parent=11 // pred_check_branch
          %237 = sbr.rel (%p235) target = $region16
        $region15: #{encoder_forward.1} parent=11 // pred_region
          _
        $region16: #{encoder_forward.1} parent=11 // pred_fallthru
          _
        // Predicated region
        $region17: #{encoder_forward.1} parent=11 // pred_check
          %p238 = pneg %p110
        $region18: #{encoder_forward.1} parent=11 // pred_check_branch
          %240 = sbr.rel (%p238) target = $region20
        $region19: #{encoder_forward.1} parent=11 // pred_region
          %242 = vsyncadd [#allocation3], 0
          %s243 = sshll.u32 %s3, 4
          %s244 = int_to_ptr.hbm [resolvable:$true] %s243
          %s245 = sshll.u32 [#allocation2], 4
          %s246 = int_to_ptr.vmem [resolvable:$true] %s245
          %251 = dma.hbm_to_vmem [thread:$0]  %s244, 4096, %s246, [#allocation3], 128, 128, 8
        $region20: #{encoder_forward.1} parent=11 // pred_fallthru
          _
        // Predicated region
        $region21: #{encoder_forward.1} parent=11 // pred_check
          %p252 = pneg %p131
        $region22: #{encoder_forward.1} parent=11 // pred_check_branch
          %254 = sbr.rel (%p252) target = $region24
        $region23: #{encoder_forward.1} parent=11 // pred_region
          _
        $region24: #{encoder_forward.1} parent=11 // pred_fallthru
          _
        // Predicated region
        $region25: #{encoder_forward.1} parent=11 // pred_check
          %p255 = pneg %p152
        $region26: #{encoder_forward.1} parent=11 // pred_check_branch
          %257 = sbr.rel (%p255) target = $region28
        $region27: #{encoder_forward.1} parent=11 // pred_region
          _
        $region28: #{encoder_forward.1} parent=11 // pred_fallthru
          _
        // Predicated region
        $region29: #{encoder_forward.1} parent=11 // pred_check
          %p258 = pneg %p173
        $region30: #{encoder_forward.1} parent=11 // pred_check_branch
          %260 = sbr.rel (%p258) target = $region32
        $region31: #{encoder_forward.1} parent=11 // pred_region
          _
        $region32: #{encoder_forward.1} parent=11 // pred_fallthru
          _
        // Predicated region
        $region33: #{encoder_forward.1} parent=11 // pred_check
          %p261 = pneg %p194
        $region34: #{encoder_forward.1} parent=11 // pred_check_branch
          %263 = sbr.rel (%p261) target = $region36
        $region35: #{encoder_forward.1} parent=11 // pred_region
          %265 = vsyncadd [#allocation5], 0
          %s267 = sshll.u32 %s7, 4
          %s268 = int_to_ptr.hbm [resolvable:$true] %s267
          %s269 = sshll.u32 [#allocation4], 4
          %s270 = int_to_ptr.vmem [resolvable:$true] %s269
          %272 = dma.hbm_to_vmem [thread:$0]  %s268, 128, %s270, [#allocation5]
        $region36: #{encoder_forward.1} parent=11 // pred_fallthru
          _
      $region12: #{encoder_forward.1} parent=5 // pred_fallthru
        _
      %p273 = scmp.lt.s32.totalorder %s16, 2
      // Predicated region
      $region37: #{encoder_forward.1} parent=5 // pred_check
        %p274 = pneg %p273
      $region38: #{encoder_forward.1} parent=5 // pred_check_branch
        %276 = sbr.rel (%p274) target = $region40
      $region39: #{encoder_forward.1} parent=5 // pred_region
        // Predicated region
        $region41: #{encoder_forward.1} parent=39 // pred_check
          %p277 = pneg %p36
        $region42: #{encoder_forward.1} parent=39 // pred_check_branch
          %279 = sbr.rel (%p277) target = $region44
        $region43: #{encoder_forward.1} parent=39 // pred_region
          %s280 = smul.u32 16, %s16
          %p281 = scmp.lt.s32.totalorder %s280, 31
          %s282 = scalar_select %p281, %s280, 31
          %s283 = smul.addr %s282, 4
          %s284 = scalar_lea.vmem %s0, %s283
          %s285 = smul.u32 16, %s16
        $region44: #{encoder_forward.1} parent=39 // pred_fallthru
          _
        // Predicated region
        $region45: #{encoder_forward.1} parent=39 // pred_check
          %p286 = pneg %p62
        $region46: #{encoder_forward.1} parent=39 // pred_check_branch
          %288 = sbr.rel (%p286) target = $region48
        $region47: #{encoder_forward.1} parent=39 // pred_region
          %s289 = smul.u32 16, %s16
          %p290 = scmp.lt.s32.totalorder %s289, 31
          %s291 = scalar_select %p290, %s289, 31
          %s292 = smul.addr %s291, 2
          %s293 = smul.addr %s292, 4
          %s294 = scalar_lea.vmem %s1, %s293
          %s295 = smul.u32 16, %s16
        $region48: #{encoder_forward.1} parent=39 // pred_fallthru
          _
      $region40: #{encoder_forward.1} parent=5 // pred_fallthru
        _
      %p296 = scmp.le.s32.totalorder 1, %s16
      %p297 = scmp.lt.s32.totalorder %s16, 3
      %p298 = pnand %p296, %p297
      %p299 = pneg %p298
      // Predicated region
      $region49: #{encoder_forward.1} parent=5 // pred_check
        _
      $region50: #{encoder_forward.1} parent=5 // pred_check_branch
        %301 = sbr.rel (%p298) target = $region52
      $region51: #{encoder_forward.1} parent=5 // pred_region
        %s302 = ssub.s32 %s16, 1
        // Predicated region
        $region53: #{encoder_forward.1} parent=51 // pred_check
          %p303 = pneg %p110
        $region54: #{encoder_forward.1} parent=51 // pred_check_branch
          %305 = sbr.rel (%p303) target = $region56
        $region55: #{encoder_forward.1} parent=51 // pred_region
          %307 = dma.done [#allocation3], 4096
        $region56: #{encoder_forward.1} parent=51 // pred_fallthru
          _
        // Predicated region
        $region57: #{encoder_forward.1} parent=51 // pred_check
          %p308 = pneg %p194
        $region58: #{encoder_forward.1} parent=51 // pred_check_branch
          %310 = sbr.rel (%p308) target = $region60
        $region59: #{encoder_forward.1} parent=51 // pred_region
          %312 = dma.done [#allocation5], 128
        $region60: #{encoder_forward.1} parent=51 // pred_fallthru
          _
        %s313 = smul.u32 16, %s21
        %p314 = scmp.lt.s32.totalorder %s313, 31
        %s315 = scalar_select %p314, %s313, 31
        %s316 = smul.addr %s315, 4
        %s317 = scalar_lea.vmem %s0, %s316
        %p318 = pneg %p42
        %p319 = pneg %p39
        %s320 = smul.u32 16, %s21
        %p321 = scmp.lt.s32.totalorder %s320, 31
        %s322 = scalar_select %p321, %s320, 31
        %s323 = smul.addr %s322, 2
        %s324 = smul.addr %s323, 4
        %s325 = scalar_lea.vmem %s1, %s324
        %p326 = pneg %p68
        %p327 = pneg %p65
        %p328 = pneg %p89
        %p329 = pneg %p86
        %p330 = pneg %p110
        %p331 = pneg %p107
        %p332 = pneg %p131
        %p333 = pneg %p128
        %p334 = pneg %p152
        %p335 = pneg %p149
        %p336 = pneg %p173
        %p337 = pneg %p170
        %p338 = pneg %p194
        %p339 = pneg %p191
        %p340 = pneg %p220
        %p341 = pneg %p217
        %s342 = smul.u32 16, %s21
        %p343 = scmp.lt.s32.totalorder %s342, 31
        %s344 = scalar_select %p343, %s342, 31
        %s345 = smul.addr %s344, 8
        %s346 = smul.addr %s345, 8
        %s347 = scalar_lea.vmem %s8, %s346
        %s348 = smul.u32 16, %s21
        %p349 = scmp.lt.s32.totalorder %s348, 31
        %s350 = scalar_select %p349, %s348, 31
        %s351 = smul.addr %s350, 4
        %s352 = scalar_lea.vmem %s0, %s351
        %s353 = smul.u32 16, %s21
        %s354 = smul.u32 16, %s21
        %p355 = scmp.lt.s32.totalorder %s354, 31
        %s356 = scalar_select %p355, %s354, 31
        %s357 = smul.addr %s356, 2
        %s358 = smul.addr %s357, 4
        %s359 = scalar_lea.vmem %s1, %s358
        %s360 = smul.u32 16, %s21
        %s361 = smul.u32 16, %s21
        %p362 = scmp.lt.s32.totalorder %s361, 31
        %s363 = scalar_select %p362, %s361, 31
        %s364 = smul.addr %s363, 8
        %s365 = smul.addr %s364, 8
        %s366 = scalar_lea.vmem %s8, %s365
        %s367 = smul.u32 16, %s21
        %v368 = vld [vmem:[%s352] sm:$0xf]
        %v369 = vld [vmem:[%s352 + $0x4] sm:$0xf]
        %v370 = vld [vmem:[%s352 + $0x8] sm:$0xf]
        %v371 = vld [vmem:[%s352 + $0xc] sm:$0xf]
        %v372 = vld [vmem:[%s352 + $0x10] sm:$0xf]
        %v373 = vld [vmem:[%s352 + $0x14] sm:$0xf]
        %v374 = vld [vmem:[%s352 + $0x18] sm:$0xf]
        %v375 = vld [vmem:[%s352 + $0x1c] sm:$0xf]
        %v376 = vld [vmem:[%s352 + $0x20] sm:$0xf]
        %v377 = vld [vmem:[%s352 + $0x24] sm:$0xf]
        %v378 = vld [vmem:[%s352 + $0x28] sm:$0xf]
        %v379 = vld [vmem:[%s352 + $0x2c] sm:$0xf]
        %v380 = vld [vmem:[%s352 + $0x30] sm:$0xf]
        %v381 = vld [vmem:[%s352 + $0x34] sm:$0xf]
        %v382 = vld [vmem:[%s352 + $0x38] sm:$0xf]
        %v383 = vld [vmem:[%s352 + $0x3c] sm:$0xf]
        %v384 = vld [vmem:[%s2] sm:$0xff]
        %v385 = vld [vmem:[%s2 + $0x8] sm:$0xff]
        %v386 = vld [vmem:[%s2 + $0x10] sm:$0xff]
        %v387 = vld [vmem:[%s2 + $0x18] sm:$0xff]
        %v388 = vld [vmem:[%s2 + $0x20] sm:$0xff]
        %v389 = vld [vmem:[%s2 + $0x28] sm:$0xff]
        %v390 = vld [vmem:[%s2 + $0x30] sm:$0xff]
        %v391 = vld [vmem:[%s2 + $0x38] sm:$0xff]
        %v392 = vld [vmem:[%s2 + $0x40] sm:$0xff]
        %v393 = vld [vmem:[%s2 + $0x48] sm:$0xff]
        %v394 = vld [vmem:[%s2 + $0x50] sm:$0xff]
        %v395 = vld [vmem:[%s2 + $0x58] sm:$0xff]
        %v396 = vld [vmem:[%s2 + $0x60] sm:$0xff]
        %v397 = vld [vmem:[%s2 + $0x68] sm:$0xff]
        %v398 = vld [vmem:[%s2 + $0x70] sm:$0xff]
        %v399 = vld [vmem:[%s2 + $0x78] sm:$0xff]
        %v400 = vld [vmem:[%s359] sm:$0xff]
        %v401 = vld [vmem:[%s359 + $0x8] sm:$0xff]
        %v402 = vld [vmem:[%s359 + $0x10] sm:$0xff]
        %v403 = vld [vmem:[%s359 + $0x18] sm:$0xff]
        %v404 = vld [vmem:[%s359 + $0x20] sm:$0xff]
        %v405 = vld [vmem:[%s359 + $0x28] sm:$0xff]
        %v406 = vld [vmem:[%s359 + $0x30] sm:$0xff]
        %v407 = vld [vmem:[%s359 + $0x38] sm:$0xff]
        %v408 = vld [vmem:[%s359 + $0x40] sm:$0xff]
        %v409 = vld [vmem:[%s359 + $0x48] sm:$0xff]
        %v410 = vld [vmem:[%s359 + $0x50] sm:$0xff]
        %v411 = vld [vmem:[%s359 + $0x58] sm:$0xff]
        %v412 = vld [vmem:[%s359 + $0x60] sm:$0xff]
        %v413 = vld [vmem:[%s359 + $0x68] sm:$0xff]
        %v414 = vld [vmem:[%s359 + $0x70] sm:$0xff]
        %v415 = vld [vmem:[%s359 + $0x78] sm:$0xff]
        %v416 = vld [vmem:[#allocation2] sm:$0xff]
        %v417 = vld [vmem:[#allocation2 + $0x8] sm:$0xff]
        %v418 = vld [vmem:[#allocation2 + $0x10] sm:$0xff]
        %v419 = vld [vmem:[#allocation2 + $0x18] sm:$0xff]
        %v420 = vld [vmem:[#allocation2 + $0x20] sm:$0xff]
        %v421 = vld [vmem:[#allocation2 + $0x28] sm:$0xff]
        %v422 = vld [vmem:[#allocation2 + $0x30] sm:$0xff]
        %v423 = vld [vmem:[#allocation2 + $0x38] sm:$0xff]
        %v424 = vld [vmem:[#allocation2 + $0x40] sm:$0xff]
        %v425 = vld [vmem:[#allocation2 + $0x48] sm:$0xff]
        %v426 = vld [vmem:[#allocation2 + $0x50] sm:$0xff]
        %v427 = vld [vmem:[#allocation2 + $0x58] sm:$0xff]
        %v428 = vld [vmem:[#allocation2 + $0x60] sm:$0xff]
        %v429 = vld [vmem:[#allocation2 + $0x68] sm:$0xff]
        %v430 = vld [vmem:[#allocation2 + $0x70] sm:$0xff]
        %v431 = vld [vmem:[#allocation2 + $0x78] sm:$0xff]
        %v432 = vld [vmem:[#allocation2 + $0x80] sm:$0xff]
        %v433 = vld [vmem:[#allocation2 + $0x88] sm:$0xff]
        %v434 = vld [vmem:[#allocation2 + $0x90] sm:$0xff]
        %v435 = vld [vmem:[#allocation2 + $0x98] sm:$0xff]
        %v436 = vld [vmem:[#allocation2 + $0xa0] sm:$0xff]
        %v437 = vld [vmem:[#allocation2 + $0xa8] sm:$0xff]
        %v438 = vld [vmem:[#allocation2 + $0xb0] sm:$0xff]
        %v439 = vld [vmem:[#allocation2 + $0xb8] sm:$0xff]
        %v440 = vld [vmem:[#allocation2 + $0xc0] sm:$0xff]
        %v441 = vld [vmem:[#allocation2 + $0xc8] sm:$0xff]
        %v442 = vld [vmem:[#allocation2 + $0xd0] sm:$0xff]
        %v443 = vld [vmem:[#allocation2 + $0xd8] sm:$0xff]
        %v444 = vld [vmem:[#allocation2 + $0xe0] sm:$0xff]
        %v445 = vld [vmem:[#allocation2 + $0xe8] sm:$0xff]
        %v446 = vld [vmem:[#allocation2 + $0xf0] sm:$0xff]
        %v447 = vld [vmem:[#allocation2 + $0xf8] sm:$0xff]
        %v464 = vunpack.c.l.b16 %v400
        %v465 = vunpack.c.h.b16 %v400
        %v466 = vunpack.c.l.b16 %v401
        %v467 = vunpack.c.h.b16 %v401
        %v468 = vunpack.c.l.b16 %v402
        %v469 = vunpack.c.h.b16 %v402
        %v470 = vunpack.c.l.b16 %v403
        %v471 = vunpack.c.h.b16 %v403
        %v472 = vunpack.c.l.b16 %v404
        %v473 = vunpack.c.h.b16 %v404
        %v474 = vunpack.c.l.b16 %v405
        %v475 = vunpack.c.h.b16 %v405
        %v476 = vunpack.c.l.b16 %v406
        %v477 = vunpack.c.h.b16 %v406
        %v478 = vunpack.c.l.b16 %v407
        %v479 = vunpack.c.h.b16 %v407
        %v480 = vunpack.c.l.b16 %v408
        %v481 = vunpack.c.h.b16 %v408
        %v482 = vunpack.c.l.b16 %v409
        %v483 = vunpack.c.h.b16 %v409
        %v484 = vunpack.c.l.b16 %v410
        %v485 = vunpack.c.h.b16 %v410
        %v486 = vunpack.c.l.b16 %v411
        %v487 = vunpack.c.h.b16 %v411
        %v488 = vunpack.c.l.b16 %v412
        %v489 = vunpack.c.h.b16 %v412
        %v490 = vunpack.c.l.b16 %v413
        %v491 = vunpack.c.h.b16 %v413
        %v492 = vunpack.c.l.b16 %v414
        %v493 = vunpack.c.h.b16 %v414
        %v494 = vunpack.c.l.b16 %v415
        %v495 = vunpack.c.h.b16 %v415
        %v496 = vpack.c.b16 %v466, %v464
        %v497 = vpack.c.b16 %v467, %v465
        %v498 = vpack.c.b16 %v470, %v468
        %v499 = vpack.c.b16 %v471, %v469
        %v500 = vpack.c.b16 %v474, %v472
        %v501 = vpack.c.b16 %v475, %v473
        %v502 = vpack.c.b16 %v478, %v476
        %v503 = vpack.c.b16 %v479, %v477
        %v504 = vpack.c.b16 %v482, %v480
        %v505 = vpack.c.b16 %v483, %v481
        %v506 = vpack.c.b16 %v486, %v484
        %v507 = vpack.c.b16 %v487, %v485
        %v508 = vpack.c.b16 %v490, %v488
        %v509 = vpack.c.b16 %v491, %v489
        %v510 = vpack.c.b16 %v494, %v492
        %v511 = vpack.c.b16 %v495, %v493
        %v560 = vunpack.c.l.b16 %v416
        %v561 = vunpack.c.h.b16 %v416
        %v562 = vunpack.c.l.b16 %v417
        %v563 = vunpack.c.h.b16 %v417
        %v564 = vunpack.c.l.b16 %v418
        %v565 = vunpack.c.h.b16 %v418
        %v566 = vunpack.c.l.b16 %v419
        %v567 = vunpack.c.h.b16 %v419
        %v568 = vunpack.c.l.b16 %v420
        %v569 = vunpack.c.h.b16 %v420
        %v570 = vunpack.c.l.b16 %v421
        %v571 = vunpack.c.h.b16 %v421
        %v572 = vunpack.c.l.b16 %v422
        %v573 = vunpack.c.h.b16 %v422
        %v574 = vunpack.c.l.b16 %v423
        %v575 = vunpack.c.h.b16 %v423
        %v576 = vunpack.c.l.b16 %v424
        %v577 = vunpack.c.h.b16 %v424
        %v578 = vunpack.c.l.b16 %v425
        %v579 = vunpack.c.h.b16 %v425
        %v580 = vunpack.c.l.b16 %v426
        %v581 = vunpack.c.h.b16 %v426
        %v582 = vunpack.c.l.b16 %v427
        %v583 = vunpack.c.h.b16 %v427
        %v584 = vunpack.c.l.b16 %v428
        %v585 = vunpack.c.h.b16 %v428
        %v586 = vunpack.c.l.b16 %v429
        %v587 = vunpack.c.h.b16 %v429
        %v588 = vunpack.c.l.b16 %v430
        %v589 = vunpack.c.h.b16 %v430
        %v590 = vunpack.c.l.b16 %v431
        %v591 = vunpack.c.h.b16 %v431
        %v592 = vunpack.c.l.b16 %v432
        %v593 = vunpack.c.h.b16 %v432
        %v594 = vunpack.c.l.b16 %v433
        %v595 = vunpack.c.h.b16 %v433
        %v596 = vunpack.c.l.b16 %v434
        %v597 = vunpack.c.h.b16 %v434
        %v598 = vunpack.c.l.b16 %v435
        %v599 = vunpack.c.h.b16 %v435
        %v600 = vunpack.c.l.b16 %v436
        %v601 = vunpack.c.h.b16 %v436
        %v602 = vunpack.c.l.b16 %v437
        %v603 = vunpack.c.h.b16 %v437
        %v604 = vunpack.c.l.b16 %v438
        %v605 = vunpack.c.h.b16 %v438
        %v606 = vunpack.c.l.b16 %v439
        %v607 = vunpack.c.h.b16 %v439
        %v608 = vunpack.c.l.b16 %v440
        %v609 = vunpack.c.h.b16 %v440
        %v610 = vunpack.c.l.b16 %v441
        %v611 = vunpack.c.h.b16 %v441
        %v612 = vunpack.c.l.b16 %v442
        %v613 = vunpack.c.h.b16 %v442
        %v614 = vunpack.c.l.b16 %v443
        %v615 = vunpack.c.h.b16 %v443
        %v616 = vunpack.c.l.b16 %v444
        %v617 = vunpack.c.h.b16 %v444
        %v618 = vunpack.c.l.b16 %v445
        %v619 = vunpack.c.h.b16 %v445
        %v620 = vunpack.c.l.b16 %v446
        %v621 = vunpack.c.h.b16 %v446
        %v622 = vunpack.c.l.b16 %v447
        %v623 = vunpack.c.h.b16 %v447
        %v624 = vpack.c.b16 %v562, %v560
        %v625 = vpack.c.b16 %v563, %v561
        %v626 = vpack.c.b16 %v566, %v564
        %v627 = vpack.c.b16 %v567, %v565
        %v628 = vpack.c.b16 %v570, %v568
        %v629 = vpack.c.b16 %v571, %v569
        %v630 = vpack.c.b16 %v574, %v572
        %v631 = vpack.c.b16 %v575, %v573
        %v632 = vpack.c.b16 %v578, %v576
        %v633 = vpack.c.b16 %v579, %v577
        %v634 = vpack.c.b16 %v582, %v580
        %v635 = vpack.c.b16 %v583, %v581
        %v636 = vpack.c.b16 %v586, %v584
        %v637 = vpack.c.b16 %v587, %v585
        %v638 = vpack.c.b16 %v590, %v588
        %v639 = vpack.c.b16 %v591, %v589
        %v640 = vpack.c.b16 %v594, %v592
        %v641 = vpack.c.b16 %v595, %v593
        %v642 = vpack.c.b16 %v598, %v596
        %v643 = vpack.c.b16 %v599, %v597
        %v644 = vpack.c.b16 %v602, %v600
        %v645 = vpack.c.b16 %v603, %v601
        %v646 = vpack.c.b16 %v606, %v604
        %v647 = vpack.c.b16 %v607, %v605
        %v648 = vpack.c.b16 %v610, %v608
        %v649 = vpack.c.b16 %v611, %v609
        %v650 = vpack.c.b16 %v614, %v612
        %v651 = vpack.c.b16 %v615, %v613
        %v652 = vpack.c.b16 %v618, %v616
        %v653 = vpack.c.b16 %v619, %v617
        %v654 = vpack.c.b16 %v622, %v620
        %v655 = vpack.c.b16 %v623, %v621
        %688 = vmatpush.bf16.msra.mxu0 %v638
        %689 = vmatpush.bf16.msra.mxu0 %v636
        %690 = vmatpush.bf16.msra.mxu0 %v634
        %691 = vmatpush.bf16.msra.mxu0 %v632
        %692 = vmatpush.bf16.msra.mxu0 %v630
        %693 = vmatpush.bf16.msra.mxu0 %v628
        %694 = vmatpush.bf16.msra.mxu0 %v626
        %695 = vmatpush.bf16.msra.mxu0 %v624
        %696 = vmatmul.bf16.gmra.mxu0 %v496
        %v697 = vpop.f32.mrf.mxu0
        %v698 = vadd.f32 0.0, %v697
        %v699 = vpop.f32.mrf.mxu0
        %v700 = vadd.f32 0.0, %v699
        %701 = vmatmul.bf16.gmra.mxu0 %v498
        %v702 = vpop.f32.mrf.mxu0
        %v703 = vadd.f32 0.0, %v702
        %v704 = vpop.f32.mrf.mxu0
        %v705 = vadd.f32 0.0, %v704
        %706 = vmatmul.bf16.gmra.mxu0 %v500
        %v707 = vpop.f32.mrf.mxu0
        %v708 = vadd.f32 0.0, %v707
        %v709 = vpop.f32.mrf.mxu0
        %v710 = vadd.f32 0.0, %v709
        %711 = vmatmul.bf16.gmra.mxu0 %v502
        %v712 = vpop.f32.mrf.mxu0
        %v713 = vadd.f32 0.0, %v712
        %v714 = vpop.f32.mrf.mxu0
        %v715 = vadd.f32 0.0, %v714
        %716 = vmatmul.bf16.gmra.mxu0 %v504
        %v717 = vpop.f32.mrf.mxu0
        %v718 = vadd.f32 0.0, %v717
        %v719 = vpop.f32.mrf.mxu0
        %v720 = vadd.f32 0.0, %v719
        %721 = vmatmul.bf16.gmra.mxu0 %v506
        %v722 = vpop.f32.mrf.mxu0
        %v723 = vadd.f32 0.0, %v722
        %v724 = vpop.f32.mrf.mxu0
        %v725 = vadd.f32 0.0, %v724
        %726 = vmatmul.bf16.gmra.mxu0 %v508
        %v727 = vpop.f32.mrf.mxu0
        %v728 = vadd.f32 0.0, %v727
        %v729 = vpop.f32.mrf.mxu0
        %v730 = vadd.f32 0.0, %v729
        %731 = vmatmul.bf16.gmra.mxu0 %v510
        %v732 = vpop.f32.mrf.mxu0
        %v733 = vadd.f32 0.0, %v732
        %v734 = vpop.f32.mrf.mxu0
        %v735 = vadd.f32 0.0, %v734
        %736 = vdwg.mxu0
        %737 = vmatpush.bf16.msra.mxu0 %v654
        %738 = vmatpush.bf16.msra.mxu0 %v652
        %739 = vmatpush.bf16.msra.mxu0 %v650
        %740 = vmatpush.bf16.msra.mxu0 %v648
        %741 = vmatpush.bf16.msra.mxu0 %v646
        %742 = vmatpush.bf16.msra.mxu0 %v644
        %743 = vmatpush.bf16.msra.mxu0 %v642
        %744 = vmatpush.bf16.msra.mxu0 %v640
        %745 = vmatmul.bf16.gmra.mxu0 %v497
        %v746 = vpop.f32.mrf.mxu0
        %v747 = vadd.f32 %v698, %v746
        %v748 = vpop.f32.mrf.mxu0
        %v749 = vadd.f32 %v700, %v748
        %750 = vmatmul.bf16.gmra.mxu0 %v499
        %v751 = vpop.f32.mrf.mxu0
        %v752 = vadd.f32 %v703, %v751
        %v753 = vpop.f32.mrf.mxu0
        %v754 = vadd.f32 %v705, %v753
        %755 = vmatmul.bf16.gmra.mxu0 %v501
        %v756 = vpop.f32.mrf.mxu0
        %v757 = vadd.f32 %v708, %v756
        %v758 = vpop.f32.mrf.mxu0
        %v759 = vadd.f32 %v710, %v758
        %760 = vmatmul.bf16.gmra.mxu0 %v503
        %v761 = vpop.f32.mrf.mxu0
        %v762 = vadd.f32 %v713, %v761
        %v763 = vpop.f32.mrf.mxu0
        %v764 = vadd.f32 %v715, %v763
        %765 = vmatmul.bf16.gmra.mxu0 %v505
        %v766 = vpop.f32.mrf.mxu0
        %v767 = vadd.f32 %v718, %v766
        %v768 = vpop.f32.mrf.mxu0
        %v769 = vadd.f32 %v720, %v768
        %770 = vmatmul.bf16.gmra.mxu0 %v507
        %v771 = vpop.f32.mrf.mxu0
        %v772 = vadd.f32 %v723, %v771
        %v773 = vpop.f32.mrf.mxu0
        %v774 = vadd.f32 %v725, %v773
        %775 = vmatmul.bf16.gmra.mxu0 %v509
        %v776 = vpop.f32.mrf.mxu0
        %v777 = vadd.f32 %v728, %v776
        %v778 = vpop.f32.mrf.mxu0
        %v779 = vadd.f32 %v730, %v778
        %780 = vmatmul.bf16.gmra.mxu0 %v511
        %v781 = vpop.f32.mrf.mxu0
        %v782 = vadd.f32 %v733, %v781
        %v783 = vpop.f32.mrf.mxu0
        %v784 = vadd.f32 %v735, %v783
        %785 = vdwg.mxu0
        %786 = vmatpush.bf16.msra.mxu0 %v639
        %787 = vmatpush.bf16.msra.mxu0 %v637
        %788 = vmatpush.bf16.msra.mxu0 %v635
        %789 = vmatpush.bf16.msra.mxu0 %v633
        %790 = vmatpush.bf16.msra.mxu0 %v631
        %791 = vmatpush.bf16.msra.mxu0 %v629
        %792 = vmatpush.bf16.msra.mxu0 %v627
        %793 = vmatpush.bf16.msra.mxu0 %v625
        %794 = vmatmul.bf16.gmra.mxu0 %v496
        %v795 = vpop.f32.mrf.mxu0
        %v796 = vadd.f32 0.0, %v795
        %v797 = vpop.f32.mrf.mxu0
        %v798 = vadd.f32 0.0, %v797
        %799 = vmatmul.bf16.gmra.mxu0 %v498
        %v800 = vpop.f32.mrf.mxu0
        %v801 = vadd.f32 0.0, %v800
        %v802 = vpop.f32.mrf.mxu0
        %v803 = vadd.f32 0.0, %v802
        %804 = vmatmul.bf16.gmra.mxu0 %v500
        %v805 = vpop.f32.mrf.mxu0
        %v806 = vadd.f32 0.0, %v805
        %v807 = vpop.f32.mrf.mxu0
        %v808 = vadd.f32 0.0, %v807
        %809 = vmatmul.bf16.gmra.mxu0 %v502
        %v810 = vpop.f32.mrf.mxu0
        %v811 = vadd.f32 0.0, %v810
        %v812 = vpop.f32.mrf.mxu0
        %v813 = vadd.f32 0.0, %v812
        %814 = vmatmul.bf16.gmra.mxu0 %v504
        %v815 = vpop.f32.mrf.mxu0
        %v816 = vadd.f32 0.0, %v815
        %v817 = vpop.f32.mrf.mxu0
        %v818 = vadd.f32 0.0, %v817
        %819 = vmatmul.bf16.gmra.mxu0 %v506
        %v820 = vpop.f32.mrf.mxu0
        %v821 = vadd.f32 0.0, %v820
        %v822 = vpop.f32.mrf.mxu0
        %v823 = vadd.f32 0.0, %v822
        %824 = vmatmul.bf16.gmra.mxu0 %v508
        %v825 = vpop.f32.mrf.mxu0
        %v826 = vadd.f32 0.0, %v825
        %v827 = vpop.f32.mrf.mxu0
        %v828 = vadd.f32 0.0, %v827
        %829 = vmatmul.bf16.gmra.mxu0 %v510
        %v830 = vpop.f32.mrf.mxu0
        %v831 = vadd.f32 0.0, %v830
        %v832 = vpop.f32.mrf.mxu0
        %v833 = vadd.f32 0.0, %v832
        %834 = vdwg.mxu0
        %835 = vmatpush.bf16.msra.mxu0 %v655
        %836 = vmatpush.bf16.msra.mxu0 %v653
        %837 = vmatpush.bf16.msra.mxu0 %v651
        %838 = vmatpush.bf16.msra.mxu0 %v649
        %839 = vmatpush.bf16.msra.mxu0 %v647
        %840 = vmatpush.bf16.msra.mxu0 %v645
        %841 = vmatpush.bf16.msra.mxu0 %v643
        %842 = vmatpush.bf16.msra.mxu0 %v641
        %843 = vmatmul.bf16.gmra.mxu0 %v497
        %v844 = vpop.f32.mrf.mxu0
        %v845 = vadd.f32 %v796, %v844
        %v846 = vpop.f32.mrf.mxu0
        %v847 = vadd.f32 %v798, %v846
        %848 = vmatmul.bf16.gmra.mxu0 %v499
        %v849 = vpop.f32.mrf.mxu0
        %v850 = vadd.f32 %v801, %v849
        %v851 = vpop.f32.mrf.mxu0
        %v852 = vadd.f32 %v803, %v851
        %853 = vmatmul.bf16.gmra.mxu0 %v501
        %v854 = vpop.f32.mrf.mxu0
        %v855 = vadd.f32 %v806, %v854
        %v856 = vpop.f32.mrf.mxu0
        %v857 = vadd.f32 %v808, %v856
        %858 = vmatmul.bf16.gmra.mxu0 %v503
        %v859 = vpop.f32.mrf.mxu0
        %v860 = vadd.f32 %v811, %v859
        %v861 = vpop.f32.mrf.mxu0
        %v862 = vadd.f32 %v813, %v861
        %863 = vmatmul.bf16.gmra.mxu0 %v505
        %v864 = vpop.f32.mrf.mxu0
        %v865 = vadd.f32 %v816, %v864
        %v866 = vpop.f32.mrf.mxu0
        %v867 = vadd.f32 %v818, %v866
        %868 = vmatmul.bf16.gmra.mxu0 %v507
        %v869 = vpop.f32.mrf.mxu0
        %v870 = vadd.f32 %v821, %v869
        %v871 = vpop.f32.mrf.mxu0
        %v872 = vadd.f32 %v823, %v871
        %873 = vmatmul.bf16.gmra.mxu0 %v509
        %v874 = vpop.f32.mrf.mxu0
        %v875 = vadd.f32 %v826, %v874
        %v876 = vpop.f32.mrf.mxu0
        %v877 = vadd.f32 %v828, %v876
        %878 = vmatmul.bf16.gmra.mxu0 %v511
        %v879 = vpop.f32.mrf.mxu0
        %v880 = vadd.f32 %v831, %v879
        %v881 = vpop.f32.mrf.mxu0
        %v882 = vadd.f32 %v833, %v881
        %883 = vdwg.mxu0
        %v900 = vunpack.c.l.b16 %v368
        %v901 = vunpack.c.l.b16 %v369
        %v902 = vunpack.c.l.b16 %v370
        %v903 = vunpack.c.l.b16 %v371
        %v904 = vunpack.c.l.b16 %v372
        %v905 = vunpack.c.l.b16 %v373
        %v906 = vunpack.c.l.b16 %v374
        %v907 = vunpack.c.l.b16 %v375
        %v908 = vunpack.c.l.b16 %v376
        %v909 = vunpack.c.l.b16 %v377
        %v910 = vunpack.c.l.b16 %v378
        %v911 = vunpack.c.l.b16 %v379
        %v912 = vunpack.c.l.b16 %v380
        %v913 = vunpack.c.l.b16 %v381
        %v914 = vunpack.c.l.b16 %v382
        %v915 = vunpack.c.l.b16 %v383
        %v916 = vpack.c.b16 %v901, %v900
        %v917 = vpack.c.b16 %v903, %v902
        %v918 = vpack.c.b16 %v905, %v904
        %v919 = vpack.c.b16 %v907, %v906
        %v920 = vpack.c.b16 %v909, %v908
        %v921 = vpack.c.b16 %v911, %v910
        %v922 = vpack.c.b16 %v913, %v912
        %v923 = vpack.c.b16 %v915, %v914
        %v948 = vunpack.c.l.b16 %v384
        %v949 = vunpack.c.h.b16 %v384
        %v950 = vunpack.c.l.b16 %v385
        %v951 = vunpack.c.h.b16 %v385
        %v952 = vunpack.c.l.b16 %v386
        %v953 = vunpack.c.h.b16 %v386
        %v954 = vunpack.c.l.b16 %v387
        %v955 = vunpack.c.h.b16 %v387
        %v956 = vunpack.c.l.b16 %v388
        %v957 = vunpack.c.h.b16 %v388
        %v958 = vunpack.c.l.b16 %v389
        %v959 = vunpack.c.h.b16 %v389
        %v960 = vunpack.c.l.b16 %v390
        %v961 = vunpack.c.h.b16 %v390
        %v962 = vunpack.c.l.b16 %v391
        %v963 = vunpack.c.h.b16 %v391
        %v964 = vunpack.c.l.b16 %v392
        %v965 = vunpack.c.h.b16 %v392
        %v966 = vunpack.c.l.b16 %v393
        %v967 = vunpack.c.h.b16 %v393
        %v968 = vunpack.c.l.b16 %v394
        %v969 = vunpack.c.h.b16 %v394
        %v970 = vunpack.c.l.b16 %v395
        %v971 = vunpack.c.h.b16 %v395
        %v972 = vunpack.c.l.b16 %v396
        %v973 = vunpack.c.h.b16 %v396
        %v974 = vunpack.c.l.b16 %v397
        %v975 = vunpack.c.h.b16 %v397
        %v976 = vunpack.c.l.b16 %v398
        %v977 = vunpack.c.h.b16 %v398
        %v978 = vunpack.c.l.b16 %v399
        %v979 = vunpack.c.h.b16 %v399
        %v980 = vpack.c.b16 %v950, %v948
        %v981 = vpack.c.b16 %v951, %v949
        %v982 = vpack.c.b16 %v954, %v952
        %v983 = vpack.c.b16 %v955, %v953
        %v984 = vpack.c.b16 %v958, %v956
        %v985 = vpack.c.b16 %v959, %v957
        %v986 = vpack.c.b16 %v962, %v960
        %v987 = vpack.c.b16 %v963, %v961
        %v988 = vpack.c.b16 %v966, %v964
        %v989 = vpack.c.b16 %v967, %v965
        %v990 = vpack.c.b16 %v970, %v968
        %v991 = vpack.c.b16 %v971, %v969
        %v992 = vpack.c.b16 %v974, %v972
        %v993 = vpack.c.b16 %v975, %v973
        %v994 = vpack.c.b16 %v978, %v976
        %v995 = vpack.c.b16 %v979, %v977
        %1012 = vmatpush.bf16.msra.mxu0 %v994
        %1013 = vmatpush.bf16.msra.mxu0 %v992
        %1014 = vmatpush.bf16.msra.mxu0 %v990
        %1015 = vmatpush.bf16.msra.mxu0 %v988
        %1016 = vmatpush.bf16.msra.mxu0 %v986
        %1017 = vmatpush.bf16.msra.mxu0 %v984
        %1018 = vmatpush.bf16.msra.mxu0 %v982
        %1019 = vmatpush.bf16.msra.mxu0 %v980
        %1020 = vmatmul.bf16.gmra.mxu0 %v916
        %v1021 = vpop.f32.mrf.mxu0
        %v1022 = vadd.f32 %v747, %v1021
        %v1023 = vpop.f32.mrf.mxu0
        %v1024 = vadd.f32 %v749, %v1023
        %1025 = vmatmul.bf16.gmra.mxu0 %v917
        %v1026 = vpop.f32.mrf.mxu0
        %v1027 = vadd.f32 %v752, %v1026
        %v1028 = vpop.f32.mrf.mxu0
        %v1029 = vadd.f32 %v754, %v1028
        %1030 = vmatmul.bf16.gmra.mxu0 %v918
        %v1031 = vpop.f32.mrf.mxu0
        %v1032 = vadd.f32 %v757, %v1031
        %v1033 = vpop.f32.mrf.mxu0
        %v1034 = vadd.f32 %v759, %v1033
        %1035 = vmatmul.bf16.gmra.mxu0 %v919
        %v1036 = vpop.f32.mrf.mxu0
        %v1037 = vadd.f32 %v762, %v1036
        %v1038 = vpop.f32.mrf.mxu0
        %v1039 = vadd.f32 %v764, %v1038
        %1040 = vmatmul.bf16.gmra.mxu0 %v920
        %v1041 = vpop.f32.mrf.mxu0
        %v1042 = vadd.f32 %v767, %v1041
        %v1043 = vpop.f32.mrf.mxu0
        %v1044 = vadd.f32 %v769, %v1043
        %1045 = vmatmul.bf16.gmra.mxu0 %v921
        %v1046 = vpop.f32.mrf.mxu0
        %v1047 = vadd.f32 %v772, %v1046
        %v1048 = vpop.f32.mrf.mxu0
        %v1049 = vadd.f32 %v774, %v1048
        %1050 = vmatmul.bf16.gmra.mxu0 %v922
        %v1051 = vpop.f32.mrf.mxu0
        %v1052 = vadd.f32 %v777, %v1051
        %v1053 = vpop.f32.mrf.mxu0
        %v1054 = vadd.f32 %v779, %v1053
        %1055 = vmatmul.bf16.gmra.mxu0 %v923
        %v1056 = vpop.f32.mrf.mxu0
        %v1057 = vadd.f32 %v782, %v1056
        %v1058 = vpop.f32.mrf.mxu0
        %v1059 = vadd.f32 %v784, %v1058
        %1060 = vdwg.mxu0
        %1061 = vmatpush.bf16.msra.mxu0 %v995
        %1062 = vmatpush.bf16.msra.mxu0 %v993
        %1063 = vmatpush.bf16.msra.mxu0 %v991
        %1064 = vmatpush.bf16.msra.mxu0 %v989
        %1065 = vmatpush.bf16.msra.mxu0 %v987
        %1066 = vmatpush.bf16.msra.mxu0 %v985
        %1067 = vmatpush.bf16.msra.mxu0 %v983
        %1068 = vmatpush.bf16.msra.mxu0 %v981
        %1069 = vmatmul.bf16.gmra.mxu0 %v916
        %v1070 = vpop.f32.mrf.mxu0
        %v1071 = vadd.f32 %v845, %v1070
        %v1072 = vpop.f32.mrf.mxu0
        %v1073 = vadd.f32 %v847, %v1072
        %1074 = vmatmul.bf16.gmra.mxu0 %v917
        %v1075 = vpop.f32.mrf.mxu0
        %v1076 = vadd.f32 %v850, %v1075
        %v1077 = vpop.f32.mrf.mxu0
        %v1078 = vadd.f32 %v852, %v1077
        %1079 = vmatmul.bf16.gmra.mxu0 %v918
        %v1080 = vpop.f32.mrf.mxu0
        %v1081 = vadd.f32 %v855, %v1080
        %v1082 = vpop.f32.mrf.mxu0
        %v1083 = vadd.f32 %v857, %v1082
        %1084 = vmatmul.bf16.gmra.mxu0 %v919
        %v1085 = vpop.f32.mrf.mxu0
        %v1086 = vadd.f32 %v860, %v1085
        %v1087 = vpop.f32.mrf.mxu0
        %v1088 = vadd.f32 %v862, %v1087
        %1089 = vmatmul.bf16.gmra.mxu0 %v920
        %v1090 = vpop.f32.mrf.mxu0
        %v1091 = vadd.f32 %v865, %v1090
        %v1092 = vpop.f32.mrf.mxu0
        %v1093 = vadd.f32 %v867, %v1092
        %1094 = vmatmul.bf16.gmra.mxu0 %v921
        %v1095 = vpop.f32.mrf.mxu0
        %v1096 = vadd.f32 %v870, %v1095
        %v1097 = vpop.f32.mrf.mxu0
        %v1098 = vadd.f32 %v872, %v1097
        %1099 = vmatmul.bf16.gmra.mxu0 %v922
        %v1100 = vpop.f32.mrf.mxu0
        %v1101 = vadd.f32 %v875, %v1100
        %v1102 = vpop.f32.mrf.mxu0
        %v1103 = vadd.f32 %v877, %v1102
        %1104 = vmatmul.bf16.gmra.mxu0 %v923
        %v1105 = vpop.f32.mrf.mxu0
        %v1106 = vadd.f32 %v880, %v1105
        %v1107 = vpop.f32.mrf.mxu0
        %v1108 = vadd.f32 %v882, %v1107
        %1109 = vdwg.mxu0
        %v1110 = vadd.f32 %v1022, %v1071
        %1111 = vadd.xlane.f32.xlu0 %v1110
        %v1112 = vpop.xlane.xlu0 %1111
        %v1113 = vadd.f32 %v1024, %v1073
        %1114 = vadd.xlane.f32.xlu0 %v1113
        %v1115 = vpop.xlane.xlu0 %1114
        %v1116 = vadd.f32 %v1027, %v1076
        %1117 = vadd.xlane.f32.xlu0 %v1116
        %v1118 = vpop.xlane.xlu0 %1117
        %v1119 = vadd.f32 %v1029, %v1078
        %1120 = vadd.xlane.f32.xlu0 %v1119
        %v1121 = vpop.xlane.xlu0 %1120
        %v1122 = vadd.f32 %v1032, %v1081
        %1123 = vadd.xlane.f32.xlu0 %v1122
        %v1124 = vpop.xlane.xlu0 %1123
        %v1125 = vadd.f32 %v1034, %v1083
        %1126 = vadd.xlane.f32.xlu0 %v1125
        %v1127 = vpop.xlane.xlu0 %1126
        %v1128 = vadd.f32 %v1037, %v1086
        %1129 = vadd.xlane.f32.xlu0 %v1128
        %v1130 = vpop.xlane.xlu0 %1129
        %v1131 = vadd.f32 %v1039, %v1088
        %1132 = vadd.xlane.f32.xlu0 %v1131
        %v1133 = vpop.xlane.xlu0 %1132
        %v1134 = vadd.f32 %v1042, %v1091
        %1135 = vadd.xlane.f32.xlu0 %v1134
        %v1136 = vpop.xlane.xlu0 %1135
        %v1137 = vadd.f32 %v1044, %v1093
        %1138 = vadd.xlane.f32.xlu0 %v1137
        %v1139 = vpop.xlane.xlu0 %1138
        %v1140 = vadd.f32 %v1047, %v1096
        %1141 = vadd.xlane.f32.xlu0 %v1140
        %v1142 = vpop.xlane.xlu0 %1141
        %v1143 = vadd.f32 %v1049, %v1098
        %1144 = vadd.xlane.f32.xlu0 %v1143
        %v1145 = vpop.xlane.xlu0 %1144
        %v1146 = vadd.f32 %v1052, %v1101
        %1147 = vadd.xlane.f32.xlu0 %v1146
        %v1148 = vpop.xlane.xlu0 %1147
        %v1149 = vadd.f32 %v1054, %v1103
        %1150 = vadd.xlane.f32.xlu0 %v1149
        %v1151 = vpop.xlane.xlu0 %1150
        %v1152 = vadd.f32 %v1057, %v1106
        %1153 = vadd.xlane.f32.xlu0 %v1152
        %v1154 = vpop.xlane.xlu0 %1153
        %v1155 = vadd.f32 %v1059, %v1108
        %1156 = vadd.xlane.f32.xlu0 %v1155
        %v1157 = vpop.xlane.xlu0 %1156
        %v1158 = vmul.f32 %v1022, %v1022
        %v1159 = vmul.f32 %v1071, %v1071
        %v1160 = vmul.f32 %v1024, %v1024
        %v1161 = vmul.f32 %v1073, %v1073
        %v1162 = vmul.f32 %v1027, %v1027
        %v1163 = vmul.f32 %v1076, %v1076
        %v1164 = vmul.f32 %v1029, %v1029
        %v1165 = vmul.f32 %v1078, %v1078
        %v1166 = vmul.f32 %v1032, %v1032
        %v1167 = vmul.f32 %v1081, %v1081
        %v1168 = vmul.f32 %v1034, %v1034
        %v1169 = vmul.f32 %v1083, %v1083
        %v1170 = vmul.f32 %v1037, %v1037
        %v1171 = vmul.f32 %v1086, %v1086
        %v1172 = vmul.f32 %v1039, %v1039
        %v1173 = vmul.f32 %v1088, %v1088
        %v1174 = vmul.f32 %v1042, %v1042
        %v1175 = vmul.f32 %v1091, %v1091
        %v1176 = vmul.f32 %v1044, %v1044
        %v1177 = vmul.f32 %v1093, %v1093
        %v1178 = vmul.f32 %v1047, %v1047
        %v1179 = vmul.f32 %v1096, %v1096
        %v1180 = vmul.f32 %v1049, %v1049
        %v1181 = vmul.f32 %v1098, %v1098
        %v1182 = vmul.f32 %v1052, %v1052
        %v1183 = vmul.f32 %v1101, %v1101
        %v1184 = vmul.f32 %v1054, %v1054
        %v1185 = vmul.f32 %v1103, %v1103
        %v1186 = vmul.f32 %v1057, %v1057
        %v1187 = vmul.f32 %v1106, %v1106
        %v1188 = vmul.f32 %v1059, %v1059
        %v1189 = vmul.f32 %v1108, %v1108
        %v1190 = vadd.f32 %v1158, %v1159
        %1191 = vadd.xlane.f32.xlu0 %v1190
        %v1192 = vpop.xlane.xlu0 %1191
        %v1193 = vadd.f32 %v1160, %v1161
        %1194 = vadd.xlane.f32.xlu0 %v1193
        %v1195 = vpop.xlane.xlu0 %1194
        %v1196 = vadd.f32 %v1162, %v1163
        %1197 = vadd.xlane.f32.xlu0 %v1196
        %v1198 = vpop.xlane.xlu0 %1197
        %v1199 = vadd.f32 %v1164, %v1165
        %1200 = vadd.xlane.f32.xlu0 %v1199
        %v1201 = vpop.xlane.xlu0 %1200
        %v1202 = vadd.f32 %v1166, %v1167
        %1203 = vadd.xlane.f32.xlu0 %v1202
        %v1204 = vpop.xlane.xlu0 %1203
        %v1205 = vadd.f32 %v1168, %v1169
        %1206 = vadd.xlane.f32.xlu0 %v1205
        %v1207 = vpop.xlane.xlu0 %1206
        %v1208 = vadd.f32 %v1170, %v1171
        %1209 = vadd.xlane.f32.xlu0 %v1208
        %v1210 = vpop.xlane.xlu0 %1209
        %v1211 = vadd.f32 %v1172, %v1173
        %1212 = vadd.xlane.f32.xlu0 %v1211
        %v1213 = vpop.xlane.xlu0 %1212
        %v1214 = vadd.f32 %v1174, %v1175
        %1215 = vadd.xlane.f32.xlu0 %v1214
        %v1216 = vpop.xlane.xlu0 %1215
        %v1217 = vadd.f32 %v1176, %v1177
        %1218 = vadd.xlane.f32.xlu0 %v1217
        %v1219 = vpop.xlane.xlu0 %1218
        %v1220 = vadd.f32 %v1178, %v1179
        %1221 = vadd.xlane.f32.xlu0 %v1220
        %v1222 = vpop.xlane.xlu0 %1221
        %v1223 = vadd.f32 %v1180, %v1181
        %1224 = vadd.xlane.f32.xlu0 %v1223
        %v1225 = vpop.xlane.xlu0 %1224
        %v1226 = vadd.f32 %v1182, %v1183
        %1227 = vadd.xlane.f32.xlu0 %v1226
        %v1228 = vpop.xlane.xlu0 %1227
        %v1229 = vadd.f32 %v1184, %v1185
        %1230 = vadd.xlane.f32.xlu0 %v1229
        %v1231 = vpop.xlane.xlu0 %1230
        %v1232 = vadd.f32 %v1186, %v1187
        %1233 = vadd.xlane.f32.xlu0 %v1232
        %v1234 = vpop.xlane.xlu0 %1233
        %v1235 = vadd.f32 %v1188, %v1189
        %1236 = vadd.xlane.f32.xlu0 %v1235
        %v1237 = vpop.xlane.xlu0 %1236
        %v1238 = vmul.f32 %v1112, 0.00390625
        %v1239 = vmul.f32 %v1115, 0.00390625
        %v1240 = vmul.f32 %v1118, 0.00390625
        %v1241 = vmul.f32 %v1121, 0.00390625
        %v1242 = vmul.f32 %v1124, 0.00390625
        %v1243 = vmul.f32 %v1127, 0.00390625
        %v1244 = vmul.f32 %v1130, 0.00390625
        %v1245 = vmul.f32 %v1133, 0.00390625
        %v1246 = vmul.f32 %v1136, 0.00390625
        %v1247 = vmul.f32 %v1139, 0.00390625
        %v1248 = vmul.f32 %v1142, 0.00390625
        %v1249 = vmul.f32 %v1145, 0.00390625
        %v1250 = vmul.f32 %v1148, 0.00390625
        %v1251 = vmul.f32 %v1151, 0.00390625
        %v1252 = vmul.f32 %v1154, 0.00390625
        %v1253 = vmul.f32 %v1157, 0.00390625
        %v1254 = vmul.f32 %v1192, 0.00390625
        %v1255 = vmul.f32 %v1195, 0.00390625
        %v1256 = vmul.f32 %v1198, 0.00390625
        %v1257 = vmul.f32 %v1201, 0.00390625
        %v1258 = vmul.f32 %v1204, 0.00390625
        %v1259 = vmul.f32 %v1207, 0.00390625
        %v1260 = vmul.f32 %v1210, 0.00390625
        %v1261 = vmul.f32 %v1213, 0.00390625
        %v1262 = vmul.f32 %v1216, 0.00390625
        %v1263 = vmul.f32 %v1219, 0.00390625
        %v1264 = vmul.f32 %v1222, 0.00390625
        %v1265 = vmul.f32 %v1225, 0.00390625
        %v1266 = vmul.f32 %v1228, 0.00390625
        %v1267 = vmul.f32 %v1231, 0.00390625
        %v1268 = vmul.f32 %v1234, 0.00390625
        %v1269 = vmul.f32 %v1237, 0.00390625
        %v1270 = vmul.f32 %v1238, %v1238
        %v1271 = vmul.f32 %v1239, %v1239
        %v1272 = vmul.f32 %v1240, %v1240
        %v1273 = vmul.f32 %v1241, %v1241
        %v1274 = vmul.f32 %v1242, %v1242
        %v1275 = vmul.f32 %v1243, %v1243
        %v1276 = vmul.f32 %v1244, %v1244
        %v1277 = vmul.f32 %v1245, %v1245
        %v1278 = vmul.f32 %v1246, %v1246
        %v1279 = vmul.f32 %v1247, %v1247
        %v1280 = vmul.f32 %v1248, %v1248
        %v1281 = vmul.f32 %v1249, %v1249
        %v1282 = vmul.f32 %v1250, %v1250
        %v1283 = vmul.f32 %v1251, %v1251
        %v1284 = vmul.f32 %v1252, %v1252
        %v1285 = vmul.f32 %v1253, %v1253
        %v1286 = vsub.f32 %v1254, %v1270
        %v1287 = vsub.f32 %v1255, %v1271
        %v1288 = vsub.f32 %v1256, %v1272
        %v1289 = vsub.f32 %v1257, %v1273
        %v1290 = vsub.f32 %v1258, %v1274
        %v1291 = vsub.f32 %v1259, %v1275
        %v1292 = vsub.f32 %v1260, %v1276
        %v1293 = vsub.f32 %v1261, %v1277
        %v1294 = vsub.f32 %v1262, %v1278
        %v1295 = vsub.f32 %v1263, %v1279
        %v1296 = vsub.f32 %v1264, %v1280
        %v1297 = vsub.f32 %v1265, %v1281
        %v1298 = vsub.f32 %v1266, %v1282
        %v1299 = vsub.f32 %v1267, %v1283
        %v1300 = vsub.f32 %v1268, %v1284
        %v1301 = vsub.f32 %v1269, %v1285
        %v1302 = vsub.f32 %v1022, %v1238
        %v1303 = vsub.f32 %v1071, %v1238
        %v1304 = vsub.f32 %v1024, %v1239
        %v1305 = vsub.f32 %v1073, %v1239
        %v1306 = vsub.f32 %v1027, %v1240
        %v1307 = vsub.f32 %v1076, %v1240
        %v1308 = vsub.f32 %v1029, %v1241
        %v1309 = vsub.f32 %v1078, %v1241
        %v1310 = vsub.f32 %v1032, %v1242
        %v1311 = vsub.f32 %v1081, %v1242
        %v1312 = vsub.f32 %v1034, %v1243
        %v1313 = vsub.f32 %v1083, %v1243
        %v1314 = vsub.f32 %v1037, %v1244
        %v1315 = vsub.f32 %v1086, %v1244
        %v1316 = vsub.f32 %v1039, %v1245
        %v1317 = vsub.f32 %v1088, %v1245
        %v1318 = vsub.f32 %v1042, %v1246
        %v1319 = vsub.f32 %v1091, %v1246
        %v1320 = vsub.f32 %v1044, %v1247
        %v1321 = vsub.f32 %v1093, %v1247
        %v1322 = vsub.f32 %v1047, %v1248
        %v1323 = vsub.f32 %v1096, %v1248
        %v1324 = vsub.f32 %v1049, %v1249
        %v1325 = vsub.f32 %v1098, %v1249
        %v1326 = vsub.f32 %v1052, %v1250
        %v1327 = vsub.f32 %v1101, %v1250
        %v1328 = vsub.f32 %v1054, %v1251
        %v1329 = vsub.f32 %v1103, %v1251
        %v1330 = vsub.f32 %v1057, %v1252
        %v1331 = vsub.f32 %v1106, %v1252
        %v1332 = vsub.f32 %v1059, %v1253
        %v1333 = vsub.f32 %v1108, %v1253
        %v1334 = vadd.f32 %v1286, 1e-05
        %v1335 = vadd.f32 %v1287, 1e-05
        %v1336 = vadd.f32 %v1288, 1e-05
        %v1337 = vadd.f32 %v1289, 1e-05
        %v1338 = vadd.f32 %v1290, 1e-05
        %v1339 = vadd.f32 %v1291, 1e-05
        %v1340 = vadd.f32 %v1292, 1e-05
        %v1341 = vadd.f32 %v1293, 1e-05
        %v1342 = vadd.f32 %v1294, 1e-05
        %v1343 = vadd.f32 %v1295, 1e-05
        %v1344 = vadd.f32 %v1296, 1e-05
        %v1345 = vadd.f32 %v1297, 1e-05
        %v1346 = vadd.f32 %v1298, 1e-05
        %v1347 = vadd.f32 %v1299, 1e-05
        %v1348 = vadd.f32 %v1300, 1e-05
        %v1349 = vadd.f32 %v1301, 1e-05
        %v1350 = vrsqrt.pop %v1334
        %v1351 = vmul.f32 %v1350, %v1334
        %v1352 = vmul.f32 %v1351, %v1350
        %v1353 = vmul.f32 0.5, %v1352
        %v1354 = vsub.f32 1.5, %v1353
        %v1355 = vmul.f32 %v1350, %v1354
        %vm1356 = vweird.f32 %v1334
        %vm1357 = vweird.f32 %v1350
        %vm1358 = vmor %vm1356, %vm1357
        %v1359 = vsel %vm1358, %v1350, %v1355
        %v1360 = vrsqrt.pop %v1335
        %v1361 = vmul.f32 %v1360, %v1335
        %v1362 = vmul.f32 %v1361, %v1360
        %v1363 = vmul.f32 0.5, %v1362
        %v1364 = vsub.f32 1.5, %v1363
        %v1365 = vmul.f32 %v1360, %v1364
        %vm1366 = vweird.f32 %v1335
        %vm1367 = vweird.f32 %v1360
        %vm1368 = vmor %vm1366, %vm1367
        %v1369 = vsel %vm1368, %v1360, %v1365
        %v1370 = vrsqrt.pop %v1336
        %v1371 = vmul.f32 %v1370, %v1336
        %v1372 = vmul.f32 %v1371, %v1370
        %v1373 = vmul.f32 0.5, %v1372
        %v1374 = vsub.f32 1.5, %v1373
        %v1375 = vmul.f32 %v1370, %v1374
        %vm1376 = vweird.f32 %v1336
        %vm1377 = vweird.f32 %v1370
        %vm1378 = vmor %vm1376, %vm1377
        %v1379 = vsel %vm1378, %v1370, %v1375
        %v1380 = vrsqrt.pop %v1337
        %v1381 = vmul.f32 %v1380, %v1337
        %v1382 = vmul.f32 %v1381, %v1380
        %v1383 = vmul.f32 0.5, %v1382
        %v1384 = vsub.f32 1.5, %v1383
        %v1385 = vmul.f32 %v1380, %v1384
        %vm1386 = vweird.f32 %v1337
        %vm1387 = vweird.f32 %v1380
        %vm1388 = vmor %vm1386, %vm1387
        %v1389 = vsel %vm1388, %v1380, %v1385
        %v1390 = vrsqrt.pop %v1338
        %v1391 = vmul.f32 %v1390, %v1338
        %v1392 = vmul.f32 %v1391, %v1390
        %v1393 = vmul.f32 0.5, %v1392
        %v1394 = vsub.f32 1.5, %v1393
        %v1395 = vmul.f32 %v1390, %v1394
        %vm1396 = vweird.f32 %v1338
        %vm1397 = vweird.f32 %v1390
        %vm1398 = vmor %vm1396, %vm1397
        %v1399 = vsel %vm1398, %v1390, %v1395
        %v1400 = vrsqrt.pop %v1339
        %v1401 = vmul.f32 %v1400, %v1339
        %v1402 = vmul.f32 %v1401, %v1400
        %v1403 = vmul.f32 0.5, %v1402
        %v1404 = vsub.f32 1.5, %v1403
        %v1405 = vmul.f32 %v1400, %v1404
        %vm1406 = vweird.f32 %v1339
        %vm1407 = vweird.f32 %v1400
        %vm1408 = vmor %vm1406, %vm1407
        %v1409 = vsel %vm1408, %v1400, %v1405
        %v1410 = vrsqrt.pop %v1340
        %v1411 = vmul.f32 %v1410, %v1340
        %v1412 = vmul.f32 %v1411, %v1410
        %v1413 = vmul.f32 0.5, %v1412
        %v1414 = vsub.f32 1.5, %v1413
        %v1415 = vmul.f32 %v1410, %v1414
        %vm1416 = vweird.f32 %v1340
        %vm1417 = vweird.f32 %v1410
        %vm1418 = vmor %vm1416, %vm1417
        %v1419 = vsel %vm1418, %v1410, %v1415
        %v1420 = vrsqrt.pop %v1341
        %v1421 = vmul.f32 %v1420, %v1341
        %v1422 = vmul.f32 %v1421, %v1420
        %v1423 = vmul.f32 0.5, %v1422
        %v1424 = vsub.f32 1.5, %v1423
        %v1425 = vmul.f32 %v1420, %v1424
        %vm1426 = vweird.f32 %v1341
        %vm1427 = vweird.f32 %v1420
        %vm1428 = vmor %vm1426, %vm1427
        %v1429 = vsel %vm1428, %v1420, %v1425
        %v1430 = vrsqrt.pop %v1342
        %v1431 = vmul.f32 %v1430, %v1342
        %v1432 = vmul.f32 %v1431, %v1430
        %v1433 = vmul.f32 0.5, %v1432
        %v1434 = vsub.f32 1.5, %v1433
        %v1435 = vmul.f32 %v1430, %v1434
        %vm1436 = vweird.f32 %v1342
        %vm1437 = vweird.f32 %v1430
        %vm1438 = vmor %vm1436, %vm1437
        %v1439 = vsel %vm1438, %v1430, %v1435
        %v1440 = vrsqrt.pop %v1343
        %v1441 = vmul.f32 %v1440, %v1343
        %v1442 = vmul.f32 %v1441, %v1440
        %v1443 = vmul.f32 0.5, %v1442
        %v1444 = vsub.f32 1.5, %v1443
        %v1445 = vmul.f32 %v1440, %v1444
        %vm1446 = vweird.f32 %v1343
        %vm1447 = vweird.f32 %v1440
        %vm1448 = vmor %vm1446, %vm1447
        %v1449 = vsel %vm1448, %v1440, %v1445
        %v1450 = vrsqrt.pop %v1344
        %v1451 = vmul.f32 %v1450, %v1344
        %v1452 = vmul.f32 %v1451, %v1450
        %v1453 = vmul.f32 0.5, %v1452
        %v1454 = vsub.f32 1.5, %v1453
        %v1455 = vmul.f32 %v1450, %v1454
        %vm1456 = vweird.f32 %v1344
        %vm1457 = vweird.f32 %v1450
        %vm1458 = vmor %vm1456, %vm1457
        %v1459 = vsel %vm1458, %v1450, %v1455
        %v1460 = vrsqrt.pop %v1345
        %v1461 = vmul.f32 %v1460, %v1345
        %v1462 = vmul.f32 %v1461, %v1460
        %v1463 = vmul.f32 0.5, %v1462
        %v1464 = vsub.f32 1.5, %v1463
        %v1465 = vmul.f32 %v1460, %v1464
        %vm1466 = vweird.f32 %v1345
        %vm1467 = vweird.f32 %v1460
        %vm1468 = vmor %vm1466, %vm1467
        %v1469 = vsel %vm1468, %v1460, %v1465
        %v1470 = vrsqrt.pop %v1346
        %v1471 = vmul.f32 %v1470, %v1346
        %v1472 = vmul.f32 %v1471, %v1470
        %v1473 = vmul.f32 0.5, %v1472
        %v1474 = vsub.f32 1.5, %v1473
        %v1475 = vmul.f32 %v1470, %v1474
        %vm1476 = vweird.f32 %v1346
        %vm1477 = vweird.f32 %v1470
        %vm1478 = vmor %vm1476, %vm1477
        %v1479 = vsel %vm1478, %v1470, %v1475
        %v1480 = vrsqrt.pop %v1347
        %v1481 = vmul.f32 %v1480, %v1347
        %v1482 = vmul.f32 %v1481, %v1480
        %v1483 = vmul.f32 0.5, %v1482
        %v1484 = vsub.f32 1.5, %v1483
        %v1485 = vmul.f32 %v1480, %v1484
        %vm1486 = vweird.f32 %v1347
        %vm1487 = vweird.f32 %v1480
        %vm1488 = vmor %vm1486, %vm1487
        %v1489 = vsel %vm1488, %v1480, %v1485
        %v1490 = vrsqrt.pop %v1348
        %v1491 = vmul.f32 %v1490, %v1348
        %v1492 = vmul.f32 %v1491, %v1490
        %v1493 = vmul.f32 0.5, %v1492
        %v1494 = vsub.f32 1.5, %v1493
        %v1495 = vmul.f32 %v1490, %v1494
        %vm1496 = vweird.f32 %v1348
        %vm1497 = vweird.f32 %v1490
        %vm1498 = vmor %vm1496, %vm1497
        %v1499 = vsel %vm1498, %v1490, %v1495
        %v1500 = vrsqrt.pop %v1349
        %v1501 = vmul.f32 %v1500, %v1349
        %v1502 = vmul.f32 %v1501, %v1500
        %v1503 = vmul.f32 0.5, %v1502
        %v1504 = vsub.f32 1.5, %v1503
        %v1505 = vmul.f32 %v1500, %v1504
        %vm1506 = vweird.f32 %v1349
        %vm1507 = vweird.f32 %v1500
        %vm1508 = vmor %vm1506, %vm1507
        %v1509 = vsel %vm1508, %v1500, %v1505
        %v1510 = vmul.f32 %v1302, %v1359
        %v1511 = vmul.f32 %v1303, %v1359
        %v1512 = vmul.f32 %v1304, %v1369
        %v1513 = vmul.f32 %v1305, %v1369
        %v1514 = vmul.f32 %v1306, %v1379
        %v1515 = vmul.f32 %v1307, %v1379
        %v1516 = vmul.f32 %v1308, %v1389
        %v1517 = vmul.f32 %v1309, %v1389
        %v1518 = vmul.f32 %v1310, %v1399
        %v1519 = vmul.f32 %v1311, %v1399
        %v1520 = vmul.f32 %v1312, %v1409
        %v1521 = vmul.f32 %v1313, %v1409
        %v1522 = vmul.f32 %v1314, %v1419
        %v1523 = vmul.f32 %v1315, %v1419
        %v1524 = vmul.f32 %v1316, %v1429
        %v1525 = vmul.f32 %v1317, %v1429
        %v1526 = vmul.f32 %v1318, %v1439
        %v1527 = vmul.f32 %v1319, %v1439
        %v1528 = vmul.f32 %v1320, %v1449
        %v1529 = vmul.f32 %v1321, %v1449
        %v1530 = vmul.f32 %v1322, %v1459
        %v1531 = vmul.f32 %v1323, %v1459
        %v1532 = vmul.f32 %v1324, %v1469
        %v1533 = vmul.f32 %v1325, %v1469
        %v1534 = vmul.f32 %v1326, %v1479
        %v1535 = vmul.f32 %v1327, %v1479
        %v1536 = vmul.f32 %v1328, %v1489
        %v1537 = vmul.f32 %v1329, %v1489
        %v1538 = vmul.f32 %v1330, %v1499
        %v1539 = vmul.f32 %v1331, %v1499
        %v1540 = vmul.f32 %v1332, %v1509
        %v1541 = vmul.f32 %v1333, %v1509
        %v1542 = vld [vmem:[%s4] sm:$0x3]
        %v1544 = vperm.slane %v1542, 0
        %v1545 = vperm.slane %v1542, 1
        %v1548 = vmul.f32 %v1510, %v1544
        %v1549 = vmul.f32 %v1511, %v1545
        %v1550 = vmul.f32 %v1512, %v1544
        %v1551 = vmul.f32 %v1513, %v1545
        %v1552 = vmul.f32 %v1514, %v1544
        %v1553 = vmul.f32 %v1515, %v1545
        %v1554 = vmul.f32 %v1516, %v1544
        %v1555 = vmul.f32 %v1517, %v1545
        %v1556 = vmul.f32 %v1518, %v1544
        %v1557 = vmul.f32 %v1519, %v1545
        %v1558 = vmul.f32 %v1520, %v1544
        %v1559 = vmul.f32 %v1521, %v1545
        %v1560 = vmul.f32 %v1522, %v1544
        %v1561 = vmul.f32 %v1523, %v1545
        %v1562 = vmul.f32 %v1524, %v1544
        %v1563 = vmul.f32 %v1525, %v1545
        %v1564 = vmul.f32 %v1526, %v1544
        %v1565 = vmul.f32 %v1527, %v1545
        %v1566 = vmul.f32 %v1528, %v1544
        %v1567 = vmul.f32 %v1529, %v1545
        %v1568 = vmul.f32 %v1530, %v1544
        %v1569 = vmul.f32 %v1531, %v1545
        %v1570 = vmul.f32 %v1532, %v1544
        %v1571 = vmul.f32 %v1533, %v1545
        %v1572 = vmul.f32 %v1534, %v1544
        %v1573 = vmul.f32 %v1535, %v1545
        %v1574 = vmul.f32 %v1536, %v1544
        %v1575 = vmul.f32 %v1537, %v1545
        %v1576 = vmul.f32 %v1538, %v1544
        %v1577 = vmul.f32 %v1539, %v1545
        %v1578 = vmul.f32 %v1540, %v1544
        %v1579 = vmul.f32 %v1541, %v1545
        %v1580 = vld [vmem:[%s5] sm:$0x3]
        %v1582 = vperm.slane %v1580, 0
        %v1583 = vperm.slane %v1580, 1
        %v1586 = vadd.f32 %v1548, %v1582
        %v1587 = vadd.f32 %v1549, %v1583
        %v1588 = vadd.f32 %v1550, %v1582
        %v1589 = vadd.f32 %v1551, %v1583
        %v1590 = vadd.f32 %v1552, %v1582
        %v1591 = vadd.f32 %v1553, %v1583
        %v1592 = vadd.f32 %v1554, %v1582
        %v1593 = vadd.f32 %v1555, %v1583
        %v1594 = vadd.f32 %v1556, %v1582
        %v1595 = vadd.f32 %v1557, %v1583
        %v1596 = vadd.f32 %v1558, %v1582
        %v1597 = vadd.f32 %v1559, %v1583
        %v1598 = vadd.f32 %v1560, %v1582
        %v1599 = vadd.f32 %v1561, %v1583
        %v1600 = vadd.f32 %v1562, %v1582
        %v1601 = vadd.f32 %v1563, %v1583
        %v1602 = vadd.f32 %v1564, %v1582
        %v1603 = vadd.f32 %v1565, %v1583
        %v1604 = vadd.f32 %v1566, %v1582
        %v1605 = vadd.f32 %v1567, %v1583
        %v1606 = vadd.f32 %v1568, %v1582
        %v1607 = vadd.f32 %v1569, %v1583
        %v1608 = vadd.f32 %v1570, %v1582
        %v1609 = vadd.f32 %v1571, %v1583
        %v1610 = vadd.f32 %v1572, %v1582
        %v1611 = vadd.f32 %v1573, %v1583
        %v1612 = vadd.f32 %v1574, %v1582
        %v1613 = vadd.f32 %v1575, %v1583
        %v1614 = vadd.f32 %v1576, %v1582
        %v1615 = vadd.f32 %v1577, %v1583
        %v1616 = vadd.f32 %v1578, %v1582
        %v1617 = vadd.f32 %v1579, %v1583
        %v1618 = vxor.u32 %v1586, 2147483648
        %v1619 = vxor.u32 %v1587, 2147483648
        %v1620 = vxor.u32 %v1588, 2147483648
        %v1621 = vxor.u32 %v1589, 2147483648
        %v1622 = vxor.u32 %v1590, 2147483648
        %v1623 = vxor.u32 %v1591, 2147483648
        %v1624 = vxor.u32 %v1592, 2147483648
        %v1625 = vxor.u32 %v1593, 2147483648
        %v1626 = vxor.u32 %v1594, 2147483648
        %v1627 = vxor.u32 %v1595, 2147483648
        %v1628 = vxor.u32 %v1596, 2147483648
        %v1629 = vxor.u32 %v1597, 2147483648
        %v1630 = vxor.u32 %v1598, 2147483648
        %v1631 = vxor.u32 %v1599, 2147483648
        %v1632 = vxor.u32 %v1600, 2147483648
        %v1633 = vxor.u32 %v1601, 2147483648
        %v1634 = vxor.u32 %v1602, 2147483648
        %v1635 = vxor.u32 %v1603, 2147483648
        %v1636 = vxor.u32 %v1604, 2147483648
        %v1637 = vxor.u32 %v1605, 2147483648
        %v1638 = vxor.u32 %v1606, 2147483648
        %v1639 = vxor.u32 %v1607, 2147483648
        %v1640 = vxor.u32 %v1608, 2147483648
        %v1641 = vxor.u32 %v1609, 2147483648
        %v1642 = vxor.u32 %v1610, 2147483648
        %v1643 = vxor.u32 %v1611, 2147483648
        %v1644 = vxor.u32 %v1612, 2147483648
        %v1645 = vxor.u32 %v1613, 2147483648
        %v1646 = vxor.u32 %v1614, 2147483648
        %v1647 = vxor.u32 %v1615, 2147483648
        %v1648 = vxor.u32 %v1616, 2147483648
        %v1649 = vxor.u32 %v1617, 2147483648
        %v1650 = vmul.f32 %v1618, 1.442695
        %v1651 = vpow.pop %v1650
        %v1652 = vmul.f32 %v1619, 1.442695
        %v1653 = vpow.pop %v1652
        %v1654 = vmul.f32 %v1620, 1.442695
        %v1655 = vpow.pop %v1654
        %v1656 = vmul.f32 %v1621, 1.442695
        %v1657 = vpow.pop %v1656
        %v1658 = vmul.f32 %v1622, 1.442695
        %v1659 = vpow.pop %v1658
        %v1660 = vmul.f32 %v1623, 1.442695
        %v1661 = vpow.pop %v1660
        %v1662 = vmul.f32 %v1624, 1.442695
        %v1663 = vpow.pop %v1662
        %v1664 = vmul.f32 %v1625, 1.442695
        %v1665 = vpow.pop %v1664
        %v1666 = vmul.f32 %v1626, 1.442695
        %v1667 = vpow.pop %v1666
        %v1668 = vmul.f32 %v1627, 1.442695
        %v1669 = vpow.pop %v1668
        %v1670 = vmul.f32 %v1628, 1.442695
        %v1671 = vpow.pop %v1670
        %v1672 = vmul.f32 %v1629, 1.442695
        %v1673 = vpow.pop %v1672
        %v1674 = vmul.f32 %v1630, 1.442695
        %v1675 = vpow.pop %v1674
        %v1676 = vmul.f32 %v1631, 1.442695
        %v1677 = vpow.pop %v1676
        %v1678 = vmul.f32 %v1632, 1.442695
        %v1679 = vpow.pop %v1678
        %v1680 = vmul.f32 %v1633, 1.442695
        %v1681 = vpow.pop %v1680
        %v1682 = vmul.f32 %v1634, 1.442695
        %v1683 = vpow.pop %v1682
        %v1684 = vmul.f32 %v1635, 1.442695
        %v1685 = vpow.pop %v1684
        %v1686 = vmul.f32 %v1636, 1.442695
        %v1687 = vpow.pop %v1686
        %v1688 = vmul.f32 %v1637, 1.442695
        %v1689 = vpow.pop %v1688
        %v1690 = vmul.f32 %v1638, 1.442695
        %v1691 = vpow.pop %v1690
        %v1692 = vmul.f32 %v1639, 1.442695
        %v1693 = vpow.pop %v1692
        %v1694 = vmul.f32 %v1640, 1.442695
        %v1695 = vpow.pop %v1694
        %v1696 = vmul.f32 %v1641, 1.442695
        %v1697 = vpow.pop %v1696
        %v1698 = vmul.f32 %v1642, 1.442695
        %v1699 = vpow.pop %v1698
        %v1700 = vmul.f32 %v1643, 1.442695
        %v1701 = vpow.pop %v1700
        %v1702 = vmul.f32 %v1644, 1.442695
        %v1703 = vpow.pop %v1702
        %v1704 = vmul.f32 %v1645, 1.442695
        %v1705 = vpow.pop %v1704
        %v1706 = vmul.f32 %v1646, 1.442695
        %v1707 = vpow.pop %v1706
        %v1708 = vmul.f32 %v1647, 1.442695
        %v1709 = vpow.pop %v1708
        %v1710 = vmul.f32 %v1648, 1.442695
        %v1711 = vpow.pop %v1710
        %v1712 = vmul.f32 %v1649, 1.442695
        %v1713 = vpow.pop %v1712
        %v1714 = vadd.f32 %v1651, 1.0
        %v1715 = vadd.f32 %v1653, 1.0
        %v1716 = vadd.f32 %v1655, 1.0
        %v1717 = vadd.f32 %v1657, 1.0
        %v1718 = vadd.f32 %v1659, 1.0
        %v1719 = vadd.f32 %v1661, 1.0
        %v1720 = vadd.f32 %v1663, 1.0
        %v1721 = vadd.f32 %v1665, 1.0
        %v1722 = vadd.f32 %v1667, 1.0
        %v1723 = vadd.f32 %v1669, 1.0
        %v1724 = vadd.f32 %v1671, 1.0
        %v1725 = vadd.f32 %v1673, 1.0
        %v1726 = vadd.f32 %v1675, 1.0
        %v1727 = vadd.f32 %v1677, 1.0
        %v1728 = vadd.f32 %v1679, 1.0
        %v1729 = vadd.f32 %v1681, 1.0
        %v1730 = vadd.f32 %v1683, 1.0
        %v1731 = vadd.f32 %v1685, 1.0
        %v1732 = vadd.f32 %v1687, 1.0
        %v1733 = vadd.f32 %v1689, 1.0
        %v1734 = vadd.f32 %v1691, 1.0
        %v1735 = vadd.f32 %v1693, 1.0
        %v1736 = vadd.f32 %v1695, 1.0
        %v1737 = vadd.f32 %v1697, 1.0
        %v1738 = vadd.f32 %v1699, 1.0
        %v1739 = vadd.f32 %v1701, 1.0
        %v1740 = vadd.f32 %v1703, 1.0
        %v1741 = vadd.f32 %v1705, 1.0
        %v1742 = vadd.f32 %v1707, 1.0
        %v1743 = vadd.f32 %v1709, 1.0
        %v1744 = vadd.f32 %v1711, 1.0
        %v1745 = vadd.f32 %v1713, 1.0
        %v1746 = vrcp.pop %v1714
        %v1747 = vmul.f32 %v1714, %v1746
        %v1748 = vsub.f32 1.0, %v1747
        %v1749 = vmul.f32 %v1746, %v1748
        %v1750 = vadd.f32 %v1746, %v1749
        %vm1751 = vweird.f32 %v1714
        %vm1752 = vweird.f32 %v1746
        %vm1753 = vmor %vm1751, %vm1752
        %v1754 = vsel %vm1753, %v1746, %v1750
        %v1755 = vand.u32 2147483647, %v1714
        %vm1756 = vcmp.eq.f32.partialorder %v1755, 8.507059e+37
        %v1757 = vand.u32 %v1714, 2147483648
        %v1758 = vor.u32 1.1754944e-38, %v1757
        %v1759 = vsel %vm1756, %v1758, %v1754
        %v1760 = vmul.f32 1.0, %v1759
        %v1761 = vrcp.pop %v1715
        %v1762 = vmul.f32 %v1715, %v1761
        %v1763 = vsub.f32 1.0, %v1762
        %v1764 = vmul.f32 %v1761, %v1763
        %v1765 = vadd.f32 %v1761, %v1764
        %vm1766 = vweird.f32 %v1715
        %vm1767 = vweird.f32 %v1761
        %vm1768 = vmor %vm1766, %vm1767
        %v1769 = vsel %vm1768, %v1761, %v1765
        %v1770 = vand.u32 2147483647, %v1715
        %vm1771 = vcmp.eq.f32.partialorder %v1770, 8.507059e+37
        %v1772 = vand.u32 %v1715, 2147483648
        %v1773 = vor.u32 1.1754944e-38, %v1772
        %v1774 = vsel %vm1771, %v1773, %v1769
        %v1775 = vmul.f32 1.0, %v1774
        %v1776 = vrcp.pop %v1716
        %v1777 = vmul.f32 %v1716, %v1776
        %v1778 = vsub.f32 1.0, %v1777
        %v1779 = vmul.f32 %v1776, %v1778
        %v1780 = vadd.f32 %v1776, %v1779
        %vm1781 = vweird.f32 %v1716
        %vm1782 = vweird.f32 %v1776
        %vm1783 = vmor %vm1781, %vm1782
        %v1784 = vsel %vm1783, %v1776, %v1780
        %v1785 = vand.u32 2147483647, %v1716
        %vm1786 = vcmp.eq.f32.partialorder %v1785, 8.507059e+37
        %v1787 = vand.u32 %v1716, 2147483648
        %v1788 = vor.u32 1.1754944e-38, %v1787
        %v1789 = vsel %vm1786, %v1788, %v1784
        %v1790 = vmul.f32 1.0, %v1789
        %v1791 = vrcp.pop %v1717
        %v1792 = vmul.f32 %v1717, %v1791
        %v1793 = vsub.f32 1.0, %v1792
        %v1794 = vmul.f32 %v1791, %v1793
        %v1795 = vadd.f32 %v1791, %v1794
        %vm1796 = vweird.f32 %v1717
        %vm1797 = vweird.f32 %v1791
        %vm1798 = vmor %vm1796, %vm1797
        %v1799 = vsel %vm1798, %v1791, %v1795
        %v1800 = vand.u32 2147483647, %v1717
        %vm1801 = vcmp.eq.f32.partialorder %v1800, 8.507059e+37
        %v1802 = vand.u32 %v1717, 2147483648
        %v1803 = vor.u32 1.1754944e-38, %v1802
        %v1804 = vsel %vm1801, %v1803, %v1799
        %v1805 = vmul.f32 1.0, %v1804
        %v1806 = vrcp.pop %v1718
        %v1807 = vmul.f32 %v1718, %v1806
        %v1808 = vsub.f32 1.0, %v1807
        %v1809 = vmul.f32 %v1806, %v1808
        %v1810 = vadd.f32 %v1806, %v1809
        %vm1811 = vweird.f32 %v1718
        %vm1812 = vweird.f32 %v1806
        %vm1813 = vmor %vm1811, %vm1812
        %v1814 = vsel %vm1813, %v1806, %v1810
        %v1815 = vand.u32 2147483647, %v1718
        %vm1816 = vcmp.eq.f32.partialorder %v1815, 8.507059e+37
        %v1817 = vand.u32 %v1718, 2147483648
        %v1818 = vor.u32 1.1754944e-38, %v1817
        %v1819 = vsel %vm1816, %v1818, %v1814
        %v1820 = vmul.f32 1.0, %v1819
        %v1821 = vrcp.pop %v1719
        %v1822 = vmul.f32 %v1719, %v1821
        %v1823 = vsub.f32 1.0, %v1822
        %v1824 = vmul.f32 %v1821, %v1823
        %v1825 = vadd.f32 %v1821, %v1824
        %vm1826 = vweird.f32 %v1719
        %vm1827 = vweird.f32 %v1821
        %vm1828 = vmor %vm1826, %vm1827
        %v1829 = vsel %vm1828, %v1821, %v1825
        %v1830 = vand.u32 2147483647, %v1719
        %vm1831 = vcmp.eq.f32.partialorder %v1830, 8.507059e+37
        %v1832 = vand.u32 %v1719, 2147483648
        %v1833 = vor.u32 1.1754944e-38, %v1832
        %v1834 = vsel %vm1831, %v1833, %v1829
        %v1835 = vmul.f32 1.0, %v1834
        %v1836 = vrcp.pop %v1720
        %v1837 = vmul.f32 %v1720, %v1836
        %v1838 = vsub.f32 1.0, %v1837
        %v1839 = vmul.f32 %v1836, %v1838
        %v1840 = vadd.f32 %v1836, %v1839
        %vm1841 = vweird.f32 %v1720
        %vm1842 = vweird.f32 %v1836
        %vm1843 = vmor %vm1841, %vm1842
        %v1844 = vsel %vm1843, %v1836, %v1840
        %v1845 = vand.u32 2147483647, %v1720
        %vm1846 = vcmp.eq.f32.partialorder %v1845, 8.507059e+37
        %v1847 = vand.u32 %v1720, 2147483648
        %v1848 = vor.u32 1.1754944e-38, %v1847
        %v1849 = vsel %vm1846, %v1848, %v1844
        %v1850 = vmul.f32 1.0, %v1849
        %v1851 = vrcp.pop %v1721
        %v1852 = vmul.f32 %v1721, %v1851
        %v1853 = vsub.f32 1.0, %v1852
        %v1854 = vmul.f32 %v1851, %v1853
        %v1855 = vadd.f32 %v1851, %v1854
        %vm1856 = vweird.f32 %v1721
        %vm1857 = vweird.f32 %v1851
        %vm1858 = vmor %vm1856, %vm1857
        %v1859 = vsel %vm1858, %v1851, %v1855
        %v1860 = vand.u32 2147483647, %v1721
        %vm1861 = vcmp.eq.f32.partialorder %v1860, 8.507059e+37
        %v1862 = vand.u32 %v1721, 2147483648
        %v1863 = vor.u32 1.1754944e-38, %v1862
        %v1864 = vsel %vm1861, %v1863, %v1859
        %v1865 = vmul.f32 1.0, %v1864
        %v1866 = vrcp.pop %v1722
        %v1867 = vmul.f32 %v1722, %v1866
        %v1868 = vsub.f32 1.0, %v1867
        %v1869 = vmul.f32 %v1866, %v1868
        %v1870 = vadd.f32 %v1866, %v1869
        %vm1871 = vweird.f32 %v1722
        %vm1872 = vweird.f32 %v1866
        %vm1873 = vmor %vm1871, %vm1872
        %v1874 = vsel %vm1873, %v1866, %v1870
        %v1875 = vand.u32 2147483647, %v1722
        %vm1876 = vcmp.eq.f32.partialorder %v1875, 8.507059e+37
        %v1877 = vand.u32 %v1722, 2147483648
        %v1878 = vor.u32 1.1754944e-38, %v1877
        %v1879 = vsel %vm1876, %v1878, %v1874
        %v1880 = vmul.f32 1.0, %v1879
        %v1881 = vrcp.pop %v1723
        %v1882 = vmul.f32 %v1723, %v1881
        %v1883 = vsub.f32 1.0, %v1882
        %v1884 = vmul.f32 %v1881, %v1883
        %v1885 = vadd.f32 %v1881, %v1884
        %vm1886 = vweird.f32 %v1723
        %vm1887 = vweird.f32 %v1881
        %vm1888 = vmor %vm1886, %vm1887
        %v1889 = vsel %vm1888, %v1881, %v1885
        %v1890 = vand.u32 2147483647, %v1723
        %vm1891 = vcmp.eq.f32.partialorder %v1890, 8.507059e+37
        %v1892 = vand.u32 %v1723, 2147483648
        %v1893 = vor.u32 1.1754944e-38, %v1892
        %v1894 = vsel %vm1891, %v1893, %v1889
        %v1895 = vmul.f32 1.0, %v1894
        %v1896 = vrcp.pop %v1724
        %v1897 = vmul.f32 %v1724, %v1896
        %v1898 = vsub.f32 1.0, %v1897
        %v1899 = vmul.f32 %v1896, %v1898
        %v1900 = vadd.f32 %v1896, %v1899
        %vm1901 = vweird.f32 %v1724
        %vm1902 = vweird.f32 %v1896
        %vm1903 = vmor %vm1901, %vm1902
        %v1904 = vsel %vm1903, %v1896, %v1900
        %v1905 = vand.u32 2147483647, %v1724
        %vm1906 = vcmp.eq.f32.partialorder %v1905, 8.507059e+37
        %v1907 = vand.u32 %v1724, 2147483648
        %v1908 = vor.u32 1.1754944e-38, %v1907
        %v1909 = vsel %vm1906, %v1908, %v1904
        %v1910 = vmul.f32 1.0, %v1909
        %v1911 = vrcp.pop %v1725
        %v1912 = vmul.f32 %v1725, %v1911
        %v1913 = vsub.f32 1.0, %v1912
        %v1914 = vmul.f32 %v1911, %v1913
        %v1915 = vadd.f32 %v1911, %v1914
        %vm1916 = vweird.f32 %v1725
        %vm1917 = vweird.f32 %v1911
        %vm1918 = vmor %vm1916, %vm1917
        %v1919 = vsel %vm1918, %v1911, %v1915
        %v1920 = vand.u32 2147483647, %v1725
        %vm1921 = vcmp.eq.f32.partialorder %v1920, 8.507059e+37
        %v1922 = vand.u32 %v1725, 2147483648
        %v1923 = vor.u32 1.1754944e-38, %v1922
        %v1924 = vsel %vm1921, %v1923, %v1919
        %v1925 = vmul.f32 1.0, %v1924
        %v1926 = vrcp.pop %v1726
        %v1927 = vmul.f32 %v1726, %v1926
        %v1928 = vsub.f32 1.0, %v1927
        %v1929 = vmul.f32 %v1926, %v1928
        %v1930 = vadd.f32 %v1926, %v1929
        %vm1931 = vweird.f32 %v1726
        %vm1932 = vweird.f32 %v1926
        %vm1933 = vmor %vm1931, %vm1932
        %v1934 = vsel %vm1933, %v1926, %v1930
        %v1935 = vand.u32 2147483647, %v1726
        %vm1936 = vcmp.eq.f32.partialorder %v1935, 8.507059e+37
        %v1937 = vand.u32 %v1726, 2147483648
        %v1938 = vor.u32 1.1754944e-38, %v1937
        %v1939 = vsel %vm1936, %v1938, %v1934
        %v1940 = vmul.f32 1.0, %v1939
        %v1941 = vrcp.pop %v1727
        %v1942 = vmul.f32 %v1727, %v1941
        %v1943 = vsub.f32 1.0, %v1942
        %v1944 = vmul.f32 %v1941, %v1943
        %v1945 = vadd.f32 %v1941, %v1944
        %vm1946 = vweird.f32 %v1727
        %vm1947 = vweird.f32 %v1941
        %vm1948 = vmor %vm1946, %vm1947
        %v1949 = vsel %vm1948, %v1941, %v1945
        %v1950 = vand.u32 2147483647, %v1727
        %vm1951 = vcmp.eq.f32.partialorder %v1950, 8.507059e+37
        %v1952 = vand.u32 %v1727, 2147483648
        %v1953 = vor.u32 1.1754944e-38, %v1952
        %v1954 = vsel %vm1951, %v1953, %v1949
        %v1955 = vmul.f32 1.0, %v1954
        %v1956 = vrcp.pop %v1728
        %v1957 = vmul.f32 %v1728, %v1956
        %v1958 = vsub.f32 1.0, %v1957
        %v1959 = vmul.f32 %v1956, %v1958
        %v1960 = vadd.f32 %v1956, %v1959
        %vm1961 = vweird.f32 %v1728
        %vm1962 = vweird.f32 %v1956
        %vm1963 = vmor %vm1961, %vm1962
        %v1964 = vsel %vm1963, %v1956, %v1960
        %v1965 = vand.u32 2147483647, %v1728
        %vm1966 = vcmp.eq.f32.partialorder %v1965, 8.507059e+37
        %v1967 = vand.u32 %v1728, 2147483648
        %v1968 = vor.u32 1.1754944e-38, %v1967
        %v1969 = vsel %vm1966, %v1968, %v1964
        %v1970 = vmul.f32 1.0, %v1969
        %v1971 = vrcp.pop %v1729
        %v1972 = vmul.f32 %v1729, %v1971
        %v1973 = vsub.f32 1.0, %v1972
        %v1974 = vmul.f32 %v1971, %v1973
        %v1975 = vadd.f32 %v1971, %v1974
        %vm1976 = vweird.f32 %v1729
        %vm1977 = vweird.f32 %v1971
        %vm1978 = vmor %vm1976, %vm1977
        %v1979 = vsel %vm1978, %v1971, %v1975
        %v1980 = vand.u32 2147483647, %v1729
        %vm1981 = vcmp.eq.f32.partialorder %v1980, 8.507059e+37
        %v1982 = vand.u32 %v1729, 2147483648
        %v1983 = vor.u32 1.1754944e-38, %v1982
        %v1984 = vsel %vm1981, %v1983, %v1979
        %v1985 = vmul.f32 1.0, %v1984
        %v1986 = vrcp.pop %v1730
        %v1987 = vmul.f32 %v1730, %v1986
        %v1988 = vsub.f32 1.0, %v1987
        %v1989 = vmul.f32 %v1986, %v1988
        %v1990 = vadd.f32 %v1986, %v1989
        %vm1991 = vweird.f32 %v1730
        %vm1992 = vweird.f32 %v1986
        %vm1993 = vmor %vm1991, %vm1992
        %v1994 = vsel %vm1993, %v1986, %v1990
        %v1995 = vand.u32 2147483647, %v1730
        %vm1996 = vcmp.eq.f32.partialorder %v1995, 8.507059e+37
        %v1997 = vand.u32 %v1730, 2147483648
        %v1998 = vor.u32 1.1754944e-38, %v1997
        %v1999 = vsel %vm1996, %v1998, %v1994
        %v2000 = vmul.f32 1.0, %v1999
        %v2001 = vrcp.pop %v1731
        %v2002 = vmul.f32 %v1731, %v2001
        %v2003 = vsub.f32 1.0, %v2002
        %v2004 = vmul.f32 %v2001, %v2003
        %v2005 = vadd.f32 %v2001, %v2004
        %vm2006 = vweird.f32 %v1731
        %vm2007 = vweird.f32 %v2001
        %vm2008 = vmor %vm2006, %vm2007
        %v2009 = vsel %vm2008, %v2001, %v2005
        %v2010 = vand.u32 2147483647, %v1731
        %vm2011 = vcmp.eq.f32.partialorder %v2010, 8.507059e+37
        %v2012 = vand.u32 %v1731, 2147483648
        %v2013 = vor.u32 1.1754944e-38, %v2012
        %v2014 = vsel %vm2011, %v2013, %v2009
        %v2015 = vmul.f32 1.0, %v2014
        %v2016 = vrcp.pop %v1732
        %v2017 = vmul.f32 %v1732, %v2016
        %v2018 = vsub.f32 1.0, %v2017
        %v2019 = vmul.f32 %v2016, %v2018
        %v2020 = vadd.f32 %v2016, %v2019
        %vm2021 = vweird.f32 %v1732
        %vm2022 = vweird.f32 %v2016
        %vm2023 = vmor %vm2021, %vm2022
        %v2024 = vsel %vm2023, %v2016, %v2020
        %v2025 = vand.u32 2147483647, %v1732
        %vm2026 = vcmp.eq.f32.partialorder %v2025, 8.507059e+37
        %v2027 = vand.u32 %v1732, 2147483648
        %v2028 = vor.u32 1.1754944e-38, %v2027
        %v2029 = vsel %vm2026, %v2028, %v2024
        %v2030 = vmul.f32 1.0, %v2029
        %v2031 = vrcp.pop %v1733
        %v2032 = vmul.f32 %v1733, %v2031
        %v2033 = vsub.f32 1.0, %v2032
        %v2034 = vmul.f32 %v2031, %v2033
        %v2035 = vadd.f32 %v2031, %v2034
        %vm2036 = vweird.f32 %v1733
        %vm2037 = vweird.f32 %v2031
        %vm2038 = vmor %vm2036, %vm2037
        %v2039 = vsel %vm2038, %v2031, %v2035
        %v2040 = vand.u32 2147483647, %v1733
        %vm2041 = vcmp.eq.f32.partialorder %v2040, 8.507059e+37
        %v2042 = vand.u32 %v1733, 2147483648
        %v2043 = vor.u32 1.1754944e-38, %v2042
        %v2044 = vsel %vm2041, %v2043, %v2039
        %v2045 = vmul.f32 1.0, %v2044
        %v2046 = vrcp.pop %v1734
        %v2047 = vmul.f32 %v1734, %v2046
        %v2048 = vsub.f32 1.0, %v2047
        %v2049 = vmul.f32 %v2046, %v2048
        %v2050 = vadd.f32 %v2046, %v2049
        %vm2051 = vweird.f32 %v1734
        %vm2052 = vweird.f32 %v2046
        %vm2053 = vmor %vm2051, %vm2052
        %v2054 = vsel %vm2053, %v2046, %v2050
        %v2055 = vand.u32 2147483647, %v1734
        %vm2056 = vcmp.eq.f32.partialorder %v2055, 8.507059e+37
        %v2057 = vand.u32 %v1734, 2147483648
        %v2058 = vor.u32 1.1754944e-38, %v2057
        %v2059 = vsel %vm2056, %v2058, %v2054
        %v2060 = vmul.f32 1.0, %v2059
        %v2061 = vrcp.pop %v1735
        %v2062 = vmul.f32 %v1735, %v2061
        %v2063 = vsub.f32 1.0, %v2062
        %v2064 = vmul.f32 %v2061, %v2063
        %v2065 = vadd.f32 %v2061, %v2064
        %vm2066 = vweird.f32 %v1735
        %vm2067 = vweird.f32 %v2061
        %vm2068 = vmor %vm2066, %vm2067
        %v2069 = vsel %vm2068, %v2061, %v2065
        %v2070 = vand.u32 2147483647, %v1735
        %vm2071 = vcmp.eq.f32.partialorder %v2070, 8.507059e+37
        %v2072 = vand.u32 %v1735, 2147483648
        %v2073 = vor.u32 1.1754944e-38, %v2072
        %v2074 = vsel %vm2071, %v2073, %v2069
        %v2075 = vmul.f32 1.0, %v2074
        %v2076 = vrcp.pop %v1736
        %v2077 = vmul.f32 %v1736, %v2076
        %v2078 = vsub.f32 1.0, %v2077
        %v2079 = vmul.f32 %v2076, %v2078
        %v2080 = vadd.f32 %v2076, %v2079
        %vm2081 = vweird.f32 %v1736
        %vm2082 = vweird.f32 %v2076
        %vm2083 = vmor %vm2081, %vm2082
        %v2084 = vsel %vm2083, %v2076, %v2080
        %v2085 = vand.u32 2147483647, %v1736
        %vm2086 = vcmp.eq.f32.partialorder %v2085, 8.507059e+37
        %v2087 = vand.u32 %v1736, 2147483648
        %v2088 = vor.u32 1.1754944e-38, %v2087
        %v2089 = vsel %vm2086, %v2088, %v2084
        %v2090 = vmul.f32 1.0, %v2089
        %v2091 = vrcp.pop %v1737
        %v2092 = vmul.f32 %v1737, %v2091
        %v2093 = vsub.f32 1.0, %v2092
        %v2094 = vmul.f32 %v2091, %v2093
        %v2095 = vadd.f32 %v2091, %v2094
        %vm2096 = vweird.f32 %v1737
        %vm2097 = vweird.f32 %v2091
        %vm2098 = vmor %vm2096, %vm2097
        %v2099 = vsel %vm2098, %v2091, %v2095
        %v2100 = vand.u32 2147483647, %v1737
        %vm2101 = vcmp.eq.f32.partialorder %v2100, 8.507059e+37
        %v2102 = vand.u32 %v1737, 2147483648
        %v2103 = vor.u32 1.1754944e-38, %v2102
        %v2104 = vsel %vm2101, %v2103, %v2099
        %v2105 = vmul.f32 1.0, %v2104
        %v2106 = vrcp.pop %v1738
        %v2107 = vmul.f32 %v1738, %v2106
        %v2108 = vsub.f32 1.0, %v2107
        %v2109 = vmul.f32 %v2106, %v2108
        %v2110 = vadd.f32 %v2106, %v2109
        %vm2111 = vweird.f32 %v1738
        %vm2112 = vweird.f32 %v2106
        %vm2113 = vmor %vm2111, %vm2112
        %v2114 = vsel %vm2113, %v2106, %v2110
        %v2115 = vand.u32 2147483647, %v1738
        %vm2116 = vcmp.eq.f32.partialorder %v2115, 8.507059e+37
        %v2117 = vand.u32 %v1738, 2147483648
        %v2118 = vor.u32 1.1754944e-38, %v2117
        %v2119 = vsel %vm2116, %v2118, %v2114
        %v2120 = vmul.f32 1.0, %v2119
        %v2121 = vrcp.pop %v1739
        %v2122 = vmul.f32 %v1739, %v2121
        %v2123 = vsub.f32 1.0, %v2122
        %v2124 = vmul.f32 %v2121, %v2123
        %v2125 = vadd.f32 %v2121, %v2124
        %vm2126 = vweird.f32 %v1739
        %vm2127 = vweird.f32 %v2121
        %vm2128 = vmor %vm2126, %vm2127
        %v2129 = vsel %vm2128, %v2121, %v2125
        %v2130 = vand.u32 2147483647, %v1739
        %vm2131 = vcmp.eq.f32.partialorder %v2130, 8.507059e+37
        %v2132 = vand.u32 %v1739, 2147483648
        %v2133 = vor.u32 1.1754944e-38, %v2132
        %v2134 = vsel %vm2131, %v2133, %v2129
        %v2135 = vmul.f32 1.0, %v2134
        %v2136 = vrcp.pop %v1740
        %v2137 = vmul.f32 %v1740, %v2136
        %v2138 = vsub.f32 1.0, %v2137
        %v2139 = vmul.f32 %v2136, %v2138
        %v2140 = vadd.f32 %v2136, %v2139
        %vm2141 = vweird.f32 %v1740
        %vm2142 = vweird.f32 %v2136
        %vm2143 = vmor %vm2141, %vm2142
        %v2144 = vsel %vm2143, %v2136, %v2140
        %v2145 = vand.u32 2147483647, %v1740
        %vm2146 = vcmp.eq.f32.partialorder %v2145, 8.507059e+37
        %v2147 = vand.u32 %v1740, 2147483648
        %v2148 = vor.u32 1.1754944e-38, %v2147
        %v2149 = vsel %vm2146, %v2148, %v2144
        %v2150 = vmul.f32 1.0, %v2149
        %v2151 = vrcp.pop %v1741
        %v2152 = vmul.f32 %v1741, %v2151
        %v2153 = vsub.f32 1.0, %v2152
        %v2154 = vmul.f32 %v2151, %v2153
        %v2155 = vadd.f32 %v2151, %v2154
        %vm2156 = vweird.f32 %v1741
        %vm2157 = vweird.f32 %v2151
        %vm2158 = vmor %vm2156, %vm2157
        %v2159 = vsel %vm2158, %v2151, %v2155
        %v2160 = vand.u32 2147483647, %v1741
        %vm2161 = vcmp.eq.f32.partialorder %v2160, 8.507059e+37
        %v2162 = vand.u32 %v1741, 2147483648
        %v2163 = vor.u32 1.1754944e-38, %v2162
        %v2164 = vsel %vm2161, %v2163, %v2159
        %v2165 = vmul.f32 1.0, %v2164
        %v2166 = vrcp.pop %v1742
        %v2167 = vmul.f32 %v1742, %v2166
        %v2168 = vsub.f32 1.0, %v2167
        %v2169 = vmul.f32 %v2166, %v2168
        %v2170 = vadd.f32 %v2166, %v2169
        %vm2171 = vweird.f32 %v1742
        %vm2172 = vweird.f32 %v2166
        %vm2173 = vmor %vm2171, %vm2172
        %v2174 = vsel %vm2173, %v2166, %v2170
        %v2175 = vand.u32 2147483647, %v1742
        %vm2176 = vcmp.eq.f32.partialorder %v2175, 8.507059e+37
        %v2177 = vand.u32 %v1742, 2147483648
        %v2178 = vor.u32 1.1754944e-38, %v2177
        %v2179 = vsel %vm2176, %v2178, %v2174
        %v2180 = vmul.f32 1.0, %v2179
        %v2181 = vrcp.pop %v1743
        %v2182 = vmul.f32 %v1743, %v2181
        %v2183 = vsub.f32 1.0, %v2182
        %v2184 = vmul.f32 %v2181, %v2183
        %v2185 = vadd.f32 %v2181, %v2184
        %vm2186 = vweird.f32 %v1743
        %vm2187 = vweird.f32 %v2181
        %vm2188 = vmor %vm2186, %vm2187
        %v2189 = vsel %vm2188, %v2181, %v2185
        %v2190 = vand.u32 2147483647, %v1743
        %vm2191 = vcmp.eq.f32.partialorder %v2190, 8.507059e+37
        %v2192 = vand.u32 %v1743, 2147483648
        %v2193 = vor.u32 1.1754944e-38, %v2192
        %v2194 = vsel %vm2191, %v2193, %v2189
        %v2195 = vmul.f32 1.0, %v2194
        %v2196 = vrcp.pop %v1744
        %v2197 = vmul.f32 %v1744, %v2196
        %v2198 = vsub.f32 1.0, %v2197
        %v2199 = vmul.f32 %v2196, %v2198
        %v2200 = vadd.f32 %v2196, %v2199
        %vm2201 = vweird.f32 %v1744
        %vm2202 = vweird.f32 %v2196
        %vm2203 = vmor %vm2201, %vm2202
        %v2204 = vsel %vm2203, %v2196, %v2200
        %v2205 = vand.u32 2147483647, %v1744
        %vm2206 = vcmp.eq.f32.partialorder %v2205, 8.507059e+37
        %v2207 = vand.u32 %v1744, 2147483648
        %v2208 = vor.u32 1.1754944e-38, %v2207
        %v2209 = vsel %vm2206, %v2208, %v2204
        %v2210 = vmul.f32 1.0, %v2209
        %v2211 = vrcp.pop %v1745
        %v2212 = vmul.f32 %v1745, %v2211
        %v2213 = vsub.f32 1.0, %v2212
        %v2214 = vmul.f32 %v2211, %v2213
        %v2215 = vadd.f32 %v2211, %v2214
        %vm2216 = vweird.f32 %v1745
        %vm2217 = vweird.f32 %v2211
        %vm2218 = vmor %vm2216, %vm2217
        %v2219 = vsel %vm2218, %v2211, %v2215
        %v2220 = vand.u32 2147483647, %v1745
        %vm2221 = vcmp.eq.f32.partialorder %v2220, 8.507059e+37
        %v2222 = vand.u32 %v1745, 2147483648
        %v2223 = vor.u32 1.1754944e-38, %v2222
        %v2224 = vsel %vm2221, %v2223, %v2219
        %v2225 = vmul.f32 1.0, %v2224
        %v2226 = vmul.f32 %v1586, %v1760
        %v2227 = vmul.f32 %v1587, %v1775
        %v2228 = vmul.f32 %v1588, %v1790
        %v2229 = vmul.f32 %v1589, %v1805
        %v2230 = vmul.f32 %v1590, %v1820
        %v2231 = vmul.f32 %v1591, %v1835
        %v2232 = vmul.f32 %v1592, %v1850
        %v2233 = vmul.f32 %v1593, %v1865
        %v2234 = vmul.f32 %v1594, %v1880
        %v2235 = vmul.f32 %v1595, %v1895
        %v2236 = vmul.f32 %v1596, %v1910
        %v2237 = vmul.f32 %v1597, %v1925
        %v2238 = vmul.f32 %v1598, %v1940
        %v2239 = vmul.f32 %v1599, %v1955
        %v2240 = vmul.f32 %v1600, %v1970
        %v2241 = vmul.f32 %v1601, %v1985
        %v2242 = vmul.f32 %v1602, %v2000
        %v2243 = vmul.f32 %v1603, %v2015
        %v2244 = vmul.f32 %v1604, %v2030
        %v2245 = vmul.f32 %v1605, %v2045
        %v2246 = vmul.f32 %v1606, %v2060
        %v2247 = vmul.f32 %v1607, %v2075
        %v2248 = vmul.f32 %v1608, %v2090
        %v2249 = vmul.f32 %v1609, %v2105
        %v2250 = vmul.f32 %v1610, %v2120
        %v2251 = vmul.f32 %v1611, %v2135
        %v2252 = vmul.f32 %v1612, %v2150
        %v2253 = vmul.f32 %v1613, %v2165
        %v2254 = vmul.f32 %v1614, %v2180
        %v2255 = vmul.f32 %v1615, %v2195
        %v2256 = vmul.f32 %v1616, %v2210
        %v2257 = vmul.f32 %v1617, %v2225
        %v2258 = vpack.c.bf16 %v2228, %v2226
        %v2259 = vpack.c.bf16 %v2229, %v2227
        %v2260 = vpack.c.bf16 %v2232, %v2230
        %v2261 = vpack.c.bf16 %v2233, %v2231
        %v2262 = vpack.c.bf16 %v2236, %v2234
        %v2263 = vpack.c.bf16 %v2237, %v2235
        %v2264 = vpack.c.bf16 %v2240, %v2238
        %v2265 = vpack.c.bf16 %v2241, %v2239
        %v2266 = vpack.c.bf16 %v2244, %v2242
        %v2267 = vpack.c.bf16 %v2245, %v2243
        %v2268 = vpack.c.bf16 %v2248, %v2246
        %v2269 = vpack.c.bf16 %v2249, %v2247
        %v2270 = vpack.c.bf16 %v2252, %v2250
        %v2271 = vpack.c.bf16 %v2253, %v2251
        %v2272 = vpack.c.bf16 %v2256, %v2254
        %v2273 = vpack.c.bf16 %v2257, %v2255
        %v2274 = vld [vmem:[%s6] sm:$0xff]
        %v2275 = vld [vmem:[%s6 + $0x8] sm:$0xff]
        %v2276 = vld [vmem:[%s6 + $0x10] sm:$0xff]
        %v2277 = vld [vmem:[%s6 + $0x18] sm:$0xff]
        %v2278 = vld [vmem:[%s6 + $0x20] sm:$0xff]
        %v2279 = vld [vmem:[%s6 + $0x28] sm:$0xff]
        %v2280 = vld [vmem:[%s6 + $0x30] sm:$0xff]
        %v2281 = vld [vmem:[%s6 + $0x38] sm:$0xff]
        %v2282 = vld [vmem:[%s6 + $0x40] sm:$0xff]
        %v2283 = vld [vmem:[%s6 + $0x48] sm:$0xff]
        %v2284 = vld [vmem:[%s6 + $0x50] sm:$0xff]
        %v2285 = vld [vmem:[%s6 + $0x58] sm:$0xff]
        %v2286 = vld [vmem:[%s6 + $0x60] sm:$0xff]
        %v2287 = vld [vmem:[%s6 + $0x68] sm:$0xff]
        %v2288 = vld [vmem:[%s6 + $0x70] sm:$0xff]
        %v2289 = vld [vmem:[%s6 + $0x78] sm:$0xff]
        %v2290 = vld [vmem:[%s6 + $0x80] sm:$0xff]
        %v2291 = vld [vmem:[%s6 + $0x88] sm:$0xff]
        %v2292 = vld [vmem:[%s6 + $0x90] sm:$0xff]
        %v2293 = vld [vmem:[%s6 + $0x98] sm:$0xff]
        %v2294 = vld [vmem:[%s6 + $0xa0] sm:$0xff]
        %v2295 = vld [vmem:[%s6 + $0xa8] sm:$0xff]
        %v2296 = vld [vmem:[%s6 + $0xb0] sm:$0xff]
        %v2297 = vld [vmem:[%s6 + $0xb8] sm:$0xff]
        %v2298 = vld [vmem:[%s6 + $0xc0] sm:$0xff]
        %v2299 = vld [vmem:[%s6 + $0xc8] sm:$0xff]
        %v2300 = vld [vmem:[%s6 + $0xd0] sm:$0xff]
        %v2301 = vld [vmem:[%s6 + $0xd8] sm:$0xff]
        %v2302 = vld [vmem:[%s6 + $0xe0] sm:$0xff]
        %v2303 = vld [vmem:[%s6 + $0xe8] sm:$0xff]
        %v2304 = vld [vmem:[%s6 + $0xf0] sm:$0xff]
        %v2305 = vld [vmem:[%s6 + $0xf8] sm:$0xff]
        %v2306 = vld [vmem:[%s6 + $0x100] sm:$0xff]
        %v2307 = vld [vmem:[%s6 + $0x108] sm:$0xff]
        %v2308 = vld [vmem:[%s6 + $0x110] sm:$0xff]
        %v2309 = vld [vmem:[%s6 + $0x118] sm:$0xff]
        %v2310 = vld [vmem:[%s6 + $0x120] sm:$0xff]
        %v2311 = vld [vmem:[%s6 + $0x128] sm:$0xff]
        %v2312 = vld [vmem:[%s6 + $0x130] sm:$0xff]
        %v2313 = vld [vmem:[%s6 + $0x138] sm:$0xff]
        %v2314 = vld [vmem:[%s6 + $0x140] sm:$0xff]
        %v2315 = vld [vmem:[%s6 + $0x148] sm:$0xff]
        %v2316 = vld [vmem:[%s6 + $0x150] sm:$0xff]
        %v2317 = vld [vmem:[%s6 + $0x158] sm:$0xff]
        %v2318 = vld [vmem:[%s6 + $0x160] sm:$0xff]
        %v2319 = vld [vmem:[%s6 + $0x168] sm:$0xff]
        %v2320 = vld [vmem:[%s6 + $0x170] sm:$0xff]
        %v2321 = vld [vmem:[%s6 + $0x178] sm:$0xff]
        %v2322 = vld [vmem:[%s6 + $0x180] sm:$0xff]
        %v2323 = vld [vmem:[%s6 + $0x188] sm:$0xff]
        %v2324 = vld [vmem:[%s6 + $0x190] sm:$0xff]
        %v2325 = vld [vmem:[%s6 + $0x198] sm:$0xff]
        %v2326 = vld [vmem:[%s6 + $0x1a0] sm:$0xff]
        %v2327 = vld [vmem:[%s6 + $0x1a8] sm:$0xff]
        %v2328 = vld [vmem:[%s6 + $0x1b0] sm:$0xff]
        %v2329 = vld [vmem:[%s6 + $0x1b8] sm:$0xff]
        %v2330 = vld [vmem:[%s6 + $0x1c0] sm:$0xff]
        %v2331 = vld [vmem:[%s6 + $0x1c8] sm:$0xff]
        %v2332 = vld [vmem:[%s6 + $0x1d0] sm:$0xff]
        %v2333 = vld [vmem:[%s6 + $0x1d8] sm:$0xff]
        %v2334 = vld [vmem:[%s6 + $0x1e0] sm:$0xff]
        %v2335 = vld [vmem:[%s6 + $0x1e8] sm:$0xff]
        %v2336 = vld [vmem:[%s6 + $0x1f0] sm:$0xff]
        %v2337 = vld [vmem:[%s6 + $0x1f8] sm:$0xff]
        %v2338 = vld [vmem:[%s6 + $0x200] sm:$0xff]
        %v2339 = vld [vmem:[%s6 + $0x208] sm:$0xff]
        %v2340 = vld [vmem:[%s6 + $0x210] sm:$0xff]
        %v2341 = vld [vmem:[%s6 + $0x218] sm:$0xff]
        %v2342 = vld [vmem:[%s6 + $0x220] sm:$0xff]
        %v2343 = vld [vmem:[%s6 + $0x228] sm:$0xff]
        %v2344 = vld [vmem:[%s6 + $0x230] sm:$0xff]
        %v2345 = vld [vmem:[%s6 + $0x238] sm:$0xff]
        %v2346 = vld [vmem:[%s6 + $0x240] sm:$0xff]
        %v2347 = vld [vmem:[%s6 + $0x248] sm:$0xff]
        %v2348 = vld [vmem:[%s6 + $0x250] sm:$0xff]
        %v2349 = vld [vmem:[%s6 + $0x258] sm:$0xff]
        %v2350 = vld [vmem:[%s6 + $0x260] sm:$0xff]
        %v2351 = vld [vmem:[%s6 + $0x268] sm:$0xff]
        %v2352 = vld [vmem:[%s6 + $0x270] sm:$0xff]
        %v2353 = vld [vmem:[%s6 + $0x278] sm:$0xff]
        %v2354 = vld [vmem:[%s6 + $0x280] sm:$0xff]
        %v2355 = vld [vmem:[%s6 + $0x288] sm:$0xff]
        %v2356 = vld [vmem:[%s6 + $0x290] sm:$0xff]
        %v2357 = vld [vmem:[%s6 + $0x298] sm:$0xff]
        %v2358 = vld [vmem:[%s6 + $0x2a0] sm:$0xff]
        %v2359 = vld [vmem:[%s6 + $0x2a8] sm:$0xff]
        %v2360 = vld [vmem:[%s6 + $0x2b0] sm:$0xff]
        %v2361 = vld [vmem:[%s6 + $0x2b8] sm:$0xff]
        %v2362 = vld [vmem:[%s6 + $0x2c0] sm:$0xff]
        %v2363 = vld [vmem:[%s6 + $0x2c8] sm:$0xff]
        %v2364 = vld [vmem:[%s6 + $0x2d0] sm:$0xff]
        %v2365 = vld [vmem:[%s6 + $0x2d8] sm:$0xff]
        %v2366 = vld [vmem:[%s6 + $0x2e0] sm:$0xff]
        %v2367 = vld [vmem:[%s6 + $0x2e8] sm:$0xff]
        %v2368 = vld [vmem:[%s6 + $0x2f0] sm:$0xff]
        %v2369 = vld [vmem:[%s6 + $0x2f8] sm:$0xff]
        %v2370 = vld [vmem:[%s6 + $0x300] sm:$0xff]
        %v2371 = vld [vmem:[%s6 + $0x308] sm:$0xff]
        %v2372 = vld [vmem:[%s6 + $0x310] sm:$0xff]
        %v2373 = vld [vmem:[%s6 + $0x318] sm:$0xff]
        %v2374 = vld [vmem:[%s6 + $0x320] sm:$0xff]
        %v2375 = vld [vmem:[%s6 + $0x328] sm:$0xff]
        %v2376 = vld [vmem:[%s6 + $0x330] sm:$0xff]
        %v2377 = vld [vmem:[%s6 + $0x338] sm:$0xff]
        %v2378 = vld [vmem:[%s6 + $0x340] sm:$0xff]
        %v2379 = vld [vmem:[%s6 + $0x348] sm:$0xff]
        %v2380 = vld [vmem:[%s6 + $0x350] sm:$0xff]
        %v2381 = vld [vmem:[%s6 + $0x358] sm:$0xff]
        %v2382 = vld [vmem:[%s6 + $0x360] sm:$0xff]
        %v2383 = vld [vmem:[%s6 + $0x368] sm:$0xff]
        %v2384 = vld [vmem:[%s6 + $0x370] sm:$0xff]
        %v2385 = vld [vmem:[%s6 + $0x378] sm:$0xff]
        %v2386 = vld [vmem:[%s6 + $0x380] sm:$0xff]
        %v2387 = vld [vmem:[%s6 + $0x388] sm:$0xff]
        %v2388 = vld [vmem:[%s6 + $0x390] sm:$0xff]
        %v2389 = vld [vmem:[%s6 + $0x398] sm:$0xff]
        %v2390 = vld [vmem:[%s6 + $0x3a0] sm:$0xff]
        %v2391 = vld [vmem:[%s6 + $0x3a8] sm:$0xff]
        %v2392 = vld [vmem:[%s6 + $0x3b0] sm:$0xff]
        %v2393 = vld [vmem:[%s6 + $0x3b8] sm:$0xff]
        %v2394 = vld [vmem:[%s6 + $0x3c0] sm:$0xff]
        %v2395 = vld [vmem:[%s6 + $0x3c8] sm:$0xff]
        %v2396 = vld [vmem:[%s6 + $0x3d0] sm:$0xff]
        %v2397 = vld [vmem:[%s6 + $0x3d8] sm:$0xff]
        %v2398 = vld [vmem:[%s6 + $0x3e0] sm:$0xff]
        %v2399 = vld [vmem:[%s6 + $0x3e8] sm:$0xff]
        %v2400 = vld [vmem:[%s6 + $0x3f0] sm:$0xff]
        %v2401 = vld [vmem:[%s6 + $0x3f8] sm:$0xff]
        %v2402 = vld [vmem:[#allocation4] sm:$0xff]
        %v2404 = vperm.slane %v2402, 0
        %v2405 = vperm.slane %v2402, 1
        %v2406 = vperm.slane %v2402, 2
        %v2407 = vperm.slane %v2402, 3
        %v2408 = vperm.slane %v2402, 4
        %v2409 = vperm.slane %v2402, 5
        %v2410 = vperm.slane %v2402, 6
        %v2411 = vperm.slane %v2402, 7
        %v2548 = vunpack.c.l.b16 %v2274
        %v2549 = vunpack.c.h.b16 %v2274
        %v2550 = vunpack.c.l.b16 %v2275
        %v2551 = vunpack.c.h.b16 %v2275
        %v2552 = vunpack.c.l.b16 %v2276
        %v2553 = vunpack.c.h.b16 %v2276
        %v2554 = vunpack.c.l.b16 %v2277
        %v2555 = vunpack.c.h.b16 %v2277
        %v2556 = vunpack.c.l.b16 %v2278
        %v2557 = vunpack.c.h.b16 %v2278
        %v2558 = vunpack.c.l.b16 %v2279
        %v2559 = vunpack.c.h.b16 %v2279
        %v2560 = vunpack.c.l.b16 %v2280
        %v2561 = vunpack.c.h.b16 %v2280
        %v2562 = vunpack.c.l.b16 %v2281
        %v2563 = vunpack.c.h.b16 %v2281
        %v2564 = vunpack.c.l.b16 %v2282
        %v2565 = vunpack.c.h.b16 %v2282
        %v2566 = vunpack.c.l.b16 %v2283
        %v2567 = vunpack.c.h.b16 %v2283
        %v2568 = vunpack.c.l.b16 %v2284
        %v2569 = vunpack.c.h.b16 %v2284
        %v2570 = vunpack.c.l.b16 %v2285
        %v2571 = vunpack.c.h.b16 %v2285
        %v2572 = vunpack.c.l.b16 %v2286
        %v2573 = vunpack.c.h.b16 %v2286
        %v2574 = vunpack.c.l.b16 %v2287
        %v2575 = vunpack.c.h.b16 %v2287
        %v2576 = vunpack.c.l.b16 %v2288
        %v2577 = vunpack.c.h.b16 %v2288
        %v2578 = vunpack.c.l.b16 %v2289
        %v2579 = vunpack.c.h.b16 %v2289
        %v2580 = vunpack.c.l.b16 %v2290
        %v2581 = vunpack.c.h.b16 %v2290
        %v2582 = vunpack.c.l.b16 %v2291
        %v2583 = vunpack.c.h.b16 %v2291
        %v2584 = vunpack.c.l.b16 %v2292
        %v2585 = vunpack.c.h.b16 %v2292
        %v2586 = vunpack.c.l.b16 %v2293
        %v2587 = vunpack.c.h.b16 %v2293
        %v2588 = vunpack.c.l.b16 %v2294
        %v2589 = vunpack.c.h.b16 %v2294
        %v2590 = vunpack.c.l.b16 %v2295
        %v2591 = vunpack.c.h.b16 %v2295
        %v2592 = vunpack.c.l.b16 %v2296
        %v2593 = vunpack.c.h.b16 %v2296
        %v2594 = vunpack.c.l.b16 %v2297
        %v2595 = vunpack.c.h.b16 %v2297
        %v2596 = vunpack.c.l.b16 %v2298
        %v2597 = vunpack.c.h.b16 %v2298
        %v2598 = vunpack.c.l.b16 %v2299
        %v2599 = vunpack.c.h.b16 %v2299
        %v2600 = vunpack.c.l.b16 %v2300
        %v2601 = vunpack.c.h.b16 %v2300
        %v2602 = vunpack.c.l.b16 %v2301
        %v2603 = vunpack.c.h.b16 %v2301
        %v2604 = vunpack.c.l.b16 %v2302
        %v2605 = vunpack.c.h.b16 %v2302
        %v2606 = vunpack.c.l.b16 %v2303
        %v2607 = vunpack.c.h.b16 %v2303
        %v2608 = vunpack.c.l.b16 %v2304
        %v2609 = vunpack.c.h.b16 %v2304
        %v2610 = vunpack.c.l.b16 %v2305
        %v2611 = vunpack.c.h.b16 %v2305
        %v2612 = vunpack.c.l.b16 %v2306
        %v2613 = vunpack.c.h.b16 %v2306
        %v2614 = vunpack.c.l.b16 %v2307
        %v2615 = vunpack.c.h.b16 %v2307
        %v2616 = vunpack.c.l.b16 %v2308
        %v2617 = vunpack.c.h.b16 %v2308
        %v2618 = vunpack.c.l.b16 %v2309
        %v2619 = vunpack.c.h.b16 %v2309
        %v2620 = vunpack.c.l.b16 %v2310
        %v2621 = vunpack.c.h.b16 %v2310
        %v2622 = vunpack.c.l.b16 %v2311
        %v2623 = vunpack.c.h.b16 %v2311
        %v2624 = vunpack.c.l.b16 %v2312
        %v2625 = vunpack.c.h.b16 %v2312
        %v2626 = vunpack.c.l.b16 %v2313
        %v2627 = vunpack.c.h.b16 %v2313
        %v2628 = vunpack.c.l.b16 %v2314
        %v2629 = vunpack.c.h.b16 %v2314
        %v2630 = vunpack.c.l.b16 %v2315
        %v2631 = vunpack.c.h.b16 %v2315
        %v2632 = vunpack.c.l.b16 %v2316
        %v2633 = vunpack.c.h.b16 %v2316
        %v2634 = vunpack.c.l.b16 %v2317
        %v2635 = vunpack.c.h.b16 %v2317
        %v2636 = vunpack.c.l.b16 %v2318
        %v2637 = vunpack.c.h.b16 %v2318
        %v2638 = vunpack.c.l.b16 %v2319
        %v2639 = vunpack.c.h.b16 %v2319
        %v2640 = vunpack.c.l.b16 %v2320
        %v2641 = vunpack.c.h.b16 %v2320
        %v2642 = vunpack.c.l.b16 %v2321
        %v2643 = vunpack.c.h.b16 %v2321
        %v2644 = vunpack.c.l.b16 %v2322
        %v2645 = vunpack.c.h.b16 %v2322
        %v2646 = vunpack.c.l.b16 %v2323
        %v2647 = vunpack.c.h.b16 %v2323
        %v2648 = vunpack.c.l.b16 %v2324
        %v2649 = vunpack.c.h.b16 %v2324
        %v2650 = vunpack.c.l.b16 %v2325
        %v2651 = vunpack.c.h.b16 %v2325
        %v2652 = vunpack.c.l.b16 %v2326
        %v2653 = vunpack.c.h.b16 %v2326
        %v2654 = vunpack.c.l.b16 %v2327
        %v2655 = vunpack.c.h.b16 %v2327
        %v2656 = vunpack.c.l.b16 %v2328
        %v2657 = vunpack.c.h.b16 %v2328
        %v2658 = vunpack.c.l.b16 %v2329
        %v2659 = vunpack.c.h.b16 %v2329
        %v2660 = vunpack.c.l.b16 %v2330
        %v2661 = vunpack.c.h.b16 %v2330
        %v2662 = vunpack.c.l.b16 %v2331
        %v2663 = vunpack.c.h.b16 %v2331
        %v2664 = vunpack.c.l.b16 %v2332
        %v2665 = vunpack.c.h.b16 %v2332
        %v2666 = vunpack.c.l.b16 %v2333
        %v2667 = vunpack.c.h.b16 %v2333
        %v2668 = vunpack.c.l.b16 %v2334
        %v2669 = vunpack.c.h.b16 %v2334
        %v2670 = vunpack.c.l.b16 %v2335
        %v2671 = vunpack.c.h.b16 %v2335
        %v2672 = vunpack.c.l.b16 %v2336
        %v2673 = vunpack.c.h.b16 %v2336
        %v2674 = vunpack.c.l.b16 %v2337
        %v2675 = vunpack.c.h.b16 %v2337
        %v2676 = vunpack.c.l.b16 %v2338
        %v2677 = vunpack.c.h.b16 %v2338
        %v2678 = vunpack.c.l.b16 %v2339
        %v2679 = vunpack.c.h.b16 %v2339
        %v2680 = vunpack.c.l.b16 %v2340
        %v2681 = vunpack.c.h.b16 %v2340
        %v2682 = vunpack.c.l.b16 %v2341
        %v2683 = vunpack.c.h.b16 %v2341
        %v2684 = vunpack.c.l.b16 %v2342
        %v2685 = vunpack.c.h.b16 %v2342
        %v2686 = vunpack.c.l.b16 %v2343
        %v2687 = vunpack.c.h.b16 %v2343
        %v2688 = vunpack.c.l.b16 %v2344
        %v2689 = vunpack.c.h.b16 %v2344
        %v2690 = vunpack.c.l.b16 %v2345
        %v2691 = vunpack.c.h.b16 %v2345
        %v2692 = vunpack.c.l.b16 %v2346
        %v2693 = vunpack.c.h.b16 %v2346
        %v2694 = vunpack.c.l.b16 %v2347
        %v2695 = vunpack.c.h.b16 %v2347
        %v2696 = vunpack.c.l.b16 %v2348
        %v2697 = vunpack.c.h.b16 %v2348
        %v2698 = vunpack.c.l.b16 %v2349
        %v2699 = vunpack.c.h.b16 %v2349
        %v2700 = vunpack.c.l.b16 %v2350
        %v2701 = vunpack.c.h.b16 %v2350
        %v2702 = vunpack.c.l.b16 %v2351
        %v2703 = vunpack.c.h.b16 %v2351
        %v2704 = vunpack.c.l.b16 %v2352
        %v2705 = vunpack.c.h.b16 %v2352
        %v2706 = vunpack.c.l.b16 %v2353
        %v2707 = vunpack.c.h.b16 %v2353
        %v2708 = vunpack.c.l.b16 %v2354
        %v2709 = vunpack.c.h.b16 %v2354
        %v2710 = vunpack.c.l.b16 %v2355
        %v2711 = vunpack.c.h.b16 %v2355
        %v2712 = vunpack.c.l.b16 %v2356
        %v2713 = vunpack.c.h.b16 %v2356
        %v2714 = vunpack.c.l.b16 %v2357
        %v2715 = vunpack.c.h.b16 %v2357
        %v2716 = vunpack.c.l.b16 %v2358
        %v2717 = vunpack.c.h.b16 %v2358
        %v2718 = vunpack.c.l.b16 %v2359
        %v2719 = vunpack.c.h.b16 %v2359
        %v2720 = vunpack.c.l.b16 %v2360
        %v2721 = vunpack.c.h.b16 %v2360
        %v2722 = vunpack.c.l.b16 %v2361
        %v2723 = vunpack.c.h.b16 %v2361
        %v2724 = vunpack.c.l.b16 %v2362
        %v2725 = vunpack.c.h.b16 %v2362
        %v2726 = vunpack.c.l.b16 %v2363
        %v2727 = vunpack.c.h.b16 %v2363
        %v2728 = vunpack.c.l.b16 %v2364
        %v2729 = vunpack.c.h.b16 %v2364
        %v2730 = vunpack.c.l.b16 %v2365
        %v2731 = vunpack.c.h.b16 %v2365
        %v2732 = vunpack.c.l.b16 %v2366
        %v2733 = vunpack.c.h.b16 %v2366
        %v2734 = vunpack.c.l.b16 %v2367
        %v2735 = vunpack.c.h.b16 %v2367
        %v2736 = vunpack.c.l.b16 %v2368
        %v2737 = vunpack.c.h.b16 %v2368
        %v2738 = vunpack.c.l.b16 %v2369
        %v2739 = vunpack.c.h.b16 %v2369
        %v2740 = vunpack.c.l.b16 %v2370
        %v2741 = vunpack.c.h.b16 %v2370
        %v2742 = vunpack.c.l.b16 %v2371
        %v2743 = vunpack.c.h.b16 %v2371
        %v2744 = vunpack.c.l.b16 %v2372
        %v2745 = vunpack.c.h.b16 %v2372
        %v2746 = vunpack.c.l.b16 %v2373
        %v2747 = vunpack.c.h.b16 %v2373
        %v2748 = vunpack.c.l.b16 %v2374
        %v2749 = vunpack.c.h.b16 %v2374
        %v2750 = vunpack.c.l.b16 %v2375
        %v2751 = vunpack.c.h.b16 %v2375
        %v2752 = vunpack.c.l.b16 %v2376
        %v2753 = vunpack.c.h.b16 %v2376
        %v2754 = vunpack.c.l.b16 %v2377
        %v2755 = vunpack.c.h.b16 %v2377
        %v2756 = vunpack.c.l.b16 %v2378
        %v2757 = vunpack.c.h.b16 %v2378
        %v2758 = vunpack.c.l.b16 %v2379
        %v2759 = vunpack.c.h.b16 %v2379
        %v2760 = vunpack.c.l.b16 %v2380
        %v2761 = vunpack.c.h.b16 %v2380
        %v2762 = vunpack.c.l.b16 %v2381
        %v2763 = vunpack.c.h.b16 %v2381
        %v2764 = vunpack.c.l.b16 %v2382
        %v2765 = vunpack.c.h.b16 %v2382
        %v2766 = vunpack.c.l.b16 %v2383
        %v2767 = vunpack.c.h.b16 %v2383
        %v2768 = vunpack.c.l.b16 %v2384
        %v2769 = vunpack.c.h.b16 %v2384
        %v2770 = vunpack.c.l.b16 %v2385
        %v2771 = vunpack.c.h.b16 %v2385
        %v2772 = vunpack.c.l.b16 %v2386
        %v2773 = vunpack.c.h.b16 %v2386
        %v2774 = vunpack.c.l.b16 %v2387
        %v2775 = vunpack.c.h.b16 %v2387
        %v2776 = vunpack.c.l.b16 %v2388
        %v2777 = vunpack.c.h.b16 %v2388
        %v2778 = vunpack.c.l.b16 %v2389
        %v2779 = vunpack.c.h.b16 %v2389
        %v2780 = vunpack.c.l.b16 %v2390
        %v2781 = vunpack.c.h.b16 %v2390
        %v2782 = vunpack.c.l.b16 %v2391
        %v2783 = vunpack.c.h.b16 %v2391
        %v2784 = vunpack.c.l.b16 %v2392
        %v2785 = vunpack.c.h.b16 %v2392
        %v2786 = vunpack.c.l.b16 %v2393
        %v2787 = vunpack.c.h.b16 %v2393
        %v2788 = vunpack.c.l.b16 %v2394
        %v2789 = vunpack.c.h.b16 %v2394
        %v2790 = vunpack.c.l.b16 %v2395
        %v2791 = vunpack.c.h.b16 %v2395
        %v2792 = vunpack.c.l.b16 %v2396
        %v2793 = vunpack.c.h.b16 %v2396
        %v2794 = vunpack.c.l.b16 %v2397
        %v2795 = vunpack.c.h.b16 %v2397
        %v2796 = vunpack.c.l.b16 %v2398
        %v2797 = vunpack.c.h.b16 %v2398
        %v2798 = vunpack.c.l.b16 %v2399
        %v2799 = vunpack.c.h.b16 %v2399
        %v2800 = vunpack.c.l.b16 %v2400
        %v2801 = vunpack.c.h.b16 %v2400
        %v2802 = vunpack.c.l.b16 %v2401
        %v2803 = vunpack.c.h.b16 %v2401
        %v2804 = vpack.c.b16 %v2556, %v2548
        %v2805 = vpack.c.b16 %v2557, %v2549
        %v2806 = vpack.c.b16 %v2558, %v2550
        %v2807 = vpack.c.b16 %v2559, %v2551
        %v2808 = vpack.c.b16 %v2560, %v2552
        %v2809 = vpack.c.b16 %v2561, %v2553
        %v2810 = vpack.c.b16 %v2562, %v2554
        %v2811 = vpack.c.b16 %v2563, %v2555
        %v2812 = vpack.c.b16 %v2572, %v2564
        %v2813 = vpack.c.b16 %v2573, %v2565
        %v2814 = vpack.c.b16 %v2574, %v2566
        %v2815 = vpack.c.b16 %v2575, %v2567
        %v2816 = vpack.c.b16 %v2576, %v2568
        %v2817 = vpack.c.b16 %v2577, %v2569
        %v2818 = vpack.c.b16 %v2578, %v2570
        %v2819 = vpack.c.b16 %v2579, %v2571
        %v2820 = vpack.c.b16 %v2588, %v2580
        %v2821 = vpack.c.b16 %v2589, %v2581
        %v2822 = vpack.c.b16 %v2590, %v2582
        %v2823 = vpack.c.b16 %v2591, %v2583
        %v2824 = vpack.c.b16 %v2592, %v2584
        %v2825 = vpack.c.b16 %v2593, %v2585
        %v2826 = vpack.c.b16 %v2594, %v2586
        %v2827 = vpack.c.b16 %v2595, %v2587
        %v2828 = vpack.c.b16 %v2604, %v2596
        %v2829 = vpack.c.b16 %v2605, %v2597
        %v2830 = vpack.c.b16 %v2606, %v2598
        %v2831 = vpack.c.b16 %v2607, %v2599
        %v2832 = vpack.c.b16 %v2608, %v2600
        %v2833 = vpack.c.b16 %v2609, %v2601
        %v2834 = vpack.c.b16 %v2610, %v2602
        %v2835 = vpack.c.b16 %v2611, %v2603
        %v2836 = vpack.c.b16 %v2620, %v2612
        %v2837 = vpack.c.b16 %v2621, %v2613
        %v2838 = vpack.c.b16 %v2622, %v2614
        %v2839 = vpack.c.b16 %v2623, %v2615
        %v2840 = vpack.c.b16 %v2624, %v2616
        %v2841 = vpack.c.b16 %v2625, %v2617
        %v2842 = vpack.c.b16 %v2626, %v2618
        %v2843 = vpack.c.b16 %v2627, %v2619
        %v2844 = vpack.c.b16 %v2636, %v2628
        %v2845 = vpack.c.b16 %v2637, %v2629
        %v2846 = vpack.c.b16 %v2638, %v2630
        %v2847 = vpack.c.b16 %v2639, %v2631
        %v2848 = vpack.c.b16 %v2640, %v2632
        %v2849 = vpack.c.b16 %v2641, %v2633
        %v2850 = vpack.c.b16 %v2642, %v2634
        %v2851 = vpack.c.b16 %v2643, %v2635
        %v2852 = vpack.c.b16 %v2652, %v2644
        %v2853 = vpack.c.b16 %v2653, %v2645
        %v2854 = vpack.c.b16 %v2654, %v2646
        %v2855 = vpack.c.b16 %v2655, %v2647
        %v2856 = vpack.c.b16 %v2656, %v2648
        %v2857 = vpack.c.b16 %v2657, %v2649
        %v2858 = vpack.c.b16 %v2658, %v2650
        %v2859 = vpack.c.b16 %v2659, %v2651
        %v2860 = vpack.c.b16 %v2668, %v2660
        %v2861 = vpack.c.b16 %v2669, %v2661
        %v2862 = vpack.c.b16 %v2670, %v2662
        %v2863 = vpack.c.b16 %v2671, %v2663
        %v2864 = vpack.c.b16 %v2672, %v2664
        %v2865 = vpack.c.b16 %v2673, %v2665
        %v2866 = vpack.c.b16 %v2674, %v2666
        %v2867 = vpack.c.b16 %v2675, %v2667
        %v2868 = vpack.c.b16 %v2684, %v2676
        %v2869 = vpack.c.b16 %v2685, %v2677
        %v2870 = vpack.c.b16 %v2686, %v2678
        %v2871 = vpack.c.b16 %v2687, %v2679
        %v2872 = vpack.c.b16 %v2688, %v2680
        %v2873 = vpack.c.b16 %v2689, %v2681
        %v2874 = vpack.c.b16 %v2690, %v2682
        %v2875 = vpack.c.b16 %v2691, %v2683
        %v2876 = vpack.c.b16 %v2700, %v2692
        %v2877 = vpack.c.b16 %v2701, %v2693
        %v2878 = vpack.c.b16 %v2702, %v2694
        %v2879 = vpack.c.b16 %v2703, %v2695
        %v2880 = vpack.c.b16 %v2704, %v2696
        %v2881 = vpack.c.b16 %v2705, %v2697
        %v2882 = vpack.c.b16 %v2706, %v2698
        %v2883 = vpack.c.b16 %v2707, %v2699
        %v2884 = vpack.c.b16 %v2716, %v2708
        %v2885 = vpack.c.b16 %v2717, %v2709
        %v2886 = vpack.c.b16 %v2718, %v2710
        %v2887 = vpack.c.b16 %v2719, %v2711
        %v2888 = vpack.c.b16 %v2720, %v2712
        %v2889 = vpack.c.b16 %v2721, %v2713
        %v2890 = vpack.c.b16 %v2722, %v2714
        %v2891 = vpack.c.b16 %v2723, %v2715
        %v2892 = vpack.c.b16 %v2732, %v2724
        %v2893 = vpack.c.b16 %v2733, %v2725
        %v2894 = vpack.c.b16 %v2734, %v2726
        %v2895 = vpack.c.b16 %v2735, %v2727
        %v2896 = vpack.c.b16 %v2736, %v2728
        %v2897 = vpack.c.b16 %v2737, %v2729
        %v2898 = vpack.c.b16 %v2738, %v2730
        %v2899 = vpack.c.b16 %v2739, %v2731
        %v2900 = vpack.c.b16 %v2748, %v2740
        %v2901 = vpack.c.b16 %v2749, %v2741
        %v2902 = vpack.c.b16 %v2750, %v2742
        %v2903 = vpack.c.b16 %v2751, %v2743
        %v2904 = vpack.c.b16 %v2752, %v2744
        %v2905 = vpack.c.b16 %v2753, %v2745
        %v2906 = vpack.c.b16 %v2754, %v2746
        %v2907 = vpack.c.b16 %v2755, %v2747
        %v2908 = vpack.c.b16 %v2764, %v2756
        %v2909 = vpack.c.b16 %v2765, %v2757
        %v2910 = vpack.c.b16 %v2766, %v2758
        %v2911 = vpack.c.b16 %v2767, %v2759
        %v2912 = vpack.c.b16 %v2768, %v2760
        %v2913 = vpack.c.b16 %v2769, %v2761
        %v2914 = vpack.c.b16 %v2770, %v2762
        %v2915 = vpack.c.b16 %v2771, %v2763
        %v2916 = vpack.c.b16 %v2780, %v2772
        %v2917 = vpack.c.b16 %v2781, %v2773
        %v2918 = vpack.c.b16 %v2782, %v2774
        %v2919 = vpack.c.b16 %v2783, %v2775
        %v2920 = vpack.c.b16 %v2784, %v2776
        %v2921 = vpack.c.b16 %v2785, %v2777
        %v2922 = vpack.c.b16 %v2786, %v2778
        %v2923 = vpack.c.b16 %v2787, %v2779
        %v2924 = vpack.c.b16 %v2796, %v2788
        %v2925 = vpack.c.b16 %v2797, %v2789
        %v2926 = vpack.c.b16 %v2798, %v2790
        %v2927 = vpack.c.b16 %v2799, %v2791
        %v2928 = vpack.c.b16 %v2800, %v2792
        %v2929 = vpack.c.b16 %v2801, %v2793
        %v2930 = vpack.c.b16 %v2802, %v2794
        %v2931 = vpack.c.b16 %v2803, %v2795
        %3060 = vmatpush.bf16.msra.mxu0 %v2860
        %3061 = vmatpush.bf16.msra.mxu0 %v2852
        %3062 = vmatpush.bf16.msra.mxu0 %v2844
        %3063 = vmatpush.bf16.msra.mxu0 %v2836
        %3064 = vmatpush.bf16.msra.mxu0 %v2828
        %3065 = vmatpush.bf16.msra.mxu0 %v2820
        %3066 = vmatpush.bf16.msra.mxu0 %v2812
        %3067 = vmatpush.bf16.msra.mxu0 %v2804
        %3068 = vmatmul.bf16.gmra.mxu0 %v2258
        %v3069 = vpop.f32.mrf.mxu0
        %v3070 = vadd.f32 %v2404, %v3069
        %v3071 = vpop.f32.mrf.mxu0
        %v3072 = vadd.f32 %v2404, %v3071
        %3073 = vmatmul.bf16.gmra.mxu0 %v2260
        %v3074 = vpop.f32.mrf.mxu0
        %v3075 = vadd.f32 %v2404, %v3074
        %v3076 = vpop.f32.mrf.mxu0
        %v3077 = vadd.f32 %v2404, %v3076
        %3078 = vmatmul.bf16.gmra.mxu0 %v2262
        %v3079 = vpop.f32.mrf.mxu0
        %v3080 = vadd.f32 %v2404, %v3079
        %v3081 = vpop.f32.mrf.mxu0
        %v3082 = vadd.f32 %v2404, %v3081
        %3083 = vmatmul.bf16.gmra.mxu0 %v2264
        %v3084 = vpop.f32.mrf.mxu0
        %v3085 = vadd.f32 %v2404, %v3084
        %v3086 = vpop.f32.mrf.mxu0
        %v3087 = vadd.f32 %v2404, %v3086
        %3088 = vmatmul.bf16.gmra.mxu0 %v2266
        %v3089 = vpop.f32.mrf.mxu0
        %v3090 = vadd.f32 %v2404, %v3089
        %v3091 = vpop.f32.mrf.mxu0
        %v3092 = vadd.f32 %v2404, %v3091
        %3093 = vmatmul.bf16.gmra.mxu0 %v2268
        %v3094 = vpop.f32.mrf.mxu0
        %v3095 = vadd.f32 %v2404, %v3094
        %v3096 = vpop.f32.mrf.mxu0
        %v3097 = vadd.f32 %v2404, %v3096
        %3098 = vmatmul.bf16.gmra.mxu0 %v2270
        %v3099 = vpop.f32.mrf.mxu0
        %v3100 = vadd.f32 %v2404, %v3099
        %v3101 = vpop.f32.mrf.mxu0
        %v3102 = vadd.f32 %v2404, %v3101
        %3103 = vmatmul.bf16.gmra.mxu0 %v2272
        %v3104 = vpop.f32.mrf.mxu0
        %v3105 = vadd.f32 %v2404, %v3104
        %v3106 = vpop.f32.mrf.mxu0
        %v3107 = vadd.f32 %v2404, %v3106
        %3108 = vdwg.mxu0
        %3109 = vmatpush.bf16.msra.mxu0 %v2924
        %3110 = vmatpush.bf16.msra.mxu0 %v2916
        %3111 = vmatpush.bf16.msra.mxu0 %v2908
        %3112 = vmatpush.bf16.msra.mxu0 %v2900
        %3113 = vmatpush.bf16.msra.mxu0 %v2892
        %3114 = vmatpush.bf16.msra.mxu0 %v2884
        %3115 = vmatpush.bf16.msra.mxu0 %v2876
        %3116 = vmatpush.bf16.msra.mxu0 %v2868
        %3117 = vmatmul.bf16.gmra.mxu0 %v2259
        %v3118 = vpop.f32.mrf.mxu0
        %v3119 = vadd.f32 %v3070, %v3118
        %v3120 = vpop.f32.mrf.mxu0
        %v3121 = vadd.f32 %v3072, %v3120
        %3122 = vmatmul.bf16.gmra.mxu0 %v2261
        %v3123 = vpop.f32.mrf.mxu0
        %v3124 = vadd.f32 %v3075, %v3123
        %v3125 = vpop.f32.mrf.mxu0
        %v3126 = vadd.f32 %v3077, %v3125
        %3127 = vmatmul.bf16.gmra.mxu0 %v2263
        %v3128 = vpop.f32.mrf.mxu0
        %v3129 = vadd.f32 %v3080, %v3128
        %v3130 = vpop.f32.mrf.mxu0
        %v3131 = vadd.f32 %v3082, %v3130
        %3132 = vmatmul.bf16.gmra.mxu0 %v2265
        %v3133 = vpop.f32.mrf.mxu0
        %v3134 = vadd.f32 %v3085, %v3133
        %v3135 = vpop.f32.mrf.mxu0
        %v3136 = vadd.f32 %v3087, %v3135
        %3137 = vmatmul.bf16.gmra.mxu0 %v2267
        %v3138 = vpop.f32.mrf.mxu0
        %v3139 = vadd.f32 %v3090, %v3138
        %v3140 = vpop.f32.mrf.mxu0
        %v3141 = vadd.f32 %v3092, %v3140
        %3142 = vmatmul.bf16.gmra.mxu0 %v2269
        %v3143 = vpop.f32.mrf.mxu0
        %v3144 = vadd.f32 %v3095, %v3143
        %v3145 = vpop.f32.mrf.mxu0
        %v3146 = vadd.f32 %v3097, %v3145
        %3147 = vmatmul.bf16.gmra.mxu0 %v2271
        %v3148 = vpop.f32.mrf.mxu0
        %v3149 = vadd.f32 %v3100, %v3148
        %v3150 = vpop.f32.mrf.mxu0
        %v3151 = vadd.f32 %v3102, %v3150
        %3152 = vmatmul.bf16.gmra.mxu0 %v2273
        %v3153 = vpop.f32.mrf.mxu0
        %v3154 = vadd.f32 %v3105, %v3153
        %v3155 = vpop.f32.mrf.mxu0
        %v3156 = vadd.f32 %v3107, %v3155
        %3157 = vdwg.mxu0
        %3158 = vmatpush.bf16.msra.mxu0 %v2861
        %3159 = vmatpush.bf16.msra.mxu0 %v2853
        %3160 = vmatpush.bf16.msra.mxu0 %v2845
        %3161 = vmatpush.bf16.msra.mxu0 %v2837
        %3162 = vmatpush.bf16.msra.mxu0 %v2829
        %3163 = vmatpush.bf16.msra.mxu0 %v2821
        %3164 = vmatpush.bf16.msra.mxu0 %v2813
        %3165 = vmatpush.bf16.msra.mxu0 %v2805
        %3166 = vmatmul.bf16.gmra.mxu0 %v2258
        %v3167 = vpop.f32.mrf.mxu0
        %v3168 = vadd.f32 %v2405, %v3167
        %v3169 = vpop.f32.mrf.mxu0
        %v3170 = vadd.f32 %v2405, %v3169
        %3171 = vmatmul.bf16.gmra.mxu0 %v2260
        %v3172 = vpop.f32.mrf.mxu0
        %v3173 = vadd.f32 %v2405, %v3172
        %v3174 = vpop.f32.mrf.mxu0
        %v3175 = vadd.f32 %v2405, %v3174
        %3176 = vmatmul.bf16.gmra.mxu0 %v2262
        %v3177 = vpop.f32.mrf.mxu0
        %v3178 = vadd.f32 %v2405, %v3177
        %v3179 = vpop.f32.mrf.mxu0
        %v3180 = vadd.f32 %v2405, %v3179
        %3181 = vmatmul.bf16.gmra.mxu0 %v2264
        %v3182 = vpop.f32.mrf.mxu0
        %v3183 = vadd.f32 %v2405, %v3182
        %v3184 = vpop.f32.mrf.mxu0
        %v3185 = vadd.f32 %v2405, %v3184
        %3186 = vmatmul.bf16.gmra.mxu0 %v2266
        %v3187 = vpop.f32.mrf.mxu0
        %v3188 = vadd.f32 %v2405, %v3187
        %v3189 = vpop.f32.mrf.mxu0
        %v3190 = vadd.f32 %v2405, %v3189
        %3191 = vmatmul.bf16.gmra.mxu0 %v2268
        %v3192 = vpop.f32.mrf.mxu0
        %v3193 = vadd.f32 %v2405, %v3192
        %v3194 = vpop.f32.mrf.mxu0
        %v3195 = vadd.f32 %v2405, %v3194
        %3196 = vmatmul.bf16.gmra.mxu0 %v2270
        %v3197 = vpop.f32.mrf.mxu0
        %v3198 = vadd.f32 %v2405, %v3197
        %v3199 = vpop.f32.mrf.mxu0
        %v3200 = vadd.f32 %v2405, %v3199
        %3201 = vmatmul.bf16.gmra.mxu0 %v2272
        %v3202 = vpop.f32.mrf.mxu0
        %v3203 = vadd.f32 %v2405, %v3202
        %v3204 = vpop.f32.mrf.mxu0
        %v3205 = vadd.f32 %v2405, %v3204
        %3206 = vdwg.mxu0
        %3207 = vmatpush.bf16.msra.mxu0 %v2925
        %3208 = vmatpush.bf16.msra.mxu0 %v2917
        %3209 = vmatpush.bf16.msra.mxu0 %v2909
        %3210 = vmatpush.bf16.msra.mxu0 %v2901
        %3211 = vmatpush.bf16.msra.mxu0 %v2893
        %3212 = vmatpush.bf16.msra.mxu0 %v2885
        %3213 = vmatpush.bf16.msra.mxu0 %v2877
        %3214 = vmatpush.bf16.msra.mxu0 %v2869
        %3215 = vmatmul.bf16.gmra.mxu0 %v2259
        %v3216 = vpop.f32.mrf.mxu0
        %v3217 = vadd.f32 %v3168, %v3216
        %v3218 = vpop.f32.mrf.mxu0
        %v3219 = vadd.f32 %v3170, %v3218
        %3220 = vmatmul.bf16.gmra.mxu0 %v2261
        %v3221 = vpop.f32.mrf.mxu0
        %v3222 = vadd.f32 %v3173, %v3221
        %v3223 = vpop.f32.mrf.mxu0
        %v3224 = vadd.f32 %v3175, %v3223
        %3225 = vmatmul.bf16.gmra.mxu0 %v2263
        %v3226 = vpop.f32.mrf.mxu0
        %v3227 = vadd.f32 %v3178, %v3226
        %v3228 = vpop.f32.mrf.mxu0
        %v3229 = vadd.f32 %v3180, %v3228
        %3230 = vmatmul.bf16.gmra.mxu0 %v2265
        %v3231 = vpop.f32.mrf.mxu0
        %v3232 = vadd.f32 %v3183, %v3231
        %v3233 = vpop.f32.mrf.mxu0
        %v3234 = vadd.f32 %v3185, %v3233
        %3235 = vmatmul.bf16.gmra.mxu0 %v2267
        %v3236 = vpop.f32.mrf.mxu0
        %v3237 = vadd.f32 %v3188, %v3236
        %v3238 = vpop.f32.mrf.mxu0
        %v3239 = vadd.f32 %v3190, %v3238
        %3240 = vmatmul.bf16.gmra.mxu0 %v2269
        %v3241 = vpop.f32.mrf.mxu0
        %v3242 = vadd.f32 %v3193, %v3241
        %v3243 = vpop.f32.mrf.mxu0
        %v3244 = vadd.f32 %v3195, %v3243
        %3245 = vmatmul.bf16.gmra.mxu0 %v2271
        %v3246 = vpop.f32.mrf.mxu0
        %v3247 = vadd.f32 %v3198, %v3246
        %v3248 = vpop.f32.mrf.mxu0
        %v3249 = vadd.f32 %v3200, %v3248
        %3250 = vmatmul.bf16.gmra.mxu0 %v2273
        %v3251 = vpop.f32.mrf.mxu0
        %v3252 = vadd.f32 %v3203, %v3251
        %v3253 = vpop.f32.mrf.mxu0
        %v3254 = vadd.f32 %v3205, %v3253
        %3255 = vdwg.mxu0
        %3256 = vmatpush.bf16.msra.mxu0 %v2862
        %3257 = vmatpush.bf16.msra.mxu0 %v2854
        %3258 = vmatpush.bf16.msra.mxu0 %v2846
        %3259 = vmatpush.bf16.msra.mxu0 %v2838
        %3260 = vmatpush.bf16.msra.mxu0 %v2830
        %3261 = vmatpush.bf16.msra.mxu0 %v2822
        %3262 = vmatpush.bf16.msra.mxu0 %v2814
        %3263 = vmatpush.bf16.msra.mxu0 %v2806
        %3264 = vmatmul.bf16.gmra.mxu0 %v2258
        %v3265 = vpop.f32.mrf.mxu0
        %v3266 = vadd.f32 %v2406, %v3265
        %v3267 = vpop.f32.mrf.mxu0
        %v3268 = vadd.f32 %v2406, %v3267
        %3269 = vmatmul.bf16.gmra.mxu0 %v2260
        %v3270 = vpop.f32.mrf.mxu0
        %v3271 = vadd.f32 %v2406, %v3270
        %v3272 = vpop.f32.mrf.mxu0
        %v3273 = vadd.f32 %v2406, %v3272
        %3274 = vmatmul.bf16.gmra.mxu0 %v2262
        %v3275 = vpop.f32.mrf.mxu0
        %v3276 = vadd.f32 %v2406, %v3275
        %v3277 = vpop.f32.mrf.mxu0
        %v3278 = vadd.f32 %v2406, %v3277
        %3279 = vmatmul.bf16.gmra.mxu0 %v2264
        %v3280 = vpop.f32.mrf.mxu0
        %v3281 = vadd.f32 %v2406, %v3280
        %v3282 = vpop.f32.mrf.mxu0
        %v3283 = vadd.f32 %v2406, %v3282
        %3284 = vmatmul.bf16.gmra.mxu0 %v2266
        %v3285 = vpop.f32.mrf.mxu0
        %v3286 = vadd.f32 %v2406, %v3285
        %v3287 = vpop.f32.mrf.mxu0
        %v3288 = vadd.f32 %v2406, %v3287
        %3289 = vmatmul.bf16.gmra.mxu0 %v2268
        %v3290 = vpop.f32.mrf.mxu0
        %v3291 = vadd.f32 %v2406, %v3290
        %v3292 = vpop.f32.mrf.mxu0
        %v3293 = vadd.f32 %v2406, %v3292
        %3294 = vmatmul.bf16.gmra.mxu0 %v2270
        %v3295 = vpop.f32.mrf.mxu0
        %v3296 = vadd.f32 %v2406, %v3295
        %v3297 = vpop.f32.mrf.mxu0
        %v3298 = vadd.f32 %v2406, %v3297
        %3299 = vmatmul.bf16.gmra.mxu0 %v2272
        %v3300 = vpop.f32.mrf.mxu0
        %v3301 = vadd.f32 %v2406, %v3300
        %v3302 = vpop.f32.mrf.mxu0
        %v3303 = vadd.f32 %v2406, %v3302
        %3304 = vdwg.mxu0
        %3305 = vmatpush.bf16.msra.mxu0 %v2926
        %3306 = vmatpush.bf16.msra.mxu0 %v2918
        %3307 = vmatpush.bf16.msra.mxu0 %v2910
        %3308 = vmatpush.bf16.msra.mxu0 %v2902
        %3309 = vmatpush.bf16.msra.mxu0 %v2894
        %3310 = vmatpush.bf16.msra.mxu0 %v2886
        %3311 = vmatpush.bf16.msra.mxu0 %v2878
        %3312 = vmatpush.bf16.msra.mxu0 %v2870
        %3313 = vmatmul.bf16.gmra.mxu0 %v2259
        %v3314 = vpop.f32.mrf.mxu0
        %v3315 = vadd.f32 %v3266, %v3314
        %v3316 = vpop.f32.mrf.mxu0
        %v3317 = vadd.f32 %v3268, %v3316
        %3318 = vmatmul.bf16.gmra.mxu0 %v2261
        %v3319 = vpop.f32.mrf.mxu0
        %v3320 = vadd.f32 %v3271, %v3319
        %v3321 = vpop.f32.mrf.mxu0
        %v3322 = vadd.f32 %v3273, %v3321
        %3323 = vmatmul.bf16.gmra.mxu0 %v2263
        %v3324 = vpop.f32.mrf.mxu0
        %v3325 = vadd.f32 %v3276, %v3324
        %v3326 = vpop.f32.mrf.mxu0
        %v3327 = vadd.f32 %v3278, %v3326
        %3328 = vmatmul.bf16.gmra.mxu0 %v2265
        %v3329 = vpop.f32.mrf.mxu0
        %v3330 = vadd.f32 %v3281, %v3329
        %v3331 = vpop.f32.mrf.mxu0
        %v3332 = vadd.f32 %v3283, %v3331
        %3333 = vmatmul.bf16.gmra.mxu0 %v2267
        %v3334 = vpop.f32.mrf.mxu0
        %v3335 = vadd.f32 %v3286, %v3334
        %v3336 = vpop.f32.mrf.mxu0
        %v3337 = vadd.f32 %v3288, %v3336
        %3338 = vmatmul.bf16.gmra.mxu0 %v2269
        %v3339 = vpop.f32.mrf.mxu0
        %v3340 = vadd.f32 %v3291, %v3339
        %v3341 = vpop.f32.mrf.mxu0
        %v3342 = vadd.f32 %v3293, %v3341
        %3343 = vmatmul.bf16.gmra.mxu0 %v2271
        %v3344 = vpop.f32.mrf.mxu0
        %v3345 = vadd.f32 %v3296, %v3344
        %v3346 = vpop.f32.mrf.mxu0
        %v3347 = vadd.f32 %v3298, %v3346
        %3348 = vmatmul.bf16.gmra.mxu0 %v2273
        %v3349 = vpop.f32.mrf.mxu0
        %v3350 = vadd.f32 %v3301, %v3349
        %v3351 = vpop.f32.mrf.mxu0
        %v3352 = vadd.f32 %v3303, %v3351
        %3353 = vdwg.mxu0
        %3354 = vmatpush.bf16.msra.mxu0 %v2863
        %3355 = vmatpush.bf16.msra.mxu0 %v2855
        %3356 = vmatpush.bf16.msra.mxu0 %v2847
        %3357 = vmatpush.bf16.msra.mxu0 %v2839
        %3358 = vmatpush.bf16.msra.mxu0 %v2831
        %3359 = vmatpush.bf16.msra.mxu0 %v2823
        %3360 = vmatpush.bf16.msra.mxu0 %v2815
        %3361 = vmatpush.bf16.msra.mxu0 %v2807
        %3362 = vmatmul.bf16.gmra.mxu0 %v2258
        %v3363 = vpop.f32.mrf.mxu0
        %v3364 = vadd.f32 %v2407, %v3363
        %v3365 = vpop.f32.mrf.mxu0
        %v3366 = vadd.f32 %v2407, %v3365
        %3367 = vmatmul.bf16.gmra.mxu0 %v2260
        %v3368 = vpop.f32.mrf.mxu0
        %v3369 = vadd.f32 %v2407, %v3368
        %v3370 = vpop.f32.mrf.mxu0
        %v3371 = vadd.f32 %v2407, %v3370
        %3372 = vmatmul.bf16.gmra.mxu0 %v2262
        %v3373 = vpop.f32.mrf.mxu0
        %v3374 = vadd.f32 %v2407, %v3373
        %v3375 = vpop.f32.mrf.mxu0
        %v3376 = vadd.f32 %v2407, %v3375
        %3377 = vmatmul.bf16.gmra.mxu0 %v2264
        %v3378 = vpop.f32.mrf.mxu0
        %v3379 = vadd.f32 %v2407, %v3378
        %v3380 = vpop.f32.mrf.mxu0
        %v3381 = vadd.f32 %v2407, %v3380
        %3382 = vmatmul.bf16.gmra.mxu0 %v2266
        %v3383 = vpop.f32.mrf.mxu0
        %v3384 = vadd.f32 %v2407, %v3383
        %v3385 = vpop.f32.mrf.mxu0
        %v3386 = vadd.f32 %v2407, %v3385
        %3387 = vmatmul.bf16.gmra.mxu0 %v2268
        %v3388 = vpop.f32.mrf.mxu0
        %v3389 = vadd.f32 %v2407, %v3388
        %v3390 = vpop.f32.mrf.mxu0
        %v3391 = vadd.f32 %v2407, %v3390
        %3392 = vmatmul.bf16.gmra.mxu0 %v2270
        %v3393 = vpop.f32.mrf.mxu0
        %v3394 = vadd.f32 %v2407, %v3393
        %v3395 = vpop.f32.mrf.mxu0
        %v3396 = vadd.f32 %v2407, %v3395
        %3397 = vmatmul.bf16.gmra.mxu0 %v2272
        %v3398 = vpop.f32.mrf.mxu0
        %v3399 = vadd.f32 %v2407, %v3398
        %v3400 = vpop.f32.mrf.mxu0
        %v3401 = vadd.f32 %v2407, %v3400
        %3402 = vdwg.mxu0
        %3403 = vmatpush.bf16.msra.mxu0 %v2927
        %3404 = vmatpush.bf16.msra.mxu0 %v2919
        %3405 = vmatpush.bf16.msra.mxu0 %v2911
        %3406 = vmatpush.bf16.msra.mxu0 %v2903
        %3407 = vmatpush.bf16.msra.mxu0 %v2895
        %3408 = vmatpush.bf16.msra.mxu0 %v2887
        %3409 = vmatpush.bf16.msra.mxu0 %v2879
        %3410 = vmatpush.bf16.msra.mxu0 %v2871
        %3411 = vmatmul.bf16.gmra.mxu0 %v2259
        %v3412 = vpop.f32.mrf.mxu0
        %v3413 = vadd.f32 %v3364, %v3412
        %v3414 = vpop.f32.mrf.mxu0
        %v3415 = vadd.f32 %v3366, %v3414
        %3416 = vmatmul.bf16.gmra.mxu0 %v2261
        %v3417 = vpop.f32.mrf.mxu0
        %v3418 = vadd.f32 %v3369, %v3417
        %v3419 = vpop.f32.mrf.mxu0
        %v3420 = vadd.f32 %v3371, %v3419
        %3421 = vmatmul.bf16.gmra.mxu0 %v2263
        %v3422 = vpop.f32.mrf.mxu0
        %v3423 = vadd.f32 %v3374, %v3422
        %v3424 = vpop.f32.mrf.mxu0
        %v3425 = vadd.f32 %v3376, %v3424
        %3426 = vmatmul.bf16.gmra.mxu0 %v2265
        %v3427 = vpop.f32.mrf.mxu0
        %v3428 = vadd.f32 %v3379, %v3427
        %v3429 = vpop.f32.mrf.mxu0
        %v3430 = vadd.f32 %v3381, %v3429
        %3431 = vmatmul.bf16.gmra.mxu0 %v2267
        %v3432 = vpop.f32.mrf.mxu0
        %v3433 = vadd.f32 %v3384, %v3432
        %v3434 = vpop.f32.mrf.mxu0
        %v3435 = vadd.f32 %v3386, %v3434
        %3436 = vmatmul.bf16.gmra.mxu0 %v2269
        %v3437 = vpop.f32.mrf.mxu0
        %v3438 = vadd.f32 %v3389, %v3437
        %v3439 = vpop.f32.mrf.mxu0
        %v3440 = vadd.f32 %v3391, %v3439
        %3441 = vmatmul.bf16.gmra.mxu0 %v2271
        %v3442 = vpop.f32.mrf.mxu0
        %v3443 = vadd.f32 %v3394, %v3442
        %v3444 = vpop.f32.mrf.mxu0
        %v3445 = vadd.f32 %v3396, %v3444
        %3446 = vmatmul.bf16.gmra.mxu0 %v2273
        %v3447 = vpop.f32.mrf.mxu0
        %v3448 = vadd.f32 %v3399, %v3447
        %v3449 = vpop.f32.mrf.mxu0
        %v3450 = vadd.f32 %v3401, %v3449
        %3451 = vdwg.mxu0
        %3452 = vmatpush.bf16.msra.mxu0 %v2864
        %3453 = vmatpush.bf16.msra.mxu0 %v2856
        %3454 = vmatpush.bf16.msra.mxu0 %v2848
        %3455 = vmatpush.bf16.msra.mxu0 %v2840
        %3456 = vmatpush.bf16.msra.mxu0 %v2832
        %3457 = vmatpush.bf16.msra.mxu0 %v2824
        %3458 = vmatpush.bf16.msra.mxu0 %v2816
        %3459 = vmatpush.bf16.msra.mxu0 %v2808
        %3460 = vmatmul.bf16.gmra.mxu0 %v2258
        %v3461 = vpop.f32.mrf.mxu0
        %v3462 = vadd.f32 %v2408, %v3461
        %v3463 = vpop.f32.mrf.mxu0
        %v3464 = vadd.f32 %v2408, %v3463
        %3465 = vmatmul.bf16.gmra.mxu0 %v2260
        %v3466 = vpop.f32.mrf.mxu0
        %v3467 = vadd.f32 %v2408, %v3466
        %v3468 = vpop.f32.mrf.mxu0
        %v3469 = vadd.f32 %v2408, %v3468
        %3470 = vmatmul.bf16.gmra.mxu0 %v2262
        %v3471 = vpop.f32.mrf.mxu0
        %v3472 = vadd.f32 %v2408, %v3471
        %v3473 = vpop.f32.mrf.mxu0
        %v3474 = vadd.f32 %v2408, %v3473
        %3475 = vmatmul.bf16.gmra.mxu0 %v2264
        %v3476 = vpop.f32.mrf.mxu0
        %v3477 = vadd.f32 %v2408, %v3476
        %v3478 = vpop.f32.mrf.mxu0
        %v3479 = vadd.f32 %v2408, %v3478
        %3480 = vmatmul.bf16.gmra.mxu0 %v2266
        %v3481 = vpop.f32.mrf.mxu0
        %v3482 = vadd.f32 %v2408, %v3481
        %v3483 = vpop.f32.mrf.mxu0
        %v3484 = vadd.f32 %v2408, %v3483
        %3485 = vmatmul.bf16.gmra.mxu0 %v2268
        %v3486 = vpop.f32.mrf.mxu0
        %v3487 = vadd.f32 %v2408, %v3486
        %v3488 = vpop.f32.mrf.mxu0
        %v3489 = vadd.f32 %v2408, %v3488
        %3490 = vmatmul.bf16.gmra.mxu0 %v2270
        %v3491 = vpop.f32.mrf.mxu0
        %v3492 = vadd.f32 %v2408, %v3491
        %v3493 = vpop.f32.mrf.mxu0
        %v3494 = vadd.f32 %v2408, %v3493
        %3495 = vmatmul.bf16.gmra.mxu0 %v2272
        %v3496 = vpop.f32.mrf.mxu0
        %v3497 = vadd.f32 %v2408, %v3496
        %v3498 = vpop.f32.mrf.mxu0
        %v3499 = vadd.f32 %v2408, %v3498
        %3500 = vdwg.mxu0
        %3501 = vmatpush.bf16.msra.mxu0 %v2928
        %3502 = vmatpush.bf16.msra.mxu0 %v2920
        %3503 = vmatpush.bf16.msra.mxu0 %v2912
        %3504 = vmatpush.bf16.msra.mxu0 %v2904
        %3505 = vmatpush.bf16.msra.mxu0 %v2896
        %3506 = vmatpush.bf16.msra.mxu0 %v2888
        %3507 = vmatpush.bf16.msra.mxu0 %v2880
        %3508 = vmatpush.bf16.msra.mxu0 %v2872
        %3509 = vmatmul.bf16.gmra.mxu0 %v2259
        %v3510 = vpop.f32.mrf.mxu0
        %v3511 = vadd.f32 %v3462, %v3510
        %v3512 = vpop.f32.mrf.mxu0
        %v3513 = vadd.f32 %v3464, %v3512
        %3514 = vmatmul.bf16.gmra.mxu0 %v2261
        %v3515 = vpop.f32.mrf.mxu0
        %v3516 = vadd.f32 %v3467, %v3515
        %v3517 = vpop.f32.mrf.mxu0
        %v3518 = vadd.f32 %v3469, %v3517
        %3519 = vmatmul.bf16.gmra.mxu0 %v2263
        %v3520 = vpop.f32.mrf.mxu0
        %v3521 = vadd.f32 %v3472, %v3520
        %v3522 = vpop.f32.mrf.mxu0
        %v3523 = vadd.f32 %v3474, %v3522
        %3524 = vmatmul.bf16.gmra.mxu0 %v2265
        %v3525 = vpop.f32.mrf.mxu0
        %v3526 = vadd.f32 %v3477, %v3525
        %v3527 = vpop.f32.mrf.mxu0
        %v3528 = vadd.f32 %v3479, %v3527
        %3529 = vmatmul.bf16.gmra.mxu0 %v2267
        %v3530 = vpop.f32.mrf.mxu0
        %v3531 = vadd.f32 %v3482, %v3530
        %v3532 = vpop.f32.mrf.mxu0
        %v3533 = vadd.f32 %v3484, %v3532
        %3534 = vmatmul.bf16.gmra.mxu0 %v2269
        %v3535 = vpop.f32.mrf.mxu0
        %v3536 = vadd.f32 %v3487, %v3535
        %v3537 = vpop.f32.mrf.mxu0
        %v3538 = vadd.f32 %v3489, %v3537
        %3539 = vmatmul.bf16.gmra.mxu0 %v2271
        %v3540 = vpop.f32.mrf.mxu0
        %v3541 = vadd.f32 %v3492, %v3540
        %v3542 = vpop.f32.mrf.mxu0
        %v3543 = vadd.f32 %v3494, %v3542
        %3544 = vmatmul.bf16.gmra.mxu0 %v2273
        %v3545 = vpop.f32.mrf.mxu0
        %v3546 = vadd.f32 %v3497, %v3545
        %v3547 = vpop.f32.mrf.mxu0
        %v3548 = vadd.f32 %v3499, %v3547
        %3549 = vdwg.mxu0
        %3550 = vmatpush.bf16.msra.mxu0 %v2865
        %3551 = vmatpush.bf16.msra.mxu0 %v2857
        %3552 = vmatpush.bf16.msra.mxu0 %v2849
        %3553 = vmatpush.bf16.msra.mxu0 %v2841
        %3554 = vmatpush.bf16.msra.mxu0 %v2833
        %3555 = vmatpush.bf16.msra.mxu0 %v2825
        %3556 = vmatpush.bf16.msra.mxu0 %v2817
        %3557 = vmatpush.bf16.msra.mxu0 %v2809
        %3558 = vmatmul.bf16.gmra.mxu0 %v2258
        %v3559 = vpop.f32.mrf.mxu0
        %v3560 = vadd.f32 %v2409, %v3559
        %v3561 = vpop.f32.mrf.mxu0
        %v3562 = vadd.f32 %v2409, %v3561
        %3563 = vmatmul.bf16.gmra.mxu0 %v2260
        %v3564 = vpop.f32.mrf.mxu0
        %v3565 = vadd.f32 %v2409, %v3564
        %v3566 = vpop.f32.mrf.mxu0
        %v3567 = vadd.f32 %v2409, %v3566
        %3568 = vmatmul.bf16.gmra.mxu0 %v2262
        %v3569 = vpop.f32.mrf.mxu0
        %v3570 = vadd.f32 %v2409, %v3569
        %v3571 = vpop.f32.mrf.mxu0
        %v3572 = vadd.f32 %v2409, %v3571
        %3573 = vmatmul.bf16.gmra.mxu0 %v2264
        %v3574 = vpop.f32.mrf.mxu0
        %v3575 = vadd.f32 %v2409, %v3574
        %v3576 = vpop.f32.mrf.mxu0
        %v3577 = vadd.f32 %v2409, %v3576
        %3578 = vmatmul.bf16.gmra.mxu0 %v2266
        %v3579 = vpop.f32.mrf.mxu0
        %v3580 = vadd.f32 %v2409, %v3579
        %v3581 = vpop.f32.mrf.mxu0
        %v3582 = vadd.f32 %v2409, %v3581
        %3583 = vmatmul.bf16.gmra.mxu0 %v2268
        %v3584 = vpop.f32.mrf.mxu0
        %v3585 = vadd.f32 %v2409, %v3584
        %v3586 = vpop.f32.mrf.mxu0
        %v3587 = vadd.f32 %v2409, %v3586
        %3588 = vmatmul.bf16.gmra.mxu0 %v2270
        %v3589 = vpop.f32.mrf.mxu0
        %v3590 = vadd.f32 %v2409, %v3589
        %v3591 = vpop.f32.mrf.mxu0
        %v3592 = vadd.f32 %v2409, %v3591
        %3593 = vmatmul.bf16.gmra.mxu0 %v2272
        %v3594 = vpop.f32.mrf.mxu0
        %v3595 = vadd.f32 %v2409, %v3594
        %v3596 = vpop.f32.mrf.mxu0
        %v3597 = vadd.f32 %v2409, %v3596
        %3598 = vdwg.mxu0
        %3599 = vmatpush.bf16.msra.mxu0 %v2929
        %3600 = vmatpush.bf16.msra.mxu0 %v2921
        %3601 = vmatpush.bf16.msra.mxu0 %v2913
        %3602 = vmatpush.bf16.msra.mxu0 %v2905
        %3603 = vmatpush.bf16.msra.mxu0 %v2897
        %3604 = vmatpush.bf16.msra.mxu0 %v2889
        %3605 = vmatpush.bf16.msra.mxu0 %v2881
        %3606 = vmatpush.bf16.msra.mxu0 %v2873
        %3607 = vmatmul.bf16.gmra.mxu0 %v2259
        %v3608 = vpop.f32.mrf.mxu0
        %v3609 = vadd.f32 %v3560, %v3608
        %v3610 = vpop.f32.mrf.mxu0
        %v3611 = vadd.f32 %v3562, %v3610
        %3612 = vmatmul.bf16.gmra.mxu0 %v2261
        %v3613 = vpop.f32.mrf.mxu0
        %v3614 = vadd.f32 %v3565, %v3613
        %v3615 = vpop.f32.mrf.mxu0
        %v3616 = vadd.f32 %v3567, %v3615
        %3617 = vmatmul.bf16.gmra.mxu0 %v2263
        %v3618 = vpop.f32.mrf.mxu0
        %v3619 = vadd.f32 %v3570, %v3618
        %v3620 = vpop.f32.mrf.mxu0
        %v3621 = vadd.f32 %v3572, %v3620
        %3622 = vmatmul.bf16.gmra.mxu0 %v2265
        %v3623 = vpop.f32.mrf.mxu0
        %v3624 = vadd.f32 %v3575, %v3623
        %v3625 = vpop.f32.mrf.mxu0
        %v3626 = vadd.f32 %v3577, %v3625
        %3627 = vmatmul.bf16.gmra.mxu0 %v2267
        %v3628 = vpop.f32.mrf.mxu0
        %v3629 = vadd.f32 %v3580, %v3628
        %v3630 = vpop.f32.mrf.mxu0
        %v3631 = vadd.f32 %v3582, %v3630
        %3632 = vmatmul.bf16.gmra.mxu0 %v2269
        %v3633 = vpop.f32.mrf.mxu0
        %v3634 = vadd.f32 %v3585, %v3633
        %v3635 = vpop.f32.mrf.mxu0
        %v3636 = vadd.f32 %v3587, %v3635
        %3637 = vmatmul.bf16.gmra.mxu0 %v2271
        %v3638 = vpop.f32.mrf.mxu0
        %v3639 = vadd.f32 %v3590, %v3638
        %v3640 = vpop.f32.mrf.mxu0
        %v3641 = vadd.f32 %v3592, %v3640
        %3642 = vmatmul.bf16.gmra.mxu0 %v2273
        %v3643 = vpop.f32.mrf.mxu0
        %v3644 = vadd.f32 %v3595, %v3643
        %v3645 = vpop.f32.mrf.mxu0
        %v3646 = vadd.f32 %v3597, %v3645
        %3647 = vdwg.mxu0
        %3648 = vmatpush.bf16.msra.mxu0 %v2866
        %3649 = vmatpush.bf16.msra.mxu0 %v2858
        %3650 = vmatpush.bf16.msra.mxu0 %v2850
        %3651 = vmatpush.bf16.msra.mxu0 %v2842
        %3652 = vmatpush.bf16.msra.mxu0 %v2834
        %3653 = vmatpush.bf16.msra.mxu0 %v2826
        %3654 = vmatpush.bf16.msra.mxu0 %v2818
        %3655 = vmatpush.bf16.msra.mxu0 %v2810
        %3656 = vmatmul.bf16.gmra.mxu0 %v2258
        %v3657 = vpop.f32.mrf.mxu0
        %v3658 = vadd.f32 %v2410, %v3657
        %v3659 = vpop.f32.mrf.mxu0
        %v3660 = vadd.f32 %v2410, %v3659
        %3661 = vmatmul.bf16.gmra.mxu0 %v2260
        %v3662 = vpop.f32.mrf.mxu0
        %v3663 = vadd.f32 %v2410, %v3662
        %v3664 = vpop.f32.mrf.mxu0
        %v3665 = vadd.f32 %v2410, %v3664
        %3666 = vmatmul.bf16.gmra.mxu0 %v2262
        %v3667 = vpop.f32.mrf.mxu0
        %v3668 = vadd.f32 %v2410, %v3667
        %v3669 = vpop.f32.mrf.mxu0
        %v3670 = vadd.f32 %v2410, %v3669
        %3671 = vmatmul.bf16.gmra.mxu0 %v2264
        %v3672 = vpop.f32.mrf.mxu0
        %v3673 = vadd.f32 %v2410, %v3672
        %v3674 = vpop.f32.mrf.mxu0
        %v3675 = vadd.f32 %v2410, %v3674
        %3676 = vmatmul.bf16.gmra.mxu0 %v2266
        %v3677 = vpop.f32.mrf.mxu0
        %v3678 = vadd.f32 %v2410, %v3677
        %v3679 = vpop.f32.mrf.mxu0
        %v3680 = vadd.f32 %v2410, %v3679
        %3681 = vmatmul.bf16.gmra.mxu0 %v2268
        %v3682 = vpop.f32.mrf.mxu0
        %v3683 = vadd.f32 %v2410, %v3682
        %v3684 = vpop.f32.mrf.mxu0
        %v3685 = vadd.f32 %v2410, %v3684
        %3686 = vmatmul.bf16.gmra.mxu0 %v2270
        %v3687 = vpop.f32.mrf.mxu0
        %v3688 = vadd.f32 %v2410, %v3687
        %v3689 = vpop.f32.mrf.mxu0
        %v3690 = vadd.f32 %v2410, %v3689
        %3691 = vmatmul.bf16.gmra.mxu0 %v2272
        %v3692 = vpop.f32.mrf.mxu0
        %v3693 = vadd.f32 %v2410, %v3692
        %v3694 = vpop.f32.mrf.mxu0
        %v3695 = vadd.f32 %v2410, %v3694
        %3696 = vdwg.mxu0
        %3697 = vmatpush.bf16.msra.mxu0 %v2930
        %3698 = vmatpush.bf16.msra.mxu0 %v2922
        %3699 = vmatpush.bf16.msra.mxu0 %v2914
        %3700 = vmatpush.bf16.msra.mxu0 %v2906
        %3701 = vmatpush.bf16.msra.mxu0 %v2898
        %3702 = vmatpush.bf16.msra.mxu0 %v2890
        %3703 = vmatpush.bf16.msra.mxu0 %v2882
        %3704 = vmatpush.bf16.msra.mxu0 %v2874
        %3705 = vmatmul.bf16.gmra.mxu0 %v2259
        %v3706 = vpop.f32.mrf.mxu0
        %v3707 = vadd.f32 %v3658, %v3706
        %v3708 = vpop.f32.mrf.mxu0
        %v3709 = vadd.f32 %v3660, %v3708
        %3710 = vmatmul.bf16.gmra.mxu0 %v2261
        %v3711 = vpop.f32.mrf.mxu0
        %v3712 = vadd.f32 %v3663, %v3711
        %v3713 = vpop.f32.mrf.mxu0
        %v3714 = vadd.f32 %v3665, %v3713
        %3715 = vmatmul.bf16.gmra.mxu0 %v2263
        %v3716 = vpop.f32.mrf.mxu0
        %v3717 = vadd.f32 %v3668, %v3716
        %v3718 = vpop.f32.mrf.mxu0
        %v3719 = vadd.f32 %v3670, %v3718
        %3720 = vmatmul.bf16.gmra.mxu0 %v2265
        %v3721 = vpop.f32.mrf.mxu0
        %v3722 = vadd.f32 %v3673, %v3721
        %v3723 = vpop.f32.mrf.mxu0
        %v3724 = vadd.f32 %v3675, %v3723
        %3725 = vmatmul.bf16.gmra.mxu0 %v2267
        %v3726 = vpop.f32.mrf.mxu0
        %v3727 = vadd.f32 %v3678, %v3726
        %v3728 = vpop.f32.mrf.mxu0
        %v3729 = vadd.f32 %v3680, %v3728
        %3730 = vmatmul.bf16.gmra.mxu0 %v2269
        %v3731 = vpop.f32.mrf.mxu0
        %v3732 = vadd.f32 %v3683, %v3731
        %v3733 = vpop.f32.mrf.mxu0
        %v3734 = vadd.f32 %v3685, %v3733
        %3735 = vmatmul.bf16.gmra.mxu0 %v2271
        %v3736 = vpop.f32.mrf.mxu0
        %v3737 = vadd.f32 %v3688, %v3736
        %v3738 = vpop.f32.mrf.mxu0
        %v3739 = vadd.f32 %v3690, %v3738
        %3740 = vmatmul.bf16.gmra.mxu0 %v2273
        %v3741 = vpop.f32.mrf.mxu0
        %v3742 = vadd.f32 %v3693, %v3741
        %v3743 = vpop.f32.mrf.mxu0
        %v3744 = vadd.f32 %v3695, %v3743
        %3745 = vdwg.mxu0
        %3746 = vmatpush.bf16.msra.mxu0 %v2867
        %3747 = vmatpush.bf16.msra.mxu0 %v2859
        %3748 = vmatpush.bf16.msra.mxu0 %v2851
        %3749 = vmatpush.bf16.msra.mxu0 %v2843
        %3750 = vmatpush.bf16.msra.mxu0 %v2835
        %3751 = vmatpush.bf16.msra.mxu0 %v2827
        %3752 = vmatpush.bf16.msra.mxu0 %v2819
        %3753 = vmatpush.bf16.msra.mxu0 %v2811
        %3754 = vmatmul.bf16.gmra.mxu0 %v2258
        %v3755 = vpop.f32.mrf.mxu0
        %v3756 = vadd.f32 %v2411, %v3755
        %v3757 = vpop.f32.mrf.mxu0
        %v3758 = vadd.f32 %v2411, %v3757
        %3759 = vmatmul.bf16.gmra.mxu0 %v2260
        %v3760 = vpop.f32.mrf.mxu0
        %v3761 = vadd.f32 %v2411, %v3760
        %v3762 = vpop.f32.mrf.mxu0
        %v3763 = vadd.f32 %v2411, %v3762
        %3764 = vmatmul.bf16.gmra.mxu0 %v2262
        %v3765 = vpop.f32.mrf.mxu0
        %v3766 = vadd.f32 %v2411, %v3765
        %v3767 = vpop.f32.mrf.mxu0
        %v3768 = vadd.f32 %v2411, %v3767
        %3769 = vmatmul.bf16.gmra.mxu0 %v2264
        %v3770 = vpop.f32.mrf.mxu0
        %v3771 = vadd.f32 %v2411, %v3770
        %v3772 = vpop.f32.mrf.mxu0
        %v3773 = vadd.f32 %v2411, %v3772
        %3774 = vmatmul.bf16.gmra.mxu0 %v2266
        %v3775 = vpop.f32.mrf.mxu0
        %v3776 = vadd.f32 %v2411, %v3775
        %v3777 = vpop.f32.mrf.mxu0
        %v3778 = vadd.f32 %v2411, %v3777
        %3779 = vmatmul.bf16.gmra.mxu0 %v2268
        %v3780 = vpop.f32.mrf.mxu0
        %v3781 = vadd.f32 %v2411, %v3780
        %v3782 = vpop.f32.mrf.mxu0
        %v3783 = vadd.f32 %v2411, %v3782
        %3784 = vmatmul.bf16.gmra.mxu0 %v2270
        %v3785 = vpop.f32.mrf.mxu0
        %v3786 = vadd.f32 %v2411, %v3785
        %v3787 = vpop.f32.mrf.mxu0
        %v3788 = vadd.f32 %v2411, %v3787
        %3789 = vmatmul.bf16.gmra.mxu0 %v2272
        %v3790 = vpop.f32.mrf.mxu0
        %v3791 = vadd.f32 %v2411, %v3790
        %v3792 = vpop.f32.mrf.mxu0
        %v3793 = vadd.f32 %v2411, %v3792
        %3794 = vdwg.mxu0
        %3795 = vmatpush.bf16.msra.mxu0 %v2931
        %3796 = vmatpush.bf16.msra.mxu0 %v2923
        %3797 = vmatpush.bf16.msra.mxu0 %v2915
        %3798 = vmatpush.bf16.msra.mxu0 %v2907
        %3799 = vmatpush.bf16.msra.mxu0 %v2899
        %3800 = vmatpush.bf16.msra.mxu0 %v2891
        %3801 = vmatpush.bf16.msra.mxu0 %v2883
        %3802 = vmatpush.bf16.msra.mxu0 %v2875
        %3803 = vmatmul.bf16.gmra.mxu0 %v2259
        %v3804 = vpop.f32.mrf.mxu0
        %v3805 = vadd.f32 %v3756, %v3804
        %v3806 = vpop.f32.mrf.mxu0
        %v3807 = vadd.f32 %v3758, %v3806
        %3808 = vmatmul.bf16.gmra.mxu0 %v2261
        %v3809 = vpop.f32.mrf.mxu0
        %v3810 = vadd.f32 %v3761, %v3809
        %v3811 = vpop.f32.mrf.mxu0
        %v3812 = vadd.f32 %v3763, %v3811
        %3813 = vmatmul.bf16.gmra.mxu0 %v2263
        %v3814 = vpop.f32.mrf.mxu0
        %v3815 = vadd.f32 %v3766, %v3814
        %v3816 = vpop.f32.mrf.mxu0
        %v3817 = vadd.f32 %v3768, %v3816
        %3818 = vmatmul.bf16.gmra.mxu0 %v2265
        %v3819 = vpop.f32.mrf.mxu0
        %v3820 = vadd.f32 %v3771, %v3819
        %v3821 = vpop.f32.mrf.mxu0
        %v3822 = vadd.f32 %v3773, %v3821
        %3823 = vmatmul.bf16.gmra.mxu0 %v2267
        %v3824 = vpop.f32.mrf.mxu0
        %v3825 = vadd.f32 %v3776, %v3824
        %v3826 = vpop.f32.mrf.mxu0
        %v3827 = vadd.f32 %v3778, %v3826
        %3828 = vmatmul.bf16.gmra.mxu0 %v2269
        %v3829 = vpop.f32.mrf.mxu0
        %v3830 = vadd.f32 %v3781, %v3829
        %v3831 = vpop.f32.mrf.mxu0
        %v3832 = vadd.f32 %v3783, %v3831
        %3833 = vmatmul.bf16.gmra.mxu0 %v2271
        %v3834 = vpop.f32.mrf.mxu0
        %v3835 = vadd.f32 %v3786, %v3834
        %v3836 = vpop.f32.mrf.mxu0
        %v3837 = vadd.f32 %v3788, %v3836
        %3838 = vmatmul.bf16.gmra.mxu0 %v2273
        %v3839 = vpop.f32.mrf.mxu0
        %v3840 = vadd.f32 %v3791, %v3839
        %v3841 = vpop.f32.mrf.mxu0
        %v3842 = vadd.f32 %v3793, %v3841
        %3843 = vdwg.mxu0
        %3844 = vst [vmem:[%s366] sm:$0xff] %v3119
        %3845 = vst [vmem:[%s366 + $0x8] sm:$0xff] %v3217
        %3846 = vst [vmem:[%s366 + $0x10] sm:$0xff] %v3315
        %3847 = vst [vmem:[%s366 + $0x18] sm:$0xff] %v3413
        %3848 = vst [vmem:[%s366 + $0x20] sm:$0xff] %v3511
        %3849 = vst [vmem:[%s366 + $0x28] sm:$0xff] %v3609
        %3850 = vst [vmem:[%s366 + $0x30] sm:$0xff] %v3707
        %3851 = vst [vmem:[%s366 + $0x38] sm:$0xff] %v3805
        %3852 = vst [vmem:[%s366 + $0x40] sm:$0xff] %v3121
        %3853 = vst [vmem:[%s366 + $0x48] sm:$0xff] %v3219
        %3854 = vst [vmem:[%s366 + $0x50] sm:$0xff] %v3317
        %3855 = vst [vmem:[%s366 + $0x58] sm:$0xff] %v3415
        %3856 = vst [vmem:[%s366 + $0x60] sm:$0xff] %v3513
        %3857 = vst [vmem:[%s366 + $0x68] sm:$0xff] %v3611
        %3858 = vst [vmem:[%s366 + $0x70] sm:$0xff] %v3709
        %3859 = vst [vmem:[%s366 + $0x78] sm:$0xff] %v3807
        %3860 = vst [vmem:[%s366 + $0x80] sm:$0xff] %v3124
        %3861 = vst [vmem:[%s366 + $0x88] sm:$0xff] %v3222
        %3862 = vst [vmem:[%s366 + $0x90] sm:$0xff] %v3320
        %3863 = vst [vmem:[%s366 + $0x98] sm:$0xff] %v3418
        %3864 = vst [vmem:[%s366 + $0xa0] sm:$0xff] %v3516
        %3865 = vst [vmem:[%s366 + $0xa8] sm:$0xff] %v3614
        %3866 = vst [vmem:[%s366 + $0xb0] sm:$0xff] %v3712
        %3867 = vst [vmem:[%s366 + $0xb8] sm:$0xff] %v3810
        %3868 = vst [vmem:[%s366 + $0xc0] sm:$0xff] %v3126
        %3869 = vst [vmem:[%s366 + $0xc8] sm:$0xff] %v3224
        %3870 = vst [vmem:[%s366 + $0xd0] sm:$0xff] %v3322
        %3871 = vst [vmem:[%s366 + $0xd8] sm:$0xff] %v3420
        %3872 = vst [vmem:[%s366 + $0xe0] sm:$0xff] %v3518
        %3873 = vst [vmem:[%s366 + $0xe8] sm:$0xff] %v3616
        %3874 = vst [vmem:[%s366 + $0xf0] sm:$0xff] %v3714
        %3875 = vst [vmem:[%s366 + $0xf8] sm:$0xff] %v3812
        %3876 = vst [vmem:[%s366 + $0x100] sm:$0xff] %v3129
        %3877 = vst [vmem:[%s366 + $0x108] sm:$0xff] %v3227
        %3878 = vst [vmem:[%s366 + $0x110] sm:$0xff] %v3325
        %3879 = vst [vmem:[%s366 + $0x118] sm:$0xff] %v3423
        %3880 = vst [vmem:[%s366 + $0x120] sm:$0xff] %v3521
        %3881 = vst [vmem:[%s366 + $0x128] sm:$0xff] %v3619
        %3882 = vst [vmem:[%s366 + $0x130] sm:$0xff] %v3717
        %3883 = vst [vmem:[%s366 + $0x138] sm:$0xff] %v3815
        %3884 = vst [vmem:[%s366 + $0x140] sm:$0xff] %v3131
        %3885 = vst [vmem:[%s366 + $0x148] sm:$0xff] %v3229
        %3886 = vst [vmem:[%s366 + $0x150] sm:$0xff] %v3327
        %3887 = vst [vmem:[%s366 + $0x158] sm:$0xff] %v3425
        %3888 = vst [vmem:[%s366 + $0x160] sm:$0xff] %v3523
        %3889 = vst [vmem:[%s366 + $0x168] sm:$0xff] %v3621
        %3890 = vst [vmem:[%s366 + $0x170] sm:$0xff] %v3719
        %3891 = vst [vmem:[%s366 + $0x178] sm:$0xff] %v3817
        %3892 = vst [vmem:[%s366 + $0x180] sm:$0xff] %v3134
        %3893 = vst [vmem:[%s366 + $0x188] sm:$0xff] %v3232
        %3894 = vst [vmem:[%s366 + $0x190] sm:$0xff] %v3330
        %3895 = vst [vmem:[%s366 + $0x198] sm:$0xff] %v3428
        %3896 = vst [vmem:[%s366 + $0x1a0] sm:$0xff] %v3526
        %3897 = vst [vmem:[%s366 + $0x1a8] sm:$0xff] %v3624
        %3898 = vst [vmem:[%s366 + $0x1b0] sm:$0xff] %v3722
        %3899 = vst [vmem:[%s366 + $0x1b8] sm:$0xff] %v3820
        %3900 = vst [vmem:[%s366 + $0x1c0] sm:$0xff] %v3136
        %3901 = vst [vmem:[%s366 + $0x1c8] sm:$0xff] %v3234
        %3902 = vst [vmem:[%s366 + $0x1d0] sm:$0xff] %v3332
        %3903 = vst [vmem:[%s366 + $0x1d8] sm:$0xff] %v3430
        %3904 = vst [vmem:[%s366 + $0x1e0] sm:$0xff] %v3528
        %3905 = vst [vmem:[%s366 + $0x1e8] sm:$0xff] %v3626
        %3906 = vst [vmem:[%s366 + $0x1f0] sm:$0xff] %v3724
        %3907 = vst [vmem:[%s366 + $0x1f8] sm:$0xff] %v3822
        %3908 = vst [vmem:[%s366 + $0x200] sm:$0xff] %v3139
        %3909 = vst [vmem:[%s366 + $0x208] sm:$0xff] %v3237
        %3910 = vst [vmem:[%s366 + $0x210] sm:$0xff] %v3335
        %3911 = vst [vmem:[%s366 + $0x218] sm:$0xff] %v3433
        %3912 = vst [vmem:[%s366 + $0x220] sm:$0xff] %v3531
        %3913 = vst [vmem:[%s366 + $0x228] sm:$0xff] %v3629
        %3914 = vst [vmem:[%s366 + $0x230] sm:$0xff] %v3727
        %3915 = vst [vmem:[%s366 + $0x238] sm:$0xff] %v3825
        %3916 = vst [vmem:[%s366 + $0x240] sm:$0xff] %v3141
        %3917 = vst [vmem:[%s366 + $0x248] sm:$0xff] %v3239
        %3918 = vst [vmem:[%s366 + $0x250] sm:$0xff] %v3337
        %3919 = vst [vmem:[%s366 + $0x258] sm:$0xff] %v3435
        %3920 = vst [vmem:[%s366 + $0x260] sm:$0xff] %v3533
        %3921 = vst [vmem:[%s366 + $0x268] sm:$0xff] %v3631
        %3922 = vst [vmem:[%s366 + $0x270] sm:$0xff] %v3729
        %3923 = vst [vmem:[%s366 + $0x278] sm:$0xff] %v3827
        %3924 = vst [vmem:[%s366 + $0x280] sm:$0xff] %v3144
        %3925 = vst [vmem:[%s366 + $0x288] sm:$0xff] %v3242
        %3926 = vst [vmem:[%s366 + $0x290] sm:$0xff] %v3340
        %3927 = vst [vmem:[%s366 + $0x298] sm:$0xff] %v3438
        %3928 = vst [vmem:[%s366 + $0x2a0] sm:$0xff] %v3536
        %3929 = vst [vmem:[%s366 + $0x2a8] sm:$0xff] %v3634
        %3930 = vst [vmem:[%s366 + $0x2b0] sm:$0xff] %v3732
        %3931 = vst [vmem:[%s366 + $0x2b8] sm:$0xff] %v3830
        %3932 = vst [vmem:[%s366 + $0x2c0] sm:$0xff] %v3146
        %3933 = vst [vmem:[%s366 + $0x2c8] sm:$0xff] %v3244
        %3934 = vst [vmem:[%s366 + $0x2d0] sm:$0xff] %v3342
        %3935 = vst [vmem:[%s366 + $0x2d8] sm:$0xff] %v3440
        %3936 = vst [vmem:[%s366 + $0x2e0] sm:$0xff] %v3538
        %3937 = vst [vmem:[%s366 + $0x2e8] sm:$0xff] %v3636
        %3938 = vst [vmem:[%s366 + $0x2f0] sm:$0xff] %v3734
        %3939 = vst [vmem:[%s366 + $0x2f8] sm:$0xff] %v3832
        %3940 = vst [vmem:[%s366 + $0x300] sm:$0xff] %v3149
        %3941 = vst [vmem:[%s366 + $0x308] sm:$0xff] %v3247
        %3942 = vst [vmem:[%s366 + $0x310] sm:$0xff] %v3345
        %3943 = vst [vmem:[%s366 + $0x318] sm:$0xff] %v3443
        %3944 = vst [vmem:[%s366 + $0x320] sm:$0xff] %v3541
        %3945 = vst [vmem:[%s366 + $0x328] sm:$0xff] %v3639
        %3946 = vst [vmem:[%s366 + $0x330] sm:$0xff] %v3737
        %3947 = vst [vmem:[%s366 + $0x338] sm:$0xff] %v3835
        %3948 = vst [vmem:[%s366 + $0x340] sm:$0xff] %v3151
        %3949 = vst [vmem:[%s366 + $0x348] sm:$0xff] %v3249
        %3950 = vst [vmem:[%s366 + $0x350] sm:$0xff] %v3347
        %3951 = vst [vmem:[%s366 + $0x358] sm:$0xff] %v3445
        %3952 = vst [vmem:[%s366 + $0x360] sm:$0xff] %v3543
        %3953 = vst [vmem:[%s366 + $0x368] sm:$0xff] %v3641
        %3954 = vst [vmem:[%s366 + $0x370] sm:$0xff] %v3739
        %3955 = vst [vmem:[%s366 + $0x378] sm:$0xff] %v3837
        %3956 = vst [vmem:[%s366 + $0x380] sm:$0xff] %v3154
        %3957 = vst [vmem:[%s366 + $0x388] sm:$0xff] %v3252
        %3958 = vst [vmem:[%s366 + $0x390] sm:$0xff] %v3350
        %3959 = vst [vmem:[%s366 + $0x398] sm:$0xff] %v3448
        %3960 = vst [vmem:[%s366 + $0x3a0] sm:$0xff] %v3546
        %3961 = vst [vmem:[%s366 + $0x3a8] sm:$0xff] %v3644
        %3962 = vst [vmem:[%s366 + $0x3b0] sm:$0xff] %v3742
        %3963 = vst [vmem:[%s366 + $0x3b8] sm:$0xff] %v3840
        %3964 = vst [vmem:[%s366 + $0x3c0] sm:$0xff] %v3156
        %3965 = vst [vmem:[%s366 + $0x3c8] sm:$0xff] %v3254
        %3966 = vst [vmem:[%s366 + $0x3d0] sm:$0xff] %v3352
        %3967 = vst [vmem:[%s366 + $0x3d8] sm:$0xff] %v3450
        %3968 = vst [vmem:[%s366 + $0x3e0] sm:$0xff] %v3548
        %3969 = vst [vmem:[%s366 + $0x3e8] sm:$0xff] %v3646
        %3970 = vst [vmem:[%s366 + $0x3f0] sm:$0xff] %v3744
        %3971 = vst [vmem:[%s366 + $0x3f8] sm:$0xff] %v3842
        %s3972 = smul.u32 16, %s21
        %p3973 = scmp.lt.s32.totalorder %s3972, 31
        %s3974 = scalar_select %p3973, %s3972, 31
        %s3975 = smul.addr %s3974, 8
        %s3976 = smul.addr %s3975, 8
        %s3977 = scalar_lea.vmem %s8, %s3976
        // Predicated region
        $region61: #{encoder_forward.1} parent=51 // pred_check
          %p3978 = pneg %p217
        $region62: #{encoder_forward.1} parent=51 // pred_check_branch
          %3980 = sbr.rel (%p3978) target = $region64
        $region63: #{encoder_forward.1} parent=51 // pred_region
          %s3981 = smul.u32 16, %s21
        $region64: #{encoder_forward.1} parent=51 // pred_fallthru
          _
      $region52: #{encoder_forward.1} parent=5 // pred_fallthru
        _
      %p3982 = scmp.le.s32.totalorder 2, %s16
      // Predicated region
      $region65: #{encoder_forward.1} parent=5 // pred_check
        %p3983 = pneg %p3982
      $region66: #{encoder_forward.1} parent=5 // pred_check_branch
        %3985 = sbr.rel (%p3983) target = $region68
      $region67: #{encoder_forward.1} parent=5 // pred_region
        %s3986 = ssub.s32 %s16, 2
        // Predicated region
        $region69: #{encoder_forward.1} parent=67 // pred_check
          %p3987 = pneg %p223
        $region70: #{encoder_forward.1} parent=67 // pred_check_branch
          %3989 = sbr.rel (%p3987) target = $region72
        $region71: #{encoder_forward.1} parent=67 // pred_region
          %s3990 = smul.u32 16, %s22
          %p3991 = scmp.lt.s32.totalorder %s3990, 31
          %s3992 = scalar_select %p3991, %s3990, 31
          %s3993 = smul.addr %s3992, 8
          %s3994 = smul.addr %s3993, 8
          %s3995 = scalar_lea.vmem %s8, %s3994
        $region72: #{encoder_forward.1} parent=67 // pred_fallthru
          _
      $region68: #{encoder_forward.1} parent=5 // pred_fallthru
        _
    $region6: #{encoder_forward.1} parent=1 // loop_footer
      %s20 = sadd.s32 1, %s16
    $region7: #{encoder_forward.1} parent=1 // loop_footer_branch
      %15 = sbr.rel target = $region3
    $region8: #{encoder_forward.1} parent=1 // loop_exit
      _
    %3996 = vsyncpa [#allocation3], 1
    %s3997 = scalar_lea.sflag [#allocation3], 1
    %3998 = vsyncpa %s3997, 1
    %3999 = vsyncpa [#allocation5], 1

</llo_original>
